<compile_context>
chip_gen: v6e
topology: v6e:2x2x1
jax: 0.10.0
libtpu: 0.0.40
codegen_flags: <defaults>
</compile_context>

<pallas_src>
import jax
import jax.numpy as jnp
from jax.experimental import pallas as pl
from jax.experimental.pallas import tpu as pltpu

# ----------------------------- config (synthetic) -----------------------------
S2_LATENT_DIM = 64
S1_TRANSFORMER_EMBED_DIM = 64
S1_NUM_LAYERS = 2
S1_NUM_HEADS = 4
ACTION_DIM = 8
SEQ_LENGTH = 8
S1_FFN_DIM = 128

IMG_C, IMG_H, IMG_W = 3, 16, 16
IMG_FLAT = IMG_C * IMG_H * IMG_W          # 768
STATE_DIM = 8
TEXT_DIM = 32                              # text assumed pre-embedded
S2_IMG_HID = 128
S2_STATE_HID = 64
S2_TEXT_HID = 64
S2_ST_HID = S2_STATE_HID + S2_TEXT_HID     # 128

ST_CAT = STATE_DIM + TEXT_DIM              # 40   (fused state||text input)
HF_CAT = IMG_FLAT + STATE_DIM              # 776  (fused hf_image||hf_state input)

E = S1_TRANSFORMER_EMBED_DIM
L = S1_NUM_LAYERS
H = S1_NUM_HEADS
DH = E // H                                # 16
S = SEQ_LENGTH
ACT_PAD = 128                              # lane-dense padded action head width

# ------------------------- f32 parameter-slab layout --------------------------
FB_W = 192                                 # slab lane width (max param width = 3E)
R_B_S2IMG = 0                              # System2 image-encoder bias      (128)
R_B_S2ST = 1                               # System2 [state||text] bias      (128)
R_B_FUSE = 2                               # System2 fuse bias               (64)
R_B_S1 = 3                                 # System1 fused feature bias      (64)
R_POS = 4                                  # positional embedding rows 4..11 (8,64)
R_LAYER = 12                               # per-layer block start
ROWS_PER_LAYER = 8                         # ln1_g, ln1_b, bqkv, bo, ln2_g, ln2_b, b1, b2
R_ACT_B = R_LAYER + L * ROWS_PER_LAYER     # 28: action head bias (128)
FB_ROWS = 32

_PARAM_ORDER = (
    "w_s2img", "w_s2st", "w_fuse", "w_s1hf", "w_s1lat",
    "w_qkv", "w_o", "w_ffn1", "w_ffn2", "w_act",
    "fbias",
)


# --------------------------------- kernel --------------------------------------
def _layernorm(v, g, b):
    mu = jnp.mean(v, axis=-1, keepdims=True)
    var = jnp.mean(jnp.square(v - mu), axis=-1, keepdims=True)
    return (v - mu) * jax.lax.rsqrt(var + 1e-5) * g + b


def _mm(x, w):
    """bf16 MXU matmul with f32 accumulation."""
    return jnp.dot(x.astype(jnp.bfloat16), w, preferred_element_type=jnp.float32)


def helix_kernel(img_ref, st_ref, hf_ref,
                 w_s2img, w_s2st, w_fuse, w_s1hf, w_s1lat,
                 w_qkv, w_o, w_ffn1, w_ffn2, w_act,
                 fb_ref, out_ref):
    f32 = jnp.float32
    bf16 = jnp.bfloat16

    def fb(row, width):
        # (1, width) f32 slice of the packed bias/LN/pos slab (static, cheap).
        return fb_ref[row:row + 1, :width]

    # ---------------- System2: low-frequency VLM -> latent ----------------
    h_img = jnp.maximum(_mm(img_ref[...], w_s2img[...]) + fb(R_B_S2IMG, S2_IMG_HID), 0.0)
    h_st = jnp.maximum(_mm(st_ref[...], w_s2st[...]) + fb(R_B_S2ST, S2_ST_HID), 0.0)
    h_cat = jnp.concatenate([h_img, h_st], axis=-1)                   # (B, 256)
    latent = jnp.tanh(_mm(h_cat, w_fuse[...]) + fb(R_B_FUSE, S2_LATENT_DIM))  # (B, 64)

    # ---------------- System1: fused feature encoder + positional tokens ----------------
    ctx = (_mm(hf_ref[...], w_s1hf[...]) + _mm(latent, w_s1lat[...])
           + fb(R_B_S1, E))                                           # (B, E)

    B = ctx.shape[0]
    pos = fb_ref[R_POS:R_POS + S, :E]                                 # (S, E) f32
    x = (pos[None, :, :] + ctx[:, None, :]).reshape(B * S, E)         # (B*S, E) lane-dense

    scale = float(DH) ** -0.5

    for l in range(L):
        base = R_LAYER + l * ROWS_PER_LAYER
        ln1_g, ln1_b = fb(base + 0, E), fb(base + 1, E)
        bqkv = fb(base + 2, 3 * E)
        bo = fb(base + 3, E)
        ln2_g, ln2_b = fb(base + 4, E), fb(base + 5, E)
        b1 = fb(base + 6, S1_FFN_DIM)
        b2 = fb(base + 7, E)

        # --- multi-head self-attention: fused QKV, dense output projection ---
        xn = _layernorm(x, ln1_g, ln1_b)                              # (B*S, E) f32
        qkv = (_mm(xn, w_qkv[l]) + bqkv).astype(bf16)                 # (B*S, 3E)

        head_out = []
        for h in range(H):
            qh = qkv[:, h * DH:(h + 1) * DH].reshape(B, S, DH)
            kh = qkv[:, E + h * DH:E + (h + 1) * DH].reshape(B, S, DH)
            vh = qkv[:, 2 * E + h * DH:2 * E + (h + 1) * DH].reshape(B, S, DH)

            sc = jnp.einsum('bqd,bkd->bqk', qh, kh,
                            preferred_element_type=f32) * scale       # (B,S,S) f32
            m = jnp.max(sc, axis=-1, keepdims=True)
            p = jnp.exp(sc - m)
            p = p * pl.reciprocal(jnp.sum(p, axis=-1, keepdims=True), approx=True)

            oh = jnp.einsum('bqk,bkd->bqd', p.astype(bf16), vh,
                            preferred_element_type=f32)               # (B,S,DH)
            head_out.append(oh.reshape(B * S, DH))

        ctx2 = jnp.concatenate(head_out, axis=-1)                     # (B*S, E) lane-dense
        x = x + _mm(ctx2, w_o[l]) + bo

        # --- feed-forward ---
        xn2 = _layernorm(x, ln2_g, ln2_b)
        hid = jnp.maximum(_mm(xn2, w_ffn1[l]) + b1, 0.0)              # (B*S, FFN)
        x = x + _mm(hid, w_ffn2[l]) + b2

    # ---------------- action head (lane-dense, padded to 128) ----------------
    y = _mm(x, w_act[...]) + fb(R_ACT_B, ACT_PAD)                     # (B*S, ACT_PAD)
    out_ref[...] = y.astype(out_ref.dtype)


# -------------------------------- wrapper ---------------------------------------
def helix_forward(params, image, state, text, high_freq_image, high_freq_state):
    B = image.shape[0]
    img_flat = image.reshape(B, -1)                                   # (B, 768)
    st_cat = jnp.concatenate([state, text], axis=-1)                  # (B, 40)
    hf_cat = jnp.concatenate([high_freq_image.reshape(B, -1),
                              high_freq_state], axis=-1)              # (B, 776)

    args = [img_flat, st_cat, hf_cat] + [params[k] for k in _PARAM_ORDER]

    vmem = pl.BlockSpec(memory_space=pltpu.MemorySpace.VMEM)
    cost = pl.CostEstimate(flops=3_200_000, transcendentals=1_300,
                           bytes_accessed=600_000)
    out = pl.pallas_call(
        helix_kernel,
        out_shape=jax.ShapeDtypeStruct((B * SEQ_LENGTH, ACT_PAD), jnp.float32),
        in_specs=[vmem] * len(args),
        out_specs=vmem,
        compiler_params=pltpu.CompilerParams(vmem_limit_bytes=4 * 1024 * 1024),
        cost_estimate=cost,
    )(*args)
    return out[:, :ACTION_DIM].reshape(B, SEQ_LENGTH, ACTION_DIM)


# ------------------------------ parameters --------------------------------------
def init_params(key):
    keys = iter(jax.random.split(key, 64))
    wdt = jnp.bfloat16

    def w(in_d, out_d):
        return (jax.random.normal(next(keys), (in_d, out_d), jnp.float32)
                / jnp.sqrt(jnp.float32(in_d))).astype(wdt)

    p = {}

    # --- System2 (VLM-style encoder), fused layouts ---
    p["w_s2img"] = w(IMG_FLAT, S2_IMG_HID)                            # (768, 128)
    # [state||text] block-diagonal projection -> [h_state||h_text]
    w_st = jnp.zeros((ST_CAT, S2_ST_HID), jnp.float32)
    w_st = w_st.at[:STATE_DIM, :S2_STATE_HID].set(
        w(STATE_DIM, S2_STATE_HID).astype(jnp.float32))
    w_st = w_st.at[STATE_DIM:, S2_STATE_HID:].set(
        w(TEXT_DIM, S2_TEXT_HID).astype(jnp.float32))
    p["w_s2st"] = w_st.astype(wdt)                                    # (40, 128)
    # fuse: [wi; ws; wt] stacked along contraction dim
    p["w_fuse"] = jnp.concatenate(
        [w(S2_IMG_HID, S2_LATENT_DIM),
         w(S2_STATE_HID, S2_LATENT_DIM),
         w(S2_TEXT_HID, S2_LATENT_DIM)], axis=0)                      # (256, 64)

    # --- System1 fused feature encoders ---
    p["w_s1hf"] = jnp.concatenate([w(IMG_FLAT, E), w(STATE_DIM, E)], axis=0)  # (776, 64)
    p["w_s1lat"] = w(S2_LATENT_DIM, E)                                # (64, 64)

    # --- transformer layer weights stacked along a leading L axis ---
    p["w_qkv"] = jnp.stack(
        [jnp.concatenate([w(E, E), w(E, E), w(E, E)], axis=1) for _ in range(L)])  # (L,64,192)
    p["w_o"] = jnp.stack([w(E, E) for _ in range(L)])                 # (L, 64, 64)
    p["w_ffn1"] = jnp.stack([w(E, S1_FFN_DIM) for _ in range(L)])     # (L, 64, 128)
    p["w_ffn2"] = jnp.stack([w(S1_FFN_DIM, E) for _ in range(L)])     # (L, 128, 64)

    # --- action head, zero-padded to a lane-dense 128-wide output ---
    act = w(E, ACTION_DIM).astype(jnp.float32)
    p["w_act"] = (jnp.zeros((E, ACT_PAD), jnp.float32)
                  .at[:, :ACTION_DIM].set(act).astype(wdt))           # (64, 128)

    # --- f32 slab: LN params, biases, positional embedding (one DMA) ---
    fb = jnp.zeros((FB_ROWS, FB_W), jnp.float32)
    pos = jax.random.normal(next(keys), (SEQ_LENGTH, E), jnp.float32) * 0.02
    fb = fb.at[R_POS:R_POS + SEQ_LENGTH, :E].set(pos)
    for l in range(L):
        base = R_LAYER + l * ROWS_PER_LAYER
        fb = fb.at[base + 0, :E].set(1.0)                             # ln1 gamma
        fb = fb.at[base + 4, :E].set(1.0)                             # ln2 gamma
    p["fbias"] = fb                                                   # (32, 192)
    return p


# ---------------------------------- main -----------------------------------------
if __name__ == "__main__":
    key = jax.random.PRNGKey(0)
    k_img, k_state, k_text, k_hfi, k_hfs = jax.random.split(key, 5)

    B = 2
    image = jax.random.normal(k_img, (B, IMG_C, IMG_H, IMG_W), jnp.float32)
    state = jax.random.normal(k_state, (B, STATE_DIM), jnp.float32)
    text = jax.random.normal(k_text, (B, TEXT_DIM), jnp.float32)
    high_freq_image = jax.random.normal(k_hfi, (B, IMG_C, IMG_H, IMG_W), jnp.float32)
    high_freq_state = jax.random.normal(k_hfs, (B, STATE_DIM), jnp.float32)

    params = init_params(jax.random.PRNGKey(42))

    fwd = jax.jit(helix_forward)
    actions = fwd(params, image, state, text, high_freq_image, high_freq_state)
    actions = jax.block_until_ready(actions)

    assert actions.shape == (B, SEQ_LENGTH, ACTION_DIM)
    assert bool(jnp.all(jnp.isfinite(actions)))
    print("KERNEL_OK")
</pallas_src>

<mosaic_0001>
module attributes {stable_mosaic.version = 11 : i64} {
  func.func @helix_kernel(%arg0: memref<2x768xf32, #tpu.memory_space<vmem>>, %arg1: memref<2x40xf32, #tpu.memory_space<vmem>>, %arg2: memref<2x776xf32, #tpu.memory_space<vmem>>, %arg3: memref<768x128xbf16, #tpu.memory_space<vmem>>, %arg4: memref<40x128xbf16, #tpu.memory_space<vmem>>, %arg5: memref<256x64xbf16, #tpu.memory_space<vmem>>, %arg6: memref<776x64xbf16, #tpu.memory_space<vmem>>, %arg7: memref<64x64xbf16, #tpu.memory_space<vmem>>, %arg8: memref<2x64x192xbf16, #tpu.memory_space<vmem>>, %arg9: memref<2x64x64xbf16, #tpu.memory_space<vmem>>, %arg10: memref<2x64x128xbf16, #tpu.memory_space<vmem>>, %arg11: memref<2x128x64xbf16, #tpu.memory_space<vmem>>, %arg12: memref<64x128xbf16, #tpu.memory_space<vmem>>, %arg13: memref<32x192xf32, #tpu.memory_space<vmem>>, %arg14: memref<16x128xf32, #tpu.memory_space<vmem>>) attributes {dimension_semantics = [], scalar_prefetch = 0 : i64, scratch_operands = 0 : i64, tpu.core_type = #tpu.core_type<tc>} {
    %c0 = arith.constant 0 : index
    %c0_0 = arith.constant 0 : index
    %0 = vector.load %arg0[%c0, %c0_0] : memref<2x768xf32, #tpu.memory_space<vmem>>, vector<2x768xf32>
    %c0_1 = arith.constant 0 : index
    %c0_2 = arith.constant 0 : index
    %1 = vector.load %arg3[%c0_1, %c0_2] : memref<768x128xbf16, #tpu.memory_space<vmem>>, vector<768x128xbf16>
    %2 = arith.truncf %0 : vector<2x768xf32> to vector<2x768xbf16>
    %cst = arith.constant dense<0.000000e+00> : vector<2x128xf32>
    %3 = tpu.matmul %2, %1, %cst {dimension_numbers = #tpu.dot_dimension_numbers<[1], [0], [0], [1], [0, 0, 1, 1], [], []>} : vector<2x768xbf16>, vector<768x128xbf16>, vector<2x128xf32> -> vector<2x128xf32>
    %c0_3 = arith.constant 0 : index
    %c0_4 = arith.constant 0 : index
    %4 = vector.load %arg13[%c0_3, %c0_4] : memref<32x192xf32, #tpu.memory_space<vmem>>, vector<1x128xf32>
    %5 = vector.broadcast %4 : vector<1x128xf32> to vector<2x128xf32>
    %6 = arith.addf %3, %5 : vector<2x128xf32>
    %cst_5 = arith.constant 0.000000e+00 : f32
    %7 = vector.broadcast %cst_5 : f32 to vector<2x128xf32>
    %8 = arith.maximumf %6, %7 : vector<2x128xf32>
    %c0_6 = arith.constant 0 : index
    %c0_7 = arith.constant 0 : index
    %9 = vector.load %arg1[%c0_6, %c0_7] : memref<2x40xf32, #tpu.memory_space<vmem>>, vector<2x40xf32>
    %c0_8 = arith.constant 0 : index
    %c0_9 = arith.constant 0 : index
    %10 = vector.load %arg4[%c0_8, %c0_9] : memref<40x128xbf16, #tpu.memory_space<vmem>>, vector<40x128xbf16>
    %11 = arith.truncf %9 : vector<2x40xf32> to vector<2x40xbf16>
    %cst_10 = arith.constant dense<0.000000e+00> : vector<2x128xf32>
    %12 = tpu.matmul %11, %10, %cst_10 {dimension_numbers = #tpu.dot_dimension_numbers<[1], [0], [0], [1], [0, 0, 1, 1], [], []>} : vector<2x40xbf16>, vector<40x128xbf16>, vector<2x128xf32> -> vector<2x128xf32>
    %c1 = arith.constant 1 : index
    %c0_11 = arith.constant 0 : index
    %13 = vector.load %arg13[%c1, %c0_11] : memref<32x192xf32, #tpu.memory_space<vmem>>, vector<1x128xf32>
    %14 = vector.broadcast %13 : vector<1x128xf32> to vector<2x128xf32>
    %15 = arith.addf %12, %14 : vector<2x128xf32>
    %cst_12 = arith.constant 0.000000e+00 : f32
    %16 = vector.broadcast %cst_12 : f32 to vector<2x128xf32>
    %17 = arith.maximumf %15, %16 : vector<2x128xf32>
    %18 = tpu.concatenate %8, %17 in 1 : vector<2x128xf32>, vector<2x128xf32> -> vector<2x256xf32>
    %c0_13 = arith.constant 0 : index
    %c0_14 = arith.constant 0 : index
    %19 = vector.load %arg5[%c0_13, %c0_14] : memref<256x64xbf16, #tpu.memory_space<vmem>>, vector<256x64xbf16>
    %20 = arith.truncf %18 : vector<2x256xf32> to vector<2x256xbf16>
    %cst_15 = arith.constant dense<0.000000e+00> : vector<2x64xf32>
    %21 = tpu.matmul %20, %19, %cst_15 {dimension_numbers = #tpu.dot_dimension_numbers<[1], [0], [0], [1], [0, 0, 1, 1], [], []>} : vector<2x256xbf16>, vector<256x64xbf16>, vector<2x64xf32> -> vector<2x64xf32>
    %c2 = arith.constant 2 : index
    %c0_16 = arith.constant 0 : index
    %22 = vector.load %arg13[%c2, %c0_16] : memref<32x192xf32, #tpu.memory_space<vmem>>, vector<1x64xf32>
    %23 = vector.broadcast %22 : vector<1x64xf32> to vector<2x64xf32>
    %24 = arith.addf %21, %23 : vector<2x64xf32>
    %25 = math.tanh %24 : vector<2x64xf32>
    %c0_17 = arith.constant 0 : index
    %c0_18 = arith.constant 0 : index
    %26 = vector.load %arg2[%c0_17, %c0_18] : memref<2x776xf32, #tpu.memory_space<vmem>>, vector<2x776xf32>
    %c0_19 = arith.constant 0 : index
    %c0_20 = arith.constant 0 : index
    %27 = vector.load %arg6[%c0_19, %c0_20] : memref<776x64xbf16, #tpu.memory_space<vmem>>, vector<776x64xbf16>
    %28 = arith.truncf %26 : vector<2x776xf32> to vector<2x776xbf16>
    %cst_21 = arith.constant dense<0.000000e+00> : vector<2x64xf32>
    %29 = tpu.matmul %28, %27, %cst_21 {dimension_numbers = #tpu.dot_dimension_numbers<[1], [0], [0], [1], [0, 0, 1, 1], [], []>} : vector<2x776xbf16>, vector<776x64xbf16>, vector<2x64xf32> -> vector<2x64xf32>
    %c0_22 = arith.constant 0 : index
    %c0_23 = arith.constant 0 : index
    %30 = vector.load %arg7[%c0_22, %c0_23] : memref<64x64xbf16, #tpu.memory_space<vmem>>, vector<64x64xbf16>
    %31 = arith.truncf %25 : vector<2x64xf32> to vector<2x64xbf16>
    %cst_24 = arith.constant dense<0.000000e+00> : vector<2x64xf32>
    %32 = tpu.matmul %31, %30, %cst_24 {dimension_numbers = #tpu.dot_dimension_numbers<[1], [0], [0], [1], [0, 0, 1, 1], [], []>} : vector<2x64xbf16>, vector<64x64xbf16>, vector<2x64xf32> -> vector<2x64xf32>
    %33 = arith.addf %29, %32 : vector<2x64xf32>
    %c3 = arith.constant 3 : index
    %c0_25 = arith.constant 0 : index
    %34 = vector.load %arg13[%c3, %c0_25] : memref<32x192xf32, #tpu.memory_space<vmem>>, vector<1x64xf32>
    %35 = vector.broadcast %34 : vector<1x64xf32> to vector<2x64xf32>
    %36 = arith.addf %33, %35 : vector<2x64xf32>
    %c4 = arith.constant 4 : index
    %c0_26 = arith.constant 0 : index
    %37 = vector.load %arg13[%c4, %c0_26] : memref<32x192xf32, #tpu.memory_space<vmem>>, vector<8x64xf32>
    %38 = vector.shape_cast %37 : vector<8x64xf32> to vector<1x8x64xf32>
    %39 = vector.shape_cast %36 : vector<2x64xf32> to vector<2x1x64xf32>
    %40 = vector.broadcast %38 : vector<1x8x64xf32> to vector<2x8x64xf32>
    %41 = vector.broadcast %39 : vector<2x1x64xf32> to vector<2x8x64xf32>
    %42 = arith.addf %40, %41 : vector<2x8x64xf32>
    %43 = vector.shape_cast %42 : vector<2x8x64xf32> to vector<16x64xf32>
    %c12 = arith.constant 12 : index
    %c0_27 = arith.constant 0 : index
    %44 = vector.load %arg13[%c12, %c0_27] : memref<32x192xf32, #tpu.memory_space<vmem>>, vector<1x64xf32>
    %c13 = arith.constant 13 : index
    %c0_28 = arith.constant 0 : index
    %45 = vector.load %arg13[%c13, %c0_28] : memref<32x192xf32, #tpu.memory_space<vmem>>, vector<1x64xf32>
    %c14 = arith.constant 14 : index
    %c0_29 = arith.constant 0 : index
    %46 = vector.load %arg13[%c14, %c0_29] : memref<32x192xf32, #tpu.memory_space<vmem>>, vector<1x192xf32>
    %c15 = arith.constant 15 : index
    %c0_30 = arith.constant 0 : index
    %47 = vector.load %arg13[%c15, %c0_30] : memref<32x192xf32, #tpu.memory_space<vmem>>, vector<1x64xf32>
    %c16 = arith.constant 16 : index
    %c0_31 = arith.constant 0 : index
    %48 = vector.load %arg13[%c16, %c0_31] : memref<32x192xf32, #tpu.memory_space<vmem>>, vector<1x64xf32>
    %c17 = arith.constant 17 : index
    %c0_32 = arith.constant 0 : index
    %49 = vector.load %arg13[%c17, %c0_32] : memref<32x192xf32, #tpu.memory_space<vmem>>, vector<1x64xf32>
    %c18 = arith.constant 18 : index
    %c0_33 = arith.constant 0 : index
    %50 = vector.load %arg13[%c18, %c0_33] : memref<32x192xf32, #tpu.memory_space<vmem>>, vector<1x128xf32>
    %c19 = arith.constant 19 : index
    %c0_34 = arith.constant 0 : index
    %51 = vector.load %arg13[%c19, %c0_34] : memref<32x192xf32, #tpu.memory_space<vmem>>, vector<1x64xf32>
    %cst_35 = arith.constant dense<0.000000e+00> : vector<16xf32>
    %52 = vector.multi_reduction <add>, %43, %cst_35 [1] : vector<16x64xf32> to vector<16xf32>
    %53 = vector.shape_cast %52 : vector<16xf32> to vector<16x1xf32>
    %cst_36 = arith.constant 6.400000e+01 : f32
    %54 = vector.broadcast %cst_36 : f32 to vector<16x1xf32>
    %55 = arith.divf %53, %54 : vector<16x1xf32>
    %56 = vector.broadcast %55 : vector<16x1xf32> to vector<16x64xf32>
    %57 = arith.subf %43, %56 : vector<16x64xf32>
    %58 = arith.mulf %57, %57 : vector<16x64xf32>
    %cst_37 = arith.constant dense<0.000000e+00> : vector<16xf32>
    %59 = vector.multi_reduction <add>, %58, %cst_37 [1] : vector<16x64xf32> to vector<16xf32>
    %60 = vector.shape_cast %59 : vector<16xf32> to vector<16x1xf32>
    %cst_38 = arith.constant 6.400000e+01 : f32
    %61 = vector.broadcast %cst_38 : f32 to vector<16x1xf32>
    %62 = arith.divf %60, %61 : vector<16x1xf32>
    %63 = vector.broadcast %55 : vector<16x1xf32> to vector<16x64xf32>
    %64 = arith.subf %43, %63 : vector<16x64xf32>
    %cst_39 = arith.constant 9.99999974E-6 : f32
    %65 = vector.broadcast %cst_39 : f32 to vector<16x1xf32>
    %66 = arith.addf %62, %65 : vector<16x1xf32>
    %67 = math.rsqrt %66 : vector<16x1xf32>
    %68 = vector.broadcast %67 : vector<16x1xf32> to vector<16x64xf32>
    %69 = arith.mulf %64, %68 : vector<16x64xf32>
    %70 = vector.broadcast %44 : vector<1x64xf32> to vector<16x64xf32>
    %71 = arith.mulf %69, %70 : vector<16x64xf32>
    %72 = vector.broadcast %45 : vector<1x64xf32> to vector<16x64xf32>
    %73 = arith.addf %71, %72 : vector<16x64xf32>
    %c0_40 = arith.constant 0 : index
    %c0_41 = arith.constant 0 : index
    %c0_42 = arith.constant 0 : index
    %74 = vector.load %arg8[%c0_40, %c0_41, %c0_42] : memref<2x64x192xbf16, #tpu.memory_space<vmem>>, vector<1x64x192xbf16>
    %75 = vector.shape_cast %74 : vector<1x64x192xbf16> to vector<64x192xbf16>
    %76 = arith.truncf %73 : vector<16x64xf32> to vector<16x64xbf16>
    %cst_43 = arith.constant dense<0.000000e+00> : vector<16x192xf32>
    %77 = tpu.matmul %76, %75, %cst_43 {dimension_numbers = #tpu.dot_dimension_numbers<[1], [0], [0], [1], [0, 0, 1, 1], [], []>} : vector<16x64xbf16>, vector<64x192xbf16>, vector<16x192xf32> -> vector<16x192xf32>
    %78 = vector.broadcast %46 : vector<1x192xf32> to vector<16x192xf32>
    %79 = arith.addf %77, %78 : vector<16x192xf32>
    %80 = arith.truncf %79 : vector<16x192xf32> to vector<16x192xbf16>
    %81 = vector.extract_strided_slice %80 {offsets = [0, 0], sizes = [16, 16], strides = [1, 1]} : vector<16x192xbf16> to vector<16x16xbf16>
    %82 = vector.shape_cast %81 : vector<16x16xbf16> to vector<2x8x16xbf16>
    %83 = vector.extract_strided_slice %80 {offsets = [0, 64], sizes = [16, 16], strides = [1, 1]} : vector<16x192xbf16> to vector<16x16xbf16>
    %84 = vector.shape_cast %83 : vector<16x16xbf16> to vector<2x8x16xbf16>
    %85 = vector.extract_strided_slice %80 {offsets = [0, 128], sizes = [16, 16], strides = [1, 1]} : vector<16x192xbf16> to vector<16x16xbf16>
    %86 = vector.shape_cast %85 : vector<16x16xbf16> to vector<2x8x16xbf16>
    "tpu.trace_start"() <{level = 10 : i32, message = "bqd,bkd->bqk"}> : () -> ()
    %cst_44 = arith.constant dense<0.000000e+00> : vector<2x8x8xf32>
    %87 = tpu.matmul %82, %84, %cst_44 {dimension_numbers = #tpu.dot_dimension_numbers<[2], [2], [1], [1], [0, 0, 0, 1, 1, 1], [0], [0]>} : vector<2x8x16xbf16>, vector<2x8x16xbf16>, vector<2x8x8xf32> -> vector<2x8x8xf32>
    "tpu.trace_stop"() : () -> ()
    %cst_45 = arith.constant 2.500000e-01 : f32
    %88 = vector.broadcast %cst_45 : f32 to vector<2x8x8xf32>
    %89 = arith.mulf %87, %88 : vector<2x8x8xf32>
    %cst_46 = arith.constant dense<0xFF800000> : vector<2x8xf32>
    %90 = vector.multi_reduction <maximumf>, %89, %cst_46 [2] : vector<2x8x8xf32> to vector<2x8xf32>
    %91 = vector.shape_cast %90 : vector<2x8xf32> to vector<2x8x1xf32>
    %92 = vector.broadcast %91 : vector<2x8x1xf32> to vector<2x8x8xf32>
    %93 = arith.subf %89, %92 : vector<2x8x8xf32>
    %94 = math.exp %93 : vector<2x8x8xf32>
    %cst_47 = arith.constant dense<0.000000e+00> : vector<2x8xf32>
    %95 = vector.multi_reduction <add>, %94, %cst_47 [2] : vector<2x8x8xf32> to vector<2x8xf32>
    %96 = vector.shape_cast %95 : vector<2x8xf32> to vector<2x8x1xf32>
    %97 = tpu.reciprocal %96 {approx = true} : vector<2x8x1xf32> -> vector<2x8x1xf32>
    %98 = vector.broadcast %97 : vector<2x8x1xf32> to vector<2x8x8xf32>
    %99 = arith.mulf %94, %98 : vector<2x8x8xf32>
    %100 = arith.truncf %99 : vector<2x8x8xf32> to vector<2x8x8xbf16>
    "tpu.trace_start"() <{level = 10 : i32, message = "bqk,bkd->bqd"}> : () -> ()
    %cst_48 = arith.constant dense<0.000000e+00> : vector<2x8x16xf32>
    %101 = tpu.matmul %100, %86, %cst_48 {dimension_numbers = #tpu.dot_dimension_numbers<[2], [1], [1], [2], [0, 0, 0, 1, 1, 2], [0], [0]>} : vector<2x8x8xbf16>, vector<2x8x16xbf16>, vector<2x8x16xf32> -> vector<2x8x16xf32>
    "tpu.trace_stop"() : () -> ()
    %102 = vector.shape_cast %101 : vector<2x8x16xf32> to vector<16x16xf32>
    %103 = vector.extract_strided_slice %80 {offsets = [0, 16], sizes = [16, 16], strides = [1, 1]} : vector<16x192xbf16> to vector<16x16xbf16>
    %104 = vector.shape_cast %103 : vector<16x16xbf16> to vector<2x8x16xbf16>
    %105 = vector.extract_strided_slice %80 {offsets = [0, 80], sizes = [16, 16], strides = [1, 1]} : vector<16x192xbf16> to vector<16x16xbf16>
    %106 = vector.shape_cast %105 : vector<16x16xbf16> to vector<2x8x16xbf16>
    %107 = vector.extract_strided_slice %80 {offsets = [0, 144], sizes = [16, 16], strides = [1, 1]} : vector<16x192xbf16> to vector<16x16xbf16>
    %108 = vector.shape_cast %107 : vector<16x16xbf16> to vector<2x8x16xbf16>
    "tpu.trace_start"() <{level = 10 : i32, message = "bqd,bkd->bqk"}> : () -> ()
    %cst_49 = arith.constant dense<0.000000e+00> : vector<2x8x8xf32>
    %109 = tpu.matmul %104, %106, %cst_49 {dimension_numbers = #tpu.dot_dimension_numbers<[2], [2], [1], [1], [0, 0, 0, 1, 1, 1], [0], [0]>} : vector<2x8x16xbf16>, vector<2x8x16xbf16>, vector<2x8x8xf32> -> vector<2x8x8xf32>
    "tpu.trace_stop"() : () -> ()
    %cst_50 = arith.constant 2.500000e-01 : f32
    %110 = vector.broadcast %cst_50 : f32 to vector<2x8x8xf32>
    %111 = arith.mulf %109, %110 : vector<2x8x8xf32>
    %cst_51 = arith.constant dense<0xFF800000> : vector<2x8xf32>
    %112 = vector.multi_reduction <maximumf>, %111, %cst_51 [2] : vector<2x8x8xf32> to vector<2x8xf32>
    %113 = vector.shape_cast %112 : vector<2x8xf32> to vector<2x8x1xf32>
    %114 = vector.broadcast %113 : vector<2x8x1xf32> to vector<2x8x8xf32>
    %115 = arith.subf %111, %114 : vector<2x8x8xf32>
    %116 = math.exp %115 : vector<2x8x8xf32>
    %cst_52 = arith.constant dense<0.000000e+00> : vector<2x8xf32>
    %117 = vector.multi_reduction <add>, %116, %cst_52 [2] : vector<2x8x8xf32> to vector<2x8xf32>
    %118 = vector.shape_cast %117 : vector<2x8xf32> to vector<2x8x1xf32>
    %119 = tpu.reciprocal %118 {approx = true} : vector<2x8x1xf32> -> vector<2x8x1xf32>
    %120 = vector.broadcast %119 : vector<2x8x1xf32> to vector<2x8x8xf32>
    %121 = arith.mulf %116, %120 : vector<2x8x8xf32>
    %122 = arith.truncf %121 : vector<2x8x8xf32> to vector<2x8x8xbf16>
    "tpu.trace_start"() <{level = 10 : i32, message = "bqk,bkd->bqd"}> : () -> ()
    %cst_53 = arith.constant dense<0.000000e+00> : vector<2x8x16xf32>
    %123 = tpu.matmul %122, %108, %cst_53 {dimension_numbers = #tpu.dot_dimension_numbers<[2], [1], [1], [2], [0, 0, 0, 1, 1, 2], [0], [0]>} : vector<2x8x8xbf16>, vector<2x8x16xbf16>, vector<2x8x16xf32> -> vector<2x8x16xf32>
    "tpu.trace_stop"() : () -> ()
    %124 = vector.shape_cast %123 : vector<2x8x16xf32> to vector<16x16xf32>
    %125 = vector.extract_strided_slice %80 {offsets = [0, 32], sizes = [16, 16], strides = [1, 1]} : vector<16x192xbf16> to vector<16x16xbf16>
    %126 = vector.shape_cast %125 : vector<16x16xbf16> to vector<2x8x16xbf16>
    %127 = vector.extract_strided_slice %80 {offsets = [0, 96], sizes = [16, 16], strides = [1, 1]} : vector<16x192xbf16> to vector<16x16xbf16>
    %128 = vector.shape_cast %127 : vector<16x16xbf16> to vector<2x8x16xbf16>
    %129 = vector.extract_strided_slice %80 {offsets = [0, 160], sizes = [16, 16], strides = [1, 1]} : vector<16x192xbf16> to vector<16x16xbf16>
    %130 = vector.shape_cast %129 : vector<16x16xbf16> to vector<2x8x16xbf16>
    "tpu.trace_start"() <{level = 10 : i32, message = "bqd,bkd->bqk"}> : () -> ()
    %cst_54 = arith.constant dense<0.000000e+00> : vector<2x8x8xf32>
    %131 = tpu.matmul %126, %128, %cst_54 {dimension_numbers = #tpu.dot_dimension_numbers<[2], [2], [1], [1], [0, 0, 0, 1, 1, 1], [0], [0]>} : vector<2x8x16xbf16>, vector<2x8x16xbf16>, vector<2x8x8xf32> -> vector<2x8x8xf32>
    "tpu.trace_stop"() : () -> ()
    %cst_55 = arith.constant 2.500000e-01 : f32
    %132 = vector.broadcast %cst_55 : f32 to vector<2x8x8xf32>
    %133 = arith.mulf %131, %132 : vector<2x8x8xf32>
    %cst_56 = arith.constant dense<0xFF800000> : vector<2x8xf32>
    %134 = vector.multi_reduction <maximumf>, %133, %cst_56 [2] : vector<2x8x8xf32> to vector<2x8xf32>
    %135 = vector.shape_cast %134 : vector<2x8xf32> to vector<2x8x1xf32>
    %136 = vector.broadcast %135 : vector<2x8x1xf32> to vector<2x8x8xf32>
    %137 = arith.subf %133, %136 : vector<2x8x8xf32>
    %138 = math.exp %137 : vector<2x8x8xf32>
    %cst_57 = arith.constant dense<0.000000e+00> : vector<2x8xf32>
    %139 = vector.multi_reduction <add>, %138, %cst_57 [2] : vector<2x8x8xf32> to vector<2x8xf32>
    %140 = vector.shape_cast %139 : vector<2x8xf32> to vector<2x8x1xf32>
    %141 = tpu.reciprocal %140 {approx = true} : vector<2x8x1xf32> -> vector<2x8x1xf32>
    %142 = vector.broadcast %141 : vector<2x8x1xf32> to vector<2x8x8xf32>
    %143 = arith.mulf %138, %142 : vector<2x8x8xf32>
    %144 = arith.truncf %143 : vector<2x8x8xf32> to vector<2x8x8xbf16>
    "tpu.trace_start"() <{level = 10 : i32, message = "bqk,bkd->bqd"}> : () -> ()
    %cst_58 = arith.constant dense<0.000000e+00> : vector<2x8x16xf32>
    %145 = tpu.matmul %144, %130, %cst_58 {dimension_numbers = #tpu.dot_dimension_numbers<[2], [1], [1], [2], [0, 0, 0, 1, 1, 2], [0], [0]>} : vector<2x8x8xbf16>, vector<2x8x16xbf16>, vector<2x8x16xf32> -> vector<2x8x16xf32>
    "tpu.trace_stop"() : () -> ()
    %146 = vector.shape_cast %145 : vector<2x8x16xf32> to vector<16x16xf32>
    %147 = vector.extract_strided_slice %80 {offsets = [0, 48], sizes = [16, 16], strides = [1, 1]} : vector<16x192xbf16> to vector<16x16xbf16>
    %148 = vector.shape_cast %147 : vector<16x16xbf16> to vector<2x8x16xbf16>
    %149 = vector.extract_strided_slice %80 {offsets = [0, 112], sizes = [16, 16], strides = [1, 1]} : vector<16x192xbf16> to vector<16x16xbf16>
    %150 = vector.shape_cast %149 : vector<16x16xbf16> to vector<2x8x16xbf16>
    %151 = vector.extract_strided_slice %80 {offsets = [0, 176], sizes = [16, 16], strides = [1, 1]} : vector<16x192xbf16> to vector<16x16xbf16>
    %152 = vector.shape_cast %151 : vector<16x16xbf16> to vector<2x8x16xbf16>
    "tpu.trace_start"() <{level = 10 : i32, message = "bqd,bkd->bqk"}> : () -> ()
    %cst_59 = arith.constant dense<0.000000e+00> : vector<2x8x8xf32>
    %153 = tpu.matmul %148, %150, %cst_59 {dimension_numbers = #tpu.dot_dimension_numbers<[2], [2], [1], [1], [0, 0, 0, 1, 1, 1], [0], [0]>} : vector<2x8x16xbf16>, vector<2x8x16xbf16>, vector<2x8x8xf32> -> vector<2x8x8xf32>
    "tpu.trace_stop"() : () -> ()
    %cst_60 = arith.constant 2.500000e-01 : f32
    %154 = vector.broadcast %cst_60 : f32 to vector<2x8x8xf32>
    %155 = arith.mulf %153, %154 : vector<2x8x8xf32>
    %cst_61 = arith.constant dense<0xFF800000> : vector<2x8xf32>
    %156 = vector.multi_reduction <maximumf>, %155, %cst_61 [2] : vector<2x8x8xf32> to vector<2x8xf32>
    %157 = vector.shape_cast %156 : vector<2x8xf32> to vector<2x8x1xf32>
    %158 = vector.broadcast %157 : vector<2x8x1xf32> to vector<2x8x8xf32>
    %159 = arith.subf %155, %158 : vector<2x8x8xf32>
    %160 = math.exp %159 : vector<2x8x8xf32>
    %cst_62 = arith.constant dense<0.000000e+00> : vector<2x8xf32>
    %161 = vector.multi_reduction <add>, %160, %cst_62 [2] : vector<2x8x8xf32> to vector<2x8xf32>
    %162 = vector.shape_cast %161 : vector<2x8xf32> to vector<2x8x1xf32>
    %163 = tpu.reciprocal %162 {approx = true} : vector<2x8x1xf32> -> vector<2x8x1xf32>
    %164 = vector.broadcast %163 : vector<2x8x1xf32> to vector<2x8x8xf32>
    %165 = arith.mulf %160, %164 : vector<2x8x8xf32>
    %166 = arith.truncf %165 : vector<2x8x8xf32> to vector<2x8x8xbf16>
    "tpu.trace_start"() <{level = 10 : i32, message = "bqk,bkd->bqd"}> : () -> ()
    %cst_63 = arith.constant dense<0.000000e+00> : vector<2x8x16xf32>
    %167 = tpu.matmul %166, %152, %cst_63 {dimension_numbers = #tpu.dot_dimension_numbers<[2], [1], [1], [2], [0, 0, 0, 1, 1, 2], [0], [0]>} : vector<2x8x8xbf16>, vector<2x8x16xbf16>, vector<2x8x16xf32> -> vector<2x8x16xf32>
    "tpu.trace_stop"() : () -> ()
    %168 = vector.shape_cast %167 : vector<2x8x16xf32> to vector<16x16xf32>
    %169 = tpu.concatenate %102, %124, %146, %168 in 1 : vector<16x16xf32>, vector<16x16xf32>, vector<16x16xf32>, vector<16x16xf32> -> vector<16x64xf32>
    %c0_64 = arith.constant 0 : index
    %c0_65 = arith.constant 0 : index
    %c0_66 = arith.constant 0 : index
    %170 = vector.load %arg9[%c0_64, %c0_65, %c0_66] : memref<2x64x64xbf16, #tpu.memory_space<vmem>>, vector<1x64x64xbf16>
    %171 = vector.shape_cast %170 : vector<1x64x64xbf16> to vector<64x64xbf16>
    %172 = arith.truncf %169 : vector<16x64xf32> to vector<16x64xbf16>
    %cst_67 = arith.constant dense<0.000000e+00> : vector<16x64xf32>
    %173 = tpu.matmul %172, %171, %cst_67 {dimension_numbers = #tpu.dot_dimension_numbers<[1], [0], [0], [1], [0, 0, 1, 1], [], []>} : vector<16x64xbf16>, vector<64x64xbf16>, vector<16x64xf32> -> vector<16x64xf32>
    %174 = arith.addf %43, %173 : vector<16x64xf32>
    %175 = vector.broadcast %47 : vector<1x64xf32> to vector<16x64xf32>
    %176 = arith.addf %174, %175 : vector<16x64xf32>
    %cst_68 = arith.constant dense<0.000000e+00> : vector<16xf32>
    %177 = vector.multi_reduction <add>, %176, %cst_68 [1] : vector<16x64xf32> to vector<16xf32>
    %178 = vector.shape_cast %177 : vector<16xf32> to vector<16x1xf32>
    %cst_69 = arith.constant 6.400000e+01 : f32
    %179 = vector.broadcast %cst_69 : f32 to vector<16x1xf32>
    %180 = arith.divf %178, %179 : vector<16x1xf32>
    %181 = vector.broadcast %180 : vector<16x1xf32> to vector<16x64xf32>
    %182 = arith.subf %176, %181 : vector<16x64xf32>
    %183 = arith.mulf %182, %182 : vector<16x64xf32>
    %cst_70 = arith.constant dense<0.000000e+00> : vector<16xf32>
    %184 = vector.multi_reduction <add>, %183, %cst_70 [1] : vector<16x64xf32> to vector<16xf32>
    %185 = vector.shape_cast %184 : vector<16xf32> to vector<16x1xf32>
    %cst_71 = arith.constant 6.400000e+01 : f32
    %186 = vector.broadcast %cst_71 : f32 to vector<16x1xf32>
    %187 = arith.divf %185, %186 : vector<16x1xf32>
    %188 = vector.broadcast %180 : vector<16x1xf32> to vector<16x64xf32>
    %189 = arith.subf %176, %188 : vector<16x64xf32>
    %cst_72 = arith.constant 9.99999974E-6 : f32
    %190 = vector.broadcast %cst_72 : f32 to vector<16x1xf32>
    %191 = arith.addf %187, %190 : vector<16x1xf32>
    %192 = math.rsqrt %191 : vector<16x1xf32>
    %193 = vector.broadcast %192 : vector<16x1xf32> to vector<16x64xf32>
    %194 = arith.mulf %189, %193 : vector<16x64xf32>
    %195 = vector.broadcast %48 : vector<1x64xf32> to vector<16x64xf32>
    %196 = arith.mulf %194, %195 : vector<16x64xf32>
    %197 = vector.broadcast %49 : vector<1x64xf32> to vector<16x64xf32>
    %198 = arith.addf %196, %197 : vector<16x64xf32>
    %c0_73 = arith.constant 0 : index
    %c0_74 = arith.constant 0 : index
    %c0_75 = arith.constant 0 : index
    %199 = vector.load %arg10[%c0_73, %c0_74, %c0_75] : memref<2x64x128xbf16, #tpu.memory_space<vmem>>, vector<1x64x128xbf16>
    %200 = vector.shape_cast %199 : vector<1x64x128xbf16> to vector<64x128xbf16>
    %201 = arith.truncf %198 : vector<16x64xf32> to vector<16x64xbf16>
    %cst_76 = arith.constant dense<0.000000e+00> : vector<16x128xf32>
    %202 = tpu.matmul %201, %200, %cst_76 {dimension_numbers = #tpu.dot_dimension_numbers<[1], [0], [0], [1], [0, 0, 1, 1], [], []>} : vector<16x64xbf16>, vector<64x128xbf16>, vector<16x128xf32> -> vector<16x128xf32>
    %203 = vector.broadcast %50 : vector<1x128xf32> to vector<16x128xf32>
    %204 = arith.addf %202, %203 : vector<16x128xf32>
    %cst_77 = arith.constant 0.000000e+00 : f32
    %205 = vector.broadcast %cst_77 : f32 to vector<16x128xf32>
    %206 = arith.maximumf %204, %205 : vector<16x128xf32>
    %c0_78 = arith.constant 0 : index
    %c0_79 = arith.constant 0 : index
    %c0_80 = arith.constant 0 : index
    %207 = vector.load %arg11[%c0_78, %c0_79, %c0_80] : memref<2x128x64xbf16, #tpu.memory_space<vmem>>, vector<1x128x64xbf16>
    %208 = vector.shape_cast %207 : vector<1x128x64xbf16> to vector<128x64xbf16>
    %209 = arith.truncf %206 : vector<16x128xf32> to vector<16x128xbf16>
    %cst_81 = arith.constant dense<0.000000e+00> : vector<16x64xf32>
    %210 = tpu.matmul %209, %208, %cst_81 {dimension_numbers = #tpu.dot_dimension_numbers<[1], [0], [0], [1], [0, 0, 1, 1], [], []>} : vector<16x128xbf16>, vector<128x64xbf16>, vector<16x64xf32> -> vector<16x64xf32>
    %211 = arith.addf %176, %210 : vector<16x64xf32>
    %212 = vector.broadcast %51 : vector<1x64xf32> to vector<16x64xf32>
    %213 = arith.addf %211, %212 : vector<16x64xf32>
    %c20 = arith.constant 20 : index
    %c0_82 = arith.constant 0 : index
    %214 = vector.load %arg13[%c20, %c0_82] : memref<32x192xf32, #tpu.memory_space<vmem>>, vector<1x64xf32>
    %c21 = arith.constant 21 : index
    %c0_83 = arith.constant 0 : index
    %215 = vector.load %arg13[%c21, %c0_83] : memref<32x192xf32, #tpu.memory_space<vmem>>, vector<1x64xf32>
    %c22 = arith.constant 22 : index
    %c0_84 = arith.constant 0 : index
    %216 = vector.load %arg13[%c22, %c0_84] : memref<32x192xf32, #tpu.memory_space<vmem>>, vector<1x192xf32>
    %c23 = arith.constant 23 : index
    %c0_85 = arith.constant 0 : index
    %217 = vector.load %arg13[%c23, %c0_85] : memref<32x192xf32, #tpu.memory_space<vmem>>, vector<1x64xf32>
    %c24 = arith.constant 24 : index
    %c0_86 = arith.constant 0 : index
    %218 = vector.load %arg13[%c24, %c0_86] : memref<32x192xf32, #tpu.memory_space<vmem>>, vector<1x64xf32>
    %c25 = arith.constant 25 : index
    %c0_87 = arith.constant 0 : index
    %219 = vector.load %arg13[%c25, %c0_87] : memref<32x192xf32, #tpu.memory_space<vmem>>, vector<1x64xf32>
    %c26 = arith.constant 26 : index
    %c0_88 = arith.constant 0 : index
    %220 = vector.load %arg13[%c26, %c0_88] : memref<32x192xf32, #tpu.memory_space<vmem>>, vector<1x128xf32>
    %c27 = arith.constant 27 : index
    %c0_89 = arith.constant 0 : index
    %221 = vector.load %arg13[%c27, %c0_89] : memref<32x192xf32, #tpu.memory_space<vmem>>, vector<1x64xf32>
    %cst_90 = arith.constant dense<0.000000e+00> : vector<16xf32>
    %222 = vector.multi_reduction <add>, %213, %cst_90 [1] : vector<16x64xf32> to vector<16xf32>
    %223 = vector.shape_cast %222 : vector<16xf32> to vector<16x1xf32>
    %cst_91 = arith.constant 6.400000e+01 : f32
    %224 = vector.broadcast %cst_91 : f32 to vector<16x1xf32>
    %225 = arith.divf %223, %224 : vector<16x1xf32>
    %226 = vector.broadcast %225 : vector<16x1xf32> to vector<16x64xf32>
    %227 = arith.subf %213, %226 : vector<16x64xf32>
    %228 = arith.mulf %227, %227 : vector<16x64xf32>
    %cst_92 = arith.constant dense<0.000000e+00> : vector<16xf32>
    %229 = vector.multi_reduction <add>, %228, %cst_92 [1] : vector<16x64xf32> to vector<16xf32>
    %230 = vector.shape_cast %229 : vector<16xf32> to vector<16x1xf32>
    %cst_93 = arith.constant 6.400000e+01 : f32
    %231 = vector.broadcast %cst_93 : f32 to vector<16x1xf32>
    %232 = arith.divf %230, %231 : vector<16x1xf32>
    %233 = vector.broadcast %225 : vector<16x1xf32> to vector<16x64xf32>
    %234 = arith.subf %213, %233 : vector<16x64xf32>
    %cst_94 = arith.constant 9.99999974E-6 : f32
    %235 = vector.broadcast %cst_94 : f32 to vector<16x1xf32>
    %236 = arith.addf %232, %235 : vector<16x1xf32>
    %237 = math.rsqrt %236 : vector<16x1xf32>
    %238 = vector.broadcast %237 : vector<16x1xf32> to vector<16x64xf32>
    %239 = arith.mulf %234, %238 : vector<16x64xf32>
    %240 = vector.broadcast %214 : vector<1x64xf32> to vector<16x64xf32>
    %241 = arith.mulf %239, %240 : vector<16x64xf32>
    %242 = vector.broadcast %215 : vector<1x64xf32> to vector<16x64xf32>
    %243 = arith.addf %241, %242 : vector<16x64xf32>
    %c1_95 = arith.constant 1 : index
    %c0_96 = arith.constant 0 : index
    %c0_97 = arith.constant 0 : index
    %244 = vector.load %arg8[%c1_95, %c0_96, %c0_97] : memref<2x64x192xbf16, #tpu.memory_space<vmem>>, vector<1x64x192xbf16>
    %245 = vector.shape_cast %244 : vector<1x64x192xbf16> to vector<64x192xbf16>
    %246 = arith.truncf %243 : vector<16x64xf32> to vector<16x64xbf16>
    %cst_98 = arith.constant dense<0.000000e+00> : vector<16x192xf32>
    %247 = tpu.matmul %246, %245, %cst_98 {dimension_numbers = #tpu.dot_dimension_numbers<[1], [0], [0], [1], [0, 0, 1, 1], [], []>} : vector<16x64xbf16>, vector<64x192xbf16>, vector<16x192xf32> -> vector<16x192xf32>
    %248 = vector.broadcast %216 : vector<1x192xf32> to vector<16x192xf32>
    %249 = arith.addf %247, %248 : vector<16x192xf32>
    %250 = arith.truncf %249 : vector<16x192xf32> to vector<16x192xbf16>
    %251 = vector.extract_strided_slice %250 {offsets = [0, 0], sizes = [16, 16], strides = [1, 1]} : vector<16x192xbf16> to vector<16x16xbf16>
    %252 = vector.shape_cast %251 : vector<16x16xbf16> to vector<2x8x16xbf16>
    %253 = vector.extract_strided_slice %250 {offsets = [0, 64], sizes = [16, 16], strides = [1, 1]} : vector<16x192xbf16> to vector<16x16xbf16>
    %254 = vector.shape_cast %253 : vector<16x16xbf16> to vector<2x8x16xbf16>
    %255 = vector.extract_strided_slice %250 {offsets = [0, 128], sizes = [16, 16], strides = [1, 1]} : vector<16x192xbf16> to vector<16x16xbf16>
    %256 = vector.shape_cast %255 : vector<16x16xbf16> to vector<2x8x16xbf16>
    "tpu.trace_start"() <{level = 10 : i32, message = "bqd,bkd->bqk"}> : () -> ()
    %cst_99 = arith.constant dense<0.000000e+00> : vector<2x8x8xf32>
    %257 = tpu.matmul %252, %254, %cst_99 {dimension_numbers = #tpu.dot_dimension_numbers<[2], [2], [1], [1], [0, 0, 0, 1, 1, 1], [0], [0]>} : vector<2x8x16xbf16>, vector<2x8x16xbf16>, vector<2x8x8xf32> -> vector<2x8x8xf32>
    "tpu.trace_stop"() : () -> ()
    %cst_100 = arith.constant 2.500000e-01 : f32
    %258 = vector.broadcast %cst_100 : f32 to vector<2x8x8xf32>
    %259 = arith.mulf %257, %258 : vector<2x8x8xf32>
    %cst_101 = arith.constant dense<0xFF800000> : vector<2x8xf32>
    %260 = vector.multi_reduction <maximumf>, %259, %cst_101 [2] : vector<2x8x8xf32> to vector<2x8xf32>
    %261 = vector.shape_cast %260 : vector<2x8xf32> to vector<2x8x1xf32>
    %262 = vector.broadcast %261 : vector<2x8x1xf32> to vector<2x8x8xf32>
    %263 = arith.subf %259, %262 : vector<2x8x8xf32>
    %264 = math.exp %263 : vector<2x8x8xf32>
    %cst_102 = arith.constant dense<0.000000e+00> : vector<2x8xf32>
    %265 = vector.multi_reduction <add>, %264, %cst_102 [2] : vector<2x8x8xf32> to vector<2x8xf32>
    %266 = vector.shape_cast %265 : vector<2x8xf32> to vector<2x8x1xf32>
    %267 = tpu.reciprocal %266 {approx = true} : vector<2x8x1xf32> -> vector<2x8x1xf32>
    %268 = vector.broadcast %267 : vector<2x8x1xf32> to vector<2x8x8xf32>
    %269 = arith.mulf %264, %268 : vector<2x8x8xf32>
    %270 = arith.truncf %269 : vector<2x8x8xf32> to vector<2x8x8xbf16>
    "tpu.trace_start"() <{level = 10 : i32, message = "bqk,bkd->bqd"}> : () -> ()
    %cst_103 = arith.constant dense<0.000000e+00> : vector<2x8x16xf32>
    %271 = tpu.matmul %270, %256, %cst_103 {dimension_numbers = #tpu.dot_dimension_numbers<[2], [1], [1], [2], [0, 0, 0, 1, 1, 2], [0], [0]>} : vector<2x8x8xbf16>, vector<2x8x16xbf16>, vector<2x8x16xf32> -> vector<2x8x16xf32>
    "tpu.trace_stop"() : () -> ()
    %272 = vector.shape_cast %271 : vector<2x8x16xf32> to vector<16x16xf32>
    %273 = vector.extract_strided_slice %250 {offsets = [0, 16], sizes = [16, 16], strides = [1, 1]} : vector<16x192xbf16> to vector<16x16xbf16>
    %274 = vector.shape_cast %273 : vector<16x16xbf16> to vector<2x8x16xbf16>
    %275 = vector.extract_strided_slice %250 {offsets = [0, 80], sizes = [16, 16], strides = [1, 1]} : vector<16x192xbf16> to vector<16x16xbf16>
    %276 = vector.shape_cast %275 : vector<16x16xbf16> to vector<2x8x16xbf16>
    %277 = vector.extract_strided_slice %250 {offsets = [0, 144], sizes = [16, 16], strides = [1, 1]} : vector<16x192xbf16> to vector<16x16xbf16>
    %278 = vector.shape_cast %277 : vector<16x16xbf16> to vector<2x8x16xbf16>
    "tpu.trace_start"() <{level = 10 : i32, message = "bqd,bkd->bqk"}> : () -> ()
    %cst_104 = arith.constant dense<0.000000e+00> : vector<2x8x8xf32>
    %279 = tpu.matmul %274, %276, %cst_104 {dimension_numbers = #tpu.dot_dimension_numbers<[2], [2], [1], [1], [0, 0, 0, 1, 1, 1], [0], [0]>} : vector<2x8x16xbf16>, vector<2x8x16xbf16>, vector<2x8x8xf32> -> vector<2x8x8xf32>
    "tpu.trace_stop"() : () -> ()
    %cst_105 = arith.constant 2.500000e-01 : f32
    %280 = vector.broadcast %cst_105 : f32 to vector<2x8x8xf32>
    %281 = arith.mulf %279, %280 : vector<2x8x8xf32>
    %cst_106 = arith.constant dense<0xFF800000> : vector<2x8xf32>
    %282 = vector.multi_reduction <maximumf>, %281, %cst_106 [2] : vector<2x8x8xf32> to vector<2x8xf32>
    %283 = vector.shape_cast %282 : vector<2x8xf32> to vector<2x8x1xf32>
    %284 = vector.broadcast %283 : vector<2x8x1xf32> to vector<2x8x8xf32>
    %285 = arith.subf %281, %284 : vector<2x8x8xf32>
    %286 = math.exp %285 : vector<2x8x8xf32>
    %cst_107 = arith.constant dense<0.000000e+00> : vector<2x8xf32>
    %287 = vector.multi_reduction <add>, %286, %cst_107 [2] : vector<2x8x8xf32> to vector<2x8xf32>
    %288 = vector.shape_cast %287 : vector<2x8xf32> to vector<2x8x1xf32>
    %289 = tpu.reciprocal %288 {approx = true} : vector<2x8x1xf32> -> vector<2x8x1xf32>
    %290 = vector.broadcast %289 : vector<2x8x1xf32> to vector<2x8x8xf32>
    %291 = arith.mulf %286, %290 : vector<2x8x8xf32>
    %292 = arith.truncf %291 : vector<2x8x8xf32> to vector<2x8x8xbf16>
    "tpu.trace_start"() <{level = 10 : i32, message = "bqk,bkd->bqd"}> : () -> ()
    %cst_108 = arith.constant dense<0.000000e+00> : vector<2x8x16xf32>
    %293 = tpu.matmul %292, %278, %cst_108 {dimension_numbers = #tpu.dot_dimension_numbers<[2], [1], [1], [2], [0, 0, 0, 1, 1, 2], [0], [0]>} : vector<2x8x8xbf16>, vector<2x8x16xbf16>, vector<2x8x16xf32> -> vector<2x8x16xf32>
    "tpu.trace_stop"() : () -> ()
    %294 = vector.shape_cast %293 : vector<2x8x16xf32> to vector<16x16xf32>
    %295 = vector.extract_strided_slice %250 {offsets = [0, 32], sizes = [16, 16], strides = [1, 1]} : vector<16x192xbf16> to vector<16x16xbf16>
    %296 = vector.shape_cast %295 : vector<16x16xbf16> to vector<2x8x16xbf16>
    %297 = vector.extract_strided_slice %250 {offsets = [0, 96], sizes = [16, 16], strides = [1, 1]} : vector<16x192xbf16> to vector<16x16xbf16>
    %298 = vector.shape_cast %297 : vector<16x16xbf16> to vector<2x8x16xbf16>
    %299 = vector.extract_strided_slice %250 {offsets = [0, 160], sizes = [16, 16], strides = [1, 1]} : vector<16x192xbf16> to vector<16x16xbf16>
    %300 = vector.shape_cast %299 : vector<16x16xbf16> to vector<2x8x16xbf16>
    "tpu.trace_start"() <{level = 10 : i32, message = "bqd,bkd->bqk"}> : () -> ()
    %cst_109 = arith.constant dense<0.000000e+00> : vector<2x8x8xf32>
    %301 = tpu.matmul %296, %298, %cst_109 {dimension_numbers = #tpu.dot_dimension_numbers<[2], [2], [1], [1], [0, 0, 0, 1, 1, 1], [0], [0]>} : vector<2x8x16xbf16>, vector<2x8x16xbf16>, vector<2x8x8xf32> -> vector<2x8x8xf32>
    "tpu.trace_stop"() : () -> ()
    %cst_110 = arith.constant 2.500000e-01 : f32
    %302 = vector.broadcast %cst_110 : f32 to vector<2x8x8xf32>
    %303 = arith.mulf %301, %302 : vector<2x8x8xf32>
    %cst_111 = arith.constant dense<0xFF800000> : vector<2x8xf32>
    %304 = vector.multi_reduction <maximumf>, %303, %cst_111 [2] : vector<2x8x8xf32> to vector<2x8xf32>
    %305 = vector.shape_cast %304 : vector<2x8xf32> to vector<2x8x1xf32>
    %306 = vector.broadcast %305 : vector<2x8x1xf32> to vector<2x8x8xf32>
    %307 = arith.subf %303, %306 : vector<2x8x8xf32>
    %308 = math.exp %307 : vector<2x8x8xf32>
    %cst_112 = arith.constant dense<0.000000e+00> : vector<2x8xf32>
    %309 = vector.multi_reduction <add>, %308, %cst_112 [2] : vector<2x8x8xf32> to vector<2x8xf32>
    %310 = vector.shape_cast %309 : vector<2x8xf32> to vector<2x8x1xf32>
    %311 = tpu.reciprocal %310 {approx = true} : vector<2x8x1xf32> -> vector<2x8x1xf32>
    %312 = vector.broadcast %311 : vector<2x8x1xf32> to vector<2x8x8xf32>
    %313 = arith.mulf %308, %312 : vector<2x8x8xf32>
    %314 = arith.truncf %313 : vector<2x8x8xf32> to vector<2x8x8xbf16>
    "tpu.trace_start"() <{level = 10 : i32, message = "bqk,bkd->bqd"}> : () -> ()
    %cst_113 = arith.constant dense<0.000000e+00> : vector<2x8x16xf32>
    %315 = tpu.matmul %314, %300, %cst_113 {dimension_numbers = #tpu.dot_dimension_numbers<[2], [1], [1], [2], [0, 0, 0, 1, 1, 2], [0], [0]>} : vector<2x8x8xbf16>, vector<2x8x16xbf16>, vector<2x8x16xf32> -> vector<2x8x16xf32>
    "tpu.trace_stop"() : () -> ()
    %316 = vector.shape_cast %315 : vector<2x8x16xf32> to vector<16x16xf32>
    %317 = vector.extract_strided_slice %250 {offsets = [0, 48], sizes = [16, 16], strides = [1, 1]} : vector<16x192xbf16> to vector<16x16xbf16>
    %318 = vector.shape_cast %317 : vector<16x16xbf16> to vector<2x8x16xbf16>
    %319 = vector.extract_strided_slice %250 {offsets = [0, 112], sizes = [16, 16], strides = [1, 1]} : vector<16x192xbf16> to vector<16x16xbf16>
    %320 = vector.shape_cast %319 : vector<16x16xbf16> to vector<2x8x16xbf16>
    %321 = vector.extract_strided_slice %250 {offsets = [0, 176], sizes = [16, 16], strides = [1, 1]} : vector<16x192xbf16> to vector<16x16xbf16>
    %322 = vector.shape_cast %321 : vector<16x16xbf16> to vector<2x8x16xbf16>
    "tpu.trace_start"() <{level = 10 : i32, message = "bqd,bkd->bqk"}> : () -> ()
    %cst_114 = arith.constant dense<0.000000e+00> : vector<2x8x8xf32>
    %323 = tpu.matmul %318, %320, %cst_114 {dimension_numbers = #tpu.dot_dimension_numbers<[2], [2], [1], [1], [0, 0, 0, 1, 1, 1], [0], [0]>} : vector<2x8x16xbf16>, vector<2x8x16xbf16>, vector<2x8x8xf32> -> vector<2x8x8xf32>
    "tpu.trace_stop"() : () -> ()
    %cst_115 = arith.constant 2.500000e-01 : f32
    %324 = vector.broadcast %cst_115 : f32 to vector<2x8x8xf32>
    %325 = arith.mulf %323, %324 : vector<2x8x8xf32>
    %cst_116 = arith.constant dense<0xFF800000> : vector<2x8xf32>
    %326 = vector.multi_reduction <maximumf>, %325, %cst_116 [2] : vector<2x8x8xf32> to vector<2x8xf32>
    %327 = vector.shape_cast %326 : vector<2x8xf32> to vector<2x8x1xf32>
    %328 = vector.broadcast %327 : vector<2x8x1xf32> to vector<2x8x8xf32>
    %329 = arith.subf %325, %328 : vector<2x8x8xf32>
    %330 = math.exp %329 : vector<2x8x8xf32>
    %cst_117 = arith.constant dense<0.000000e+00> : vector<2x8xf32>
    %331 = vector.multi_reduction <add>, %330, %cst_117 [2] : vector<2x8x8xf32> to vector<2x8xf32>
    %332 = vector.shape_cast %331 : vector<2x8xf32> to vector<2x8x1xf32>
    %333 = tpu.reciprocal %332 {approx = true} : vector<2x8x1xf32> -> vector<2x8x1xf32>
    %334 = vector.broadcast %333 : vector<2x8x1xf32> to vector<2x8x8xf32>
    %335 = arith.mulf %330, %334 : vector<2x8x8xf32>
    %336 = arith.truncf %335 : vector<2x8x8xf32> to vector<2x8x8xbf16>
    "tpu.trace_start"() <{level = 10 : i32, message = "bqk,bkd->bqd"}> : () -> ()
    %cst_118 = arith.constant dense<0.000000e+00> : vector<2x8x16xf32>
    %337 = tpu.matmul %336, %322, %cst_118 {dimension_numbers = #tpu.dot_dimension_numbers<[2], [1], [1], [2], [0, 0, 0, 1, 1, 2], [0], [0]>} : vector<2x8x8xbf16>, vector<2x8x16xbf16>, vector<2x8x16xf32> -> vector<2x8x16xf32>
    "tpu.trace_stop"() : () -> ()
    %338 = vector.shape_cast %337 : vector<2x8x16xf32> to vector<16x16xf32>
    %339 = tpu.concatenate %272, %294, %316, %338 in 1 : vector<16x16xf32>, vector<16x16xf32>, vector<16x16xf32>, vector<16x16xf32> -> vector<16x64xf32>
    %c1_119 = arith.constant 1 : index
    %c0_120 = arith.constant 0 : index
    %c0_121 = arith.constant 0 : index
    %340 = vector.load %arg9[%c1_119, %c0_120, %c0_121] : memref<2x64x64xbf16, #tpu.memory_space<vmem>>, vector<1x64x64xbf16>
    %341 = vector.shape_cast %340 : vector<1x64x64xbf16> to vector<64x64xbf16>
    %342 = arith.truncf %339 : vector<16x64xf32> to vector<16x64xbf16>
    %cst_122 = arith.constant dense<0.000000e+00> : vector<16x64xf32>
    %343 = tpu.matmul %342, %341, %cst_122 {dimension_numbers = #tpu.dot_dimension_numbers<[1], [0], [0], [1], [0, 0, 1, 1], [], []>} : vector<16x64xbf16>, vector<64x64xbf16>, vector<16x64xf32> -> vector<16x64xf32>
    %344 = arith.addf %213, %343 : vector<16x64xf32>
    %345 = vector.broadcast %217 : vector<1x64xf32> to vector<16x64xf32>
    %346 = arith.addf %344, %345 : vector<16x64xf32>
    %cst_123 = arith.constant dense<0.000000e+00> : vector<16xf32>
    %347 = vector.multi_reduction <add>, %346, %cst_123 [1] : vector<16x64xf32> to vector<16xf32>
    %348 = vector.shape_cast %347 : vector<16xf32> to vector<16x1xf32>
    %cst_124 = arith.constant 6.400000e+01 : f32
    %349 = vector.broadcast %cst_124 : f32 to vector<16x1xf32>
    %350 = arith.divf %348, %349 : vector<16x1xf32>
    %351 = vector.broadcast %350 : vector<16x1xf32> to vector<16x64xf32>
    %352 = arith.subf %346, %351 : vector<16x64xf32>
    %353 = arith.mulf %352, %352 : vector<16x64xf32>
    %cst_125 = arith.constant dense<0.000000e+00> : vector<16xf32>
    %354 = vector.multi_reduction <add>, %353, %cst_125 [1] : vector<16x64xf32> to vector<16xf32>
    %355 = vector.shape_cast %354 : vector<16xf32> to vector<16x1xf32>
    %cst_126 = arith.constant 6.400000e+01 : f32
    %356 = vector.broadcast %cst_126 : f32 to vector<16x1xf32>
    %357 = arith.divf %355, %356 : vector<16x1xf32>
    %358 = vector.broadcast %350 : vector<16x1xf32> to vector<16x64xf32>
    %359 = arith.subf %346, %358 : vector<16x64xf32>
    %cst_127 = arith.constant 9.99999974E-6 : f32
    %360 = vector.broadcast %cst_127 : f32 to vector<16x1xf32>
    %361 = arith.addf %357, %360 : vector<16x1xf32>
    %362 = math.rsqrt %361 : vector<16x1xf32>
    %363 = vector.broadcast %362 : vector<16x1xf32> to vector<16x64xf32>
    %364 = arith.mulf %359, %363 : vector<16x64xf32>
    %365 = vector.broadcast %218 : vector<1x64xf32> to vector<16x64xf32>
    %366 = arith.mulf %364, %365 : vector<16x64xf32>
    %367 = vector.broadcast %219 : vector<1x64xf32> to vector<16x64xf32>
    %368 = arith.addf %366, %367 : vector<16x64xf32>
    %c1_128 = arith.constant 1 : index
    %c0_129 = arith.constant 0 : index
    %c0_130 = arith.constant 0 : index
    %369 = vector.load %arg10[%c1_128, %c0_129, %c0_130] : memref<2x64x128xbf16, #tpu.memory_space<vmem>>, vector<1x64x128xbf16>
    %370 = vector.shape_cast %369 : vector<1x64x128xbf16> to vector<64x128xbf16>
    %371 = arith.truncf %368 : vector<16x64xf32> to vector<16x64xbf16>
    %cst_131 = arith.constant dense<0.000000e+00> : vector<16x128xf32>
    %372 = tpu.matmul %371, %370, %cst_131 {dimension_numbers = #tpu.dot_dimension_numbers<[1], [0], [0], [1], [0, 0, 1, 1], [], []>} : vector<16x64xbf16>, vector<64x128xbf16>, vector<16x128xf32> -> vector<16x128xf32>
    %373 = vector.broadcast %220 : vector<1x128xf32> to vector<16x128xf32>
    %374 = arith.addf %372, %373 : vector<16x128xf32>
    %cst_132 = arith.constant 0.000000e+00 : f32
    %375 = vector.broadcast %cst_132 : f32 to vector<16x128xf32>
    %376 = arith.maximumf %374, %375 : vector<16x128xf32>
    %c1_133 = arith.constant 1 : index
    %c0_134 = arith.constant 0 : index
    %c0_135 = arith.constant 0 : index
    %377 = vector.load %arg11[%c1_133, %c0_134, %c0_135] : memref<2x128x64xbf16, #tpu.memory_space<vmem>>, vector<1x128x64xbf16>
    %378 = vector.shape_cast %377 : vector<1x128x64xbf16> to vector<128x64xbf16>
    %379 = arith.truncf %376 : vector<16x128xf32> to vector<16x128xbf16>
    %cst_136 = arith.constant dense<0.000000e+00> : vector<16x64xf32>
    %380 = tpu.matmul %379, %378, %cst_136 {dimension_numbers = #tpu.dot_dimension_numbers<[1], [0], [0], [1], [0, 0, 1, 1], [], []>} : vector<16x128xbf16>, vector<128x64xbf16>, vector<16x64xf32> -> vector<16x64xf32>
    %381 = arith.addf %346, %380 : vector<16x64xf32>
    %382 = vector.broadcast %221 : vector<1x64xf32> to vector<16x64xf32>
    %383 = arith.addf %381, %382 : vector<16x64xf32>
    %c0_137 = arith.constant 0 : index
    %c0_138 = arith.constant 0 : index
    %384 = vector.load %arg12[%c0_137, %c0_138] : memref<64x128xbf16, #tpu.memory_space<vmem>>, vector<64x128xbf16>
    %385 = arith.truncf %383 : vector<16x64xf32> to vector<16x64xbf16>
    %cst_139 = arith.constant dense<0.000000e+00> : vector<16x128xf32>
    %386 = tpu.matmul %385, %384, %cst_139 {dimension_numbers = #tpu.dot_dimension_numbers<[1], [0], [0], [1], [0, 0, 1, 1], [], []>} : vector<16x64xbf16>, vector<64x128xbf16>, vector<16x128xf32> -> vector<16x128xf32>
    %c28 = arith.constant 28 : index
    %c0_140 = arith.constant 0 : index
    %387 = vector.load %arg13[%c28, %c0_140] : memref<32x192xf32, #tpu.memory_space<vmem>>, vector<1x128xf32>
    %388 = vector.broadcast %387 : vector<1x128xf32> to vector<16x128xf32>
    %389 = arith.addf %386, %388 : vector<16x128xf32>
    %c0_141 = arith.constant 0 : index
    %c0_142 = arith.constant 0 : index
    %390 = vector.load %arg14[%c0_141, %c0_142] : memref<16x128xf32, #tpu.memory_space<vmem>>, vector<16x128xf32>
    tpu.vector_store %arg14[%c0_141, %c0_142], %389 {strides = array<i32>} : memref<16x128xf32, #tpu.memory_space<vmem>>, vector<16x128xf32>,
    return
  }
}

</mosaic_0001>

<llo_original>
// kernel: helix_forward.1
$region0: #{helix_forward.1}
  #allocation0 [shape = 'u32[]', space=smem, size = 0x4, offset = 0x4, fixed_abs, tag = 'smem constant byte address 0x4 - core index']
  #allocation1 [shape = 'u32[144,128]{1,0:T(1,128)}', space=vmem, size = 0x12000, scoped, tag = 'internal scratch']
  %s0 = inlined_call_operand.vmem [shape: f32[2,768], index: 0, kind: input, shape index: {}]
  %s1 = inlined_call_operand.vmem [shape: f32[2,40], index: 1, kind: input, shape index: {}]
  %s2 = inlined_call_operand.vmem [shape: f32[2,776], index: 2, kind: input, shape index: {}]
  %s3 = inlined_call_operand.vmem [shape: bf16[768,128], index: 3, kind: input, shape index: {}]
  %s4 = inlined_call_operand.vmem [shape: bf16[40,128], index: 4, kind: input, shape index: {}]
  %s5 = inlined_call_operand.vmem [shape: bf16[256,64], index: 5, kind: input, shape index: {}]
  %s6 = inlined_call_operand.vmem [shape: bf16[776,64], index: 6, kind: input, shape index: {}]
  %s7 = inlined_call_operand.vmem [shape: bf16[64,64], index: 7, kind: input, shape index: {}]
  %s8 = inlined_call_operand.vmem [shape: bf16[2,64,192], index: 8, kind: input, shape index: {}]
  %s9 = inlined_call_operand.vmem [shape: bf16[2,64,64], index: 9, kind: input, shape index: {}]
  %s10 = inlined_call_operand.vmem [shape: bf16[2,64,128], index: 10, kind: input, shape index: {}]
  %s11 = inlined_call_operand.vmem [shape: bf16[2,128,64], index: 11, kind: input, shape index: {}]
  %s12 = inlined_call_operand.vmem [shape: bf16[64,128], index: 12, kind: input, shape index: {}]
  %s13 = inlined_call_operand.vmem [shape: f32[32,192], index: 13, kind: input, shape index: {}]
  %s14 = inlined_call_operand.vmem [shape: f32[16,128], index: 14, kind: output, shape index: {}]
  %s15 = sld [smem:[#allocation0]]
  $region66: #{helix_forward.1} parent=0
    _
  %s17 = ssub.s32 1, %s15
  %s18 = scalar_select 0, %s17, %s15
  // Predicated region
  $region2: #{helix_forward.1} parent=0 // pred_check
    _
  $region3: #{helix_forward.1} parent=0 // pred_check_branch
    %20 = sbr.rel (0) target = $region5
  $region4: #{helix_forward.1} parent=0 // pred_region
    _
  $region5: #{helix_forward.1} parent=0 // pred_fallthru
    _
  // Predicated region
  $region6: #{helix_forward.1} parent=0 // pred_check
    _
  $region7: #{helix_forward.1} parent=0 // pred_check_branch
    %22 = sbr.rel (0) target = $region9
  $region8: #{helix_forward.1} parent=0 // pred_region
    _
  $region9: #{helix_forward.1} parent=0 // pred_fallthru
    _
  // Predicated region
  $region10: #{helix_forward.1} parent=0 // pred_check
    _
  $region11: #{helix_forward.1} parent=0 // pred_check_branch
    %24 = sbr.rel (0) target = $region13
  $region12: #{helix_forward.1} parent=0 // pred_region
    _
  $region13: #{helix_forward.1} parent=0 // pred_fallthru
    _
  // Predicated region
  $region14: #{helix_forward.1} parent=0 // pred_check
    _
  $region15: #{helix_forward.1} parent=0 // pred_check_branch
    %26 = sbr.rel (0) target = $region17
  $region16: #{helix_forward.1} parent=0 // pred_region
    _
  $region17: #{helix_forward.1} parent=0 // pred_fallthru
    _
  // Predicated region
  $region18: #{helix_forward.1} parent=0 // pred_check
    _
  $region19: #{helix_forward.1} parent=0 // pred_check_branch
    %28 = sbr.rel (0) target = $region21
  $region20: #{helix_forward.1} parent=0 // pred_region
    _
  $region21: #{helix_forward.1} parent=0 // pred_fallthru
    _
  // Predicated region
  $region22: #{helix_forward.1} parent=0 // pred_check
    _
  $region23: #{helix_forward.1} parent=0 // pred_check_branch
    %30 = sbr.rel (0) target = $region25
  $region24: #{helix_forward.1} parent=0 // pred_region
    _
  $region25: #{helix_forward.1} parent=0 // pred_fallthru
    _
  // Predicated region
  $region26: #{helix_forward.1} parent=0 // pred_check
    _
  $region27: #{helix_forward.1} parent=0 // pred_check_branch
    %32 = sbr.rel (0) target = $region29
  $region28: #{helix_forward.1} parent=0 // pred_region
    _
  $region29: #{helix_forward.1} parent=0 // pred_fallthru
    _
  // Predicated region
  $region30: #{helix_forward.1} parent=0 // pred_check
    _
  $region31: #{helix_forward.1} parent=0 // pred_check_branch
    %34 = sbr.rel (0) target = $region33
  $region32: #{helix_forward.1} parent=0 // pred_region
    _
  $region33: #{helix_forward.1} parent=0 // pred_fallthru
    _
  // Predicated region
  $region34: #{helix_forward.1} parent=0 // pred_check
    _
  $region35: #{helix_forward.1} parent=0 // pred_check_branch
    %36 = sbr.rel (0) target = $region37
  $region36: #{helix_forward.1} parent=0 // pred_region
    _
  $region37: #{helix_forward.1} parent=0 // pred_fallthru
    _
  // Predicated region
  $region38: #{helix_forward.1} parent=0 // pred_check
    _
  $region39: #{helix_forward.1} parent=0 // pred_check_branch
    %38 = sbr.rel (0) target = $region41
  $region40: #{helix_forward.1} parent=0 // pred_region
    _
  $region41: #{helix_forward.1} parent=0 // pred_fallthru
    _
  // Predicated region
  $region42: #{helix_forward.1} parent=0 // pred_check
    _
  $region43: #{helix_forward.1} parent=0 // pred_check_branch
    %40 = sbr.rel (0) target = $region45
  $region44: #{helix_forward.1} parent=0 // pred_region
    _
  $region45: #{helix_forward.1} parent=0 // pred_fallthru
    _
  // Predicated region
  $region46: #{helix_forward.1} parent=0 // pred_check
    _
  $region47: #{helix_forward.1} parent=0 // pred_check_branch
    %42 = sbr.rel (0) target = $region49
  $region48: #{helix_forward.1} parent=0 // pred_region
    _
  $region49: #{helix_forward.1} parent=0 // pred_fallthru
    _
  // Predicated region
  $region50: #{helix_forward.1} parent=0 // pred_check
    _
  $region51: #{helix_forward.1} parent=0 // pred_check_branch
    %44 = sbr.rel (0) target = $region53
  $region52: #{helix_forward.1} parent=0 // pred_region
    _
  $region53: #{helix_forward.1} parent=0 // pred_fallthru
    _
  // Predicated region
  $region54: #{helix_forward.1} parent=0 // pred_check
    _
  $region55: #{helix_forward.1} parent=0 // pred_check_branch
    %46 = sbr.rel (0) target = $region57
  $region56: #{helix_forward.1} parent=0 // pred_region
    _
  $region57: #{helix_forward.1} parent=0 // pred_fallthru
    _
  %v48 = vld [vmem:[%s0] sm:$0xff]
  %v49 = vld [vmem:[%s0 + $0x8] sm:$0xf]
  %v50 = vld [vmem:[%s3] sm:$0xf]
  %v51 = vld [vmem:[%s3 + $0x4] sm:$0xf]
  %v52 = vld [vmem:[%s3 + $0x8] sm:$0xf]
  %v53 = vld [vmem:[%s3 + $0xc] sm:$0xf]
  %v54 = vld [vmem:[%s3 + $0x10] sm:$0xf]
  %v55 = vld [vmem:[%s3 + $0x14] sm:$0xf]
  %v56 = vld [vmem:[%s3 + $0x18] sm:$0xf]
  %v57 = vld [vmem:[%s3 + $0x1c] sm:$0xf]
  %v58 = vld [vmem:[%s3 + $0x20] sm:$0xf]
  %v59 = vld [vmem:[%s3 + $0x24] sm:$0xf]
  %v60 = vld [vmem:[%s3 + $0x28] sm:$0xf]
  %v61 = vld [vmem:[%s3 + $0x2c] sm:$0xf]
  %v62 = vld [vmem:[%s3 + $0x30] sm:$0xf]
  %v63 = vld [vmem:[%s3 + $0x34] sm:$0xf]
  %v64 = vld [vmem:[%s3 + $0x38] sm:$0xf]
  %v65 = vld [vmem:[%s3 + $0x3c] sm:$0xf]
  %v66 = vld [vmem:[%s3 + $0x40] sm:$0xf]
  %v67 = vld [vmem:[%s3 + $0x44] sm:$0xf]
  %v68 = vld [vmem:[%s3 + $0x48] sm:$0xf]
  %v69 = vld [vmem:[%s3 + $0x4c] sm:$0xf]
  %v70 = vld [vmem:[%s3 + $0x50] sm:$0xf]
  %v71 = vld [vmem:[%s3 + $0x54] sm:$0xf]
  %v72 = vld [vmem:[%s3 + $0x58] sm:$0xf]
  %v73 = vld [vmem:[%s3 + $0x5c] sm:$0xf]
  %v74 = vld [vmem:[%s3 + $0x60] sm:$0xf]
  %v75 = vld [vmem:[%s3 + $0x64] sm:$0xf]
  %v76 = vld [vmem:[%s3 + $0x68] sm:$0xf]
  %v77 = vld [vmem:[%s3 + $0x6c] sm:$0xf]
  %v78 = vld [vmem:[%s3 + $0x70] sm:$0xf]
  %v79 = vld [vmem:[%s3 + $0x74] sm:$0xf]
  %v80 = vld [vmem:[%s3 + $0x78] sm:$0xf]
  %v81 = vld [vmem:[%s3 + $0x7c] sm:$0xf]
  %v82 = vld [vmem:[%s3 + $0x80] sm:$0xf]
  %v83 = vld [vmem:[%s3 + $0x84] sm:$0xf]
  %v84 = vld [vmem:[%s3 + $0x88] sm:$0xf]
  %v85 = vld [vmem:[%s3 + $0x8c] sm:$0xf]
  %v86 = vld [vmem:[%s3 + $0x90] sm:$0xf]
  %v87 = vld [vmem:[%s3 + $0x94] sm:$0xf]
  %v88 = vld [vmem:[%s3 + $0x98] sm:$0xf]
  %v89 = vld [vmem:[%s3 + $0x9c] sm:$0xf]
  %v90 = vld [vmem:[%s3 + $0xa0] sm:$0xf]
  %v91 = vld [vmem:[%s3 + $0xa4] sm:$0xf]
  %v92 = vld [vmem:[%s3 + $0xa8] sm:$0xf]
  %v93 = vld [vmem:[%s3 + $0xac] sm:$0xf]
  %v94 = vld [vmem:[%s3 + $0xb0] sm:$0xf]
  %v95 = vld [vmem:[%s3 + $0xb4] sm:$0xf]
  %v96 = vld [vmem:[%s3 + $0xb8] sm:$0xf]
  %v97 = vld [vmem:[%s3 + $0xbc] sm:$0xf]
  %v98 = vld [vmem:[%s3 + $0xc0] sm:$0xf]
  %v99 = vld [vmem:[%s3 + $0xc4] sm:$0xf]
  %v100 = vld [vmem:[%s3 + $0xc8] sm:$0xf]
  %v101 = vld [vmem:[%s3 + $0xcc] sm:$0xf]
  %v102 = vld [vmem:[%s3 + $0xd0] sm:$0xf]
  %v103 = vld [vmem:[%s3 + $0xd4] sm:$0xf]
  %v104 = vld [vmem:[%s3 + $0xd8] sm:$0xf]
  %v105 = vld [vmem:[%s3 + $0xdc] sm:$0xf]
  %v106 = vld [vmem:[%s3 + $0xe0] sm:$0xf]
  %v107 = vld [vmem:[%s3 + $0xe4] sm:$0xf]
  %v108 = vld [vmem:[%s3 + $0xe8] sm:$0xf]
  %v109 = vld [vmem:[%s3 + $0xec] sm:$0xf]
  %v110 = vld [vmem:[%s3 + $0xf0] sm:$0xf]
  %v111 = vld [vmem:[%s3 + $0xf4] sm:$0xf]
  %v112 = vld [vmem:[%s3 + $0xf8] sm:$0xf]
  %v113 = vld [vmem:[%s3 + $0xfc] sm:$0xf]
  %v114 = vld [vmem:[%s3 + $0x100] sm:$0xf]
  %v115 = vld [vmem:[%s3 + $0x104] sm:$0xf]
  %v116 = vld [vmem:[%s3 + $0x108] sm:$0xf]
  %v117 = vld [vmem:[%s3 + $0x10c] sm:$0xf]
  %v118 = vld [vmem:[%s3 + $0x110] sm:$0xf]
  %v119 = vld [vmem:[%s3 + $0x114] sm:$0xf]
  %v120 = vld [vmem:[%s3 + $0x118] sm:$0xf]
  %v121 = vld [vmem:[%s3 + $0x11c] sm:$0xf]
  %v122 = vld [vmem:[%s3 + $0x120] sm:$0xf]
  %v123 = vld [vmem:[%s3 + $0x124] sm:$0xf]
  %v124 = vld [vmem:[%s3 + $0x128] sm:$0xf]
  %v125 = vld [vmem:[%s3 + $0x12c] sm:$0xf]
  %v126 = vld [vmem:[%s3 + $0x130] sm:$0xf]
  %v127 = vld [vmem:[%s3 + $0x134] sm:$0xf]
  %v128 = vld [vmem:[%s3 + $0x138] sm:$0xf]
  %v129 = vld [vmem:[%s3 + $0x13c] sm:$0xf]
  %v130 = vld [vmem:[%s3 + $0x140] sm:$0xf]
  %v131 = vld [vmem:[%s3 + $0x144] sm:$0xf]
  %v132 = vld [vmem:[%s3 + $0x148] sm:$0xf]
  %v133 = vld [vmem:[%s3 + $0x14c] sm:$0xf]
  %v134 = vld [vmem:[%s3 + $0x150] sm:$0xf]
  %v135 = vld [vmem:[%s3 + $0x154] sm:$0xf]
  %v136 = vld [vmem:[%s3 + $0x158] sm:$0xf]
  %v137 = vld [vmem:[%s3 + $0x15c] sm:$0xf]
  %v138 = vld [vmem:[%s3 + $0x160] sm:$0xf]
  %v139 = vld [vmem:[%s3 + $0x164] sm:$0xf]
  %v140 = vld [vmem:[%s3 + $0x168] sm:$0xf]
  %v141 = vld [vmem:[%s3 + $0x16c] sm:$0xf]
  %v142 = vld [vmem:[%s3 + $0x170] sm:$0xf]
  %v143 = vld [vmem:[%s3 + $0x174] sm:$0xf]
  %v144 = vld [vmem:[%s3 + $0x178] sm:$0xf]
  %v145 = vld [vmem:[%s3 + $0x17c] sm:$0xf]
  %v148 = vcombine.high %v48, %v48
  %v150 = vunpack.c.l.s4 1983009808
  %v151 = vunpack.c.0.s8 %v150
  %v152 = vlaneseq
  %v153 = vshrl.u32 %v152, 7
  %v154 = vsub.s32 %v151, %v153
  %v155 = vrot.slane %v48, %v154
  %v157 = vunpack.c.l.s4 1983009808
  %v158 = vunpack.c.0.s8 %v157
  %v159 = vlaneseq
  %v160 = vshrl.u32 %v159, 7
  %v161 = vsub.s32 %v158, %v160
  %v162 = vrot.slane %v148, %v161
  %v163 = vcombine.high %v155, %v155
  %v164 = vcombine.high %v162, %v162
  %v166 = vunpack.c.l.s4 1983009808
  %v167 = vunpack.c.0.s8 %v166
  %v168 = vlaneseq
  %v169 = vshrl.u32 %v168, 7
  %v170 = vsub.s32 %v167, %v169
  %v171 = vrot.slane %v49, %v170
  %v172 = vcombine.high %v171, %v171
  %v179 = vpack.c.bf16 %v155, %v155
  %v180 = vpack.c.bf16 %v163, %v163
  %v181 = vpack.c.bf16 %v162, %v162
  %v182 = vpack.c.bf16 %v164, %v164
  %v183 = vpack.c.bf16 %v171, %v171
  %v184 = vpack.c.bf16 %v172, %v172
  %v185 = vld [vmem:[%s13] ss:$0 sm:$0xff]
  %v282 = vunpack.c.l.b16 %v50
  %v283 = vunpack.c.l.b16 %v51
  %v284 = vunpack.c.l.b16 %v52
  %v285 = vunpack.c.l.b16 %v53
  %v286 = vunpack.c.l.b16 %v54
  %v287 = vunpack.c.l.b16 %v55
  %v288 = vunpack.c.l.b16 %v56
  %v289 = vunpack.c.l.b16 %v57
  %v290 = vunpack.c.l.b16 %v58
  %v291 = vunpack.c.l.b16 %v59
  %v292 = vunpack.c.l.b16 %v60
  %v293 = vunpack.c.l.b16 %v61
  %v294 = vunpack.c.l.b16 %v62
  %v295 = vunpack.c.l.b16 %v63
  %v296 = vunpack.c.l.b16 %v64
  %v297 = vunpack.c.l.b16 %v65
  %v298 = vunpack.c.l.b16 %v66
  %v299 = vunpack.c.l.b16 %v67
  %v300 = vunpack.c.l.b16 %v68
  %v301 = vunpack.c.l.b16 %v69
  %v302 = vunpack.c.l.b16 %v70
  %v303 = vunpack.c.l.b16 %v71
  %v304 = vunpack.c.l.b16 %v72
  %v305 = vunpack.c.l.b16 %v73
  %v306 = vunpack.c.l.b16 %v74
  %v307 = vunpack.c.l.b16 %v75
  %v308 = vunpack.c.l.b16 %v76
  %v309 = vunpack.c.l.b16 %v77
  %v310 = vunpack.c.l.b16 %v78
  %v311 = vunpack.c.l.b16 %v79
  %v312 = vunpack.c.l.b16 %v80
  %v313 = vunpack.c.l.b16 %v81
  %v314 = vunpack.c.l.b16 %v82
  %v315 = vunpack.c.l.b16 %v83
  %v316 = vunpack.c.l.b16 %v84
  %v317 = vunpack.c.l.b16 %v85
  %v318 = vunpack.c.l.b16 %v86
  %v319 = vunpack.c.l.b16 %v87
  %v320 = vunpack.c.l.b16 %v88
  %v321 = vunpack.c.l.b16 %v89
  %v322 = vunpack.c.l.b16 %v90
  %v323 = vunpack.c.l.b16 %v91
  %v324 = vunpack.c.l.b16 %v92
  %v325 = vunpack.c.l.b16 %v93
  %v326 = vunpack.c.l.b16 %v94
  %v327 = vunpack.c.l.b16 %v95
  %v328 = vunpack.c.l.b16 %v96
  %v329 = vunpack.c.l.b16 %v97
  %v330 = vunpack.c.l.b16 %v98
  %v331 = vunpack.c.l.b16 %v99
  %v332 = vunpack.c.l.b16 %v100
  %v333 = vunpack.c.l.b16 %v101
  %v334 = vunpack.c.l.b16 %v102
  %v335 = vunpack.c.l.b16 %v103
  %v336 = vunpack.c.l.b16 %v104
  %v337 = vunpack.c.l.b16 %v105
  %v338 = vunpack.c.l.b16 %v106
  %v339 = vunpack.c.l.b16 %v107
  %v340 = vunpack.c.l.b16 %v108
  %v341 = vunpack.c.l.b16 %v109
  %v342 = vunpack.c.l.b16 %v110
  %v343 = vunpack.c.l.b16 %v111
  %v344 = vunpack.c.l.b16 %v112
  %v345 = vunpack.c.l.b16 %v113
  %v346 = vunpack.c.l.b16 %v114
  %v347 = vunpack.c.l.b16 %v115
  %v348 = vunpack.c.l.b16 %v116
  %v349 = vunpack.c.l.b16 %v117
  %v350 = vunpack.c.l.b16 %v118
  %v351 = vunpack.c.l.b16 %v119
  %v352 = vunpack.c.l.b16 %v120
  %v353 = vunpack.c.l.b16 %v121
  %v354 = vunpack.c.l.b16 %v122
  %v355 = vunpack.c.l.b16 %v123
  %v356 = vunpack.c.l.b16 %v124
  %v357 = vunpack.c.l.b16 %v125
  %v358 = vunpack.c.l.b16 %v126
  %v359 = vunpack.c.l.b16 %v127
  %v360 = vunpack.c.l.b16 %v128
  %v361 = vunpack.c.l.b16 %v129
  %v362 = vunpack.c.l.b16 %v130
  %v363 = vunpack.c.l.b16 %v131
  %v364 = vunpack.c.l.b16 %v132
  %v365 = vunpack.c.l.b16 %v133
  %v366 = vunpack.c.l.b16 %v134
  %v367 = vunpack.c.l.b16 %v135
  %v368 = vunpack.c.l.b16 %v136
  %v369 = vunpack.c.l.b16 %v137
  %v370 = vunpack.c.l.b16 %v138
  %v371 = vunpack.c.l.b16 %v139
  %v372 = vunpack.c.l.b16 %v140
  %v373 = vunpack.c.l.b16 %v141
  %v374 = vunpack.c.l.b16 %v142
  %v375 = vunpack.c.l.b16 %v143
  %v376 = vunpack.c.l.b16 %v144
  %v377 = vunpack.c.l.b16 %v145
  %v378 = vpack.c.b16 %v283, %v282
  %v379 = vpack.c.b16 %v285, %v284
  %v380 = vpack.c.b16 %v287, %v286
  %v381 = vpack.c.b16 %v289, %v288
  %v382 = vpack.c.b16 %v291, %v290
  %v383 = vpack.c.b16 %v293, %v292
  %v384 = vpack.c.b16 %v295, %v294
  %v385 = vpack.c.b16 %v297, %v296
  %v386 = vpack.c.b16 %v299, %v298
  %v387 = vpack.c.b16 %v301, %v300
  %v388 = vpack.c.b16 %v303, %v302
  %v389 = vpack.c.b16 %v305, %v304
  %v390 = vpack.c.b16 %v307, %v306
  %v391 = vpack.c.b16 %v309, %v308
  %v392 = vpack.c.b16 %v311, %v310
  %v393 = vpack.c.b16 %v313, %v312
  %v394 = vpack.c.b16 %v315, %v314
  %v395 = vpack.c.b16 %v317, %v316
  %v396 = vpack.c.b16 %v319, %v318
  %v397 = vpack.c.b16 %v321, %v320
  %v398 = vpack.c.b16 %v323, %v322
  %v399 = vpack.c.b16 %v325, %v324
  %v400 = vpack.c.b16 %v327, %v326
  %v401 = vpack.c.b16 %v329, %v328
  %v402 = vpack.c.b16 %v331, %v330
  %v403 = vpack.c.b16 %v333, %v332
  %v404 = vpack.c.b16 %v335, %v334
  %v405 = vpack.c.b16 %v337, %v336
  %v406 = vpack.c.b16 %v339, %v338
  %v407 = vpack.c.b16 %v341, %v340
  %v408 = vpack.c.b16 %v343, %v342
  %v409 = vpack.c.b16 %v345, %v344
  %v410 = vpack.c.b16 %v347, %v346
  %v411 = vpack.c.b16 %v349, %v348
  %v412 = vpack.c.b16 %v351, %v350
  %v413 = vpack.c.b16 %v353, %v352
  %v414 = vpack.c.b16 %v355, %v354
  %v415 = vpack.c.b16 %v357, %v356
  %v416 = vpack.c.b16 %v359, %v358
  %v417 = vpack.c.b16 %v361, %v360
  %v418 = vpack.c.b16 %v363, %v362
  %v419 = vpack.c.b16 %v365, %v364
  %v420 = vpack.c.b16 %v367, %v366
  %v421 = vpack.c.b16 %v369, %v368
  %v422 = vpack.c.b16 %v371, %v370
  %v423 = vpack.c.b16 %v373, %v372
  %v424 = vpack.c.b16 %v375, %v374
  %v425 = vpack.c.b16 %v377, %v376
  %474 = vmatprep.subr.bf16.mxu0 0
  %475 = vmatpush1.bf16.msra.mxu0 %v385
  %476 = vmatprep.subr.bf16.mxu0 0
  %477 = vmatpush1.bf16.msra.mxu0 %v384
  %478 = vmatprep.subr.bf16.mxu0 0
  %479 = vmatpush1.bf16.msra.mxu0 %v383
  %480 = vmatprep.subr.bf16.mxu0 0
  %481 = vmatpush1.bf16.msra.mxu0 %v382
  %482 = vmatprep.subr.bf16.mxu0 0
  %483 = vmatpush1.bf16.msra.mxu0 %v381
  %484 = vmatprep.subr.bf16.mxu0 0
  %485 = vmatpush1.bf16.msra.mxu0 %v380
  %486 = vmatprep.subr.bf16.mxu0 0
  %487 = vmatpush1.bf16.msra.mxu0 %v379
  %488 = vmatprep.subr.bf16.mxu0 0
  %489 = vmatpush1.bf16.msra.mxu0 %v378
  %490 = vmatprep.subr.bf16.mxu0 0
  %491 = vmatpush2.bf16.msra.mxu0 %v393
  %492 = vmatprep.subr.bf16.mxu0 0
  %493 = vmatpush2.bf16.msra.mxu0 %v392
  %494 = vmatprep.subr.bf16.mxu0 0
  %495 = vmatpush2.bf16.msra.mxu0 %v391
  %496 = vmatprep.subr.bf16.mxu0 0
  %497 = vmatpush2.bf16.msra.mxu0 %v390
  %498 = vmatprep.subr.bf16.mxu0 0
  %499 = vmatpush2.bf16.msra.mxu0 %v389
  %500 = vmatprep.subr.bf16.mxu0 0
  %501 = vmatpush2.bf16.msra.mxu0 %v388
  %502 = vmatprep.subr.bf16.mxu0 0
  %503 = vmatpush2.bf16.msra.mxu0 %v387
  %504 = vmatprep.subr.bf16.mxu0 0
  %505 = vmatpush2.bf16.msra.mxu0 %v386
  %506 = vmatprep.mubr.bf16.mxu0 %v180
  %507 = vmatmul.mubr.bf16.gmra.mxu0 %v179
  %v508 = vpop.f32.mrf.mxu0
  %v509 = vadd.f32 %v185, %v508
  %v510 = vpop.f32.mrf.mxu0
  %v511 = vpop.f32.mrf.mxu0
  %v512 = vpop.f32.mrf.mxu0
  %513 = vdwg.mxu0
  %514 = vmatprep.subr.bf16.mxu0 0
  %515 = vmatpush1.bf16.msra.mxu0 %v401
  %516 = vmatprep.subr.bf16.mxu0 0
  %517 = vmatpush1.bf16.msra.mxu0 %v400
  %518 = vmatprep.subr.bf16.mxu0 0
  %519 = vmatpush1.bf16.msra.mxu0 %v399
  %520 = vmatprep.subr.bf16.mxu0 0
  %521 = vmatpush1.bf16.msra.mxu0 %v398
  %522 = vmatprep.subr.bf16.mxu0 0
  %523 = vmatpush1.bf16.msra.mxu0 %v397
  %524 = vmatprep.subr.bf16.mxu0 0
  %525 = vmatpush1.bf16.msra.mxu0 %v396
  %526 = vmatprep.subr.bf16.mxu0 0
  %527 = vmatpush1.bf16.msra.mxu0 %v395
  %528 = vmatprep.subr.bf16.mxu0 0
  %529 = vmatpush1.bf16.msra.mxu0 %v394
  %530 = vmatprep.subr.bf16.mxu0 0
  %531 = vmatpush2.bf16.msra.mxu0 %v409
  %532 = vmatprep.subr.bf16.mxu0 0
  %533 = vmatpush2.bf16.msra.mxu0 %v408
  %534 = vmatprep.subr.bf16.mxu0 0
  %535 = vmatpush2.bf16.msra.mxu0 %v407
  %536 = vmatprep.subr.bf16.mxu0 0
  %537 = vmatpush2.bf16.msra.mxu0 %v406
  %538 = vmatprep.subr.bf16.mxu0 0
  %539 = vmatpush2.bf16.msra.mxu0 %v405
  %540 = vmatprep.subr.bf16.mxu0 0
  %541 = vmatpush2.bf16.msra.mxu0 %v404
  %542 = vmatprep.subr.bf16.mxu0 0
  %543 = vmatpush2.bf16.msra.mxu0 %v403
  %544 = vmatprep.subr.bf16.mxu0 0
  %545 = vmatpush2.bf16.msra.mxu0 %v402
  %546 = vmatprep.mubr.bf16.mxu0 %v182
  %547 = vmatmul.mubr.bf16.gmra.mxu0 %v181
  %v548 = vpop.f32.mrf.mxu0
  %v549 = vadd.f32 %v509, %v548
  %v550 = vpop.f32.mrf.mxu0
  %v551 = vpop.f32.mrf.mxu0
  %v552 = vpop.f32.mrf.mxu0
  %553 = vdwg.mxu0
  %554 = vmatprep.subr.bf16.mxu0 0
  %555 = vmatpush1.bf16.msra.mxu0 %v417
  %556 = vmatprep.subr.bf16.mxu0 0
  %557 = vmatpush1.bf16.msra.mxu0 %v416
  %558 = vmatprep.subr.bf16.mxu0 0
  %559 = vmatpush1.bf16.msra.mxu0 %v415
  %560 = vmatprep.subr.bf16.mxu0 0
  %561 = vmatpush1.bf16.msra.mxu0 %v414
  %562 = vmatprep.subr.bf16.mxu0 0
  %563 = vmatpush1.bf16.msra.mxu0 %v413
  %564 = vmatprep.subr.bf16.mxu0 0
  %565 = vmatpush1.bf16.msra.mxu0 %v412
  %566 = vmatprep.subr.bf16.mxu0 0
  %567 = vmatpush1.bf16.msra.mxu0 %v411
  %568 = vmatprep.subr.bf16.mxu0 0
  %569 = vmatpush1.bf16.msra.mxu0 %v410
  %570 = vmatprep.subr.bf16.mxu0 0
  %571 = vmatpush2.bf16.msra.mxu0 %v425
  %572 = vmatprep.subr.bf16.mxu0 0
  %573 = vmatpush2.bf16.msra.mxu0 %v424
  %574 = vmatprep.subr.bf16.mxu0 0
  %575 = vmatpush2.bf16.msra.mxu0 %v423
  %576 = vmatprep.subr.bf16.mxu0 0
  %577 = vmatpush2.bf16.msra.mxu0 %v422
  %578 = vmatprep.subr.bf16.mxu0 0
  %579 = vmatpush2.bf16.msra.mxu0 %v421
  %580 = vmatprep.subr.bf16.mxu0 0
  %581 = vmatpush2.bf16.msra.mxu0 %v420
  %582 = vmatprep.subr.bf16.mxu0 0
  %583 = vmatpush2.bf16.msra.mxu0 %v419
  %584 = vmatprep.subr.bf16.mxu0 0
  %585 = vmatpush2.bf16.msra.mxu0 %v418
  %586 = vmatprep.mubr.bf16.mxu0 %v184
  %587 = vmatmul.mubr.bf16.gmra.mxu0 %v183
  %v588 = vpop.f32.mrf.mxu0
  %v589 = vadd.f32 %v549, %v588
  %v590 = vpop.f32.mrf.mxu0
  %v591 = vpop.f32.mrf.mxu0
  %v592 = vpop.f32.mrf.mxu0
  %593 = vdwg.mxu0
  %v594 = vmax.f32 %v589, 0.0
  %v595 = vld [vmem:[%s1] sm:$0x3]
  %v596 = vld [vmem:[%s4] sm:$0xf]
  %v597 = vld [vmem:[%s4 + $0x4] sm:$0xf]
  %v598 = vld [vmem:[%s4 + $0x8] sm:$0xf]
  %v599 = vld [vmem:[%s4 + $0xc] sm:$0xf]
  %v600 = vld [vmem:[%s4 + $0x10] sm:$0xf]
  %v601 = vpack.c.bf16 %v595, %v595
  %v602 = vld [vmem:[%s13 + $0x1] ss:$0 sm:$0xff]
  %v608 = vunpack.c.l.b16 %v596
  %v609 = vunpack.c.l.b16 %v597
  %v610 = vunpack.c.l.b16 %v598
  %v611 = vunpack.c.l.b16 %v599
  %v612 = vunpack.c.l.b16 %v600
  %v613 = vpack.c.b16 %v609, %v608
  %v614 = vpack.c.b16 %v611, %v610
  %v615 = vpack.c.b16 %v612, %v612
  %vm618 = vcmask 326656
  %v620 = vsel %vm618, %v601, 0
  %vm622 = vcmask 1043456
  %v624 = vsel %vm622, %v615, 0
  %626 = vmatprep.subr.bf16.mxu0 0
  %627 = vmatpush1.bf16.msra.mxu0 0
  %628 = vmatprep.subr.bf16.mxu0 0
  %629 = vmatpush1.bf16.msra.mxu0 0
  %630 = vmatprep.subr.bf16.mxu0 0
  %631 = vmatpush1.bf16.msra.mxu0 0
  %632 = vmatprep.subr.bf16.mxu0 0
  %633 = vmatpush1.bf16.msra.mxu0 0
  %634 = vmatprep.subr.bf16.mxu0 0
  %635 = vmatpush1.bf16.msra.mxu0 0
  %636 = vmatprep.subr.bf16.mxu0 0
  %637 = vmatpush1.bf16.msra.mxu0 %v624
  %638 = vmatprep.subr.bf16.mxu0 0
  %639 = vmatpush1.bf16.msra.mxu0 %v614
  %640 = vmatprep.subr.bf16.mxu0 0
  %641 = vmatpush1.bf16.msra.mxu0 %v613
  %642 = vmatprep.subr.bf16.mxu0 0
  %643 = vmatpush2.bf16.msra.mxu0 0
  %644 = vmatprep.subr.bf16.mxu0 0
  %645 = vmatpush2.bf16.msra.mxu0 0
  %646 = vmatprep.subr.bf16.mxu0 0
  %647 = vmatpush2.bf16.msra.mxu0 0
  %648 = vmatprep.subr.bf16.mxu0 0
  %649 = vmatpush2.bf16.msra.mxu0 0
  %650 = vmatprep.subr.bf16.mxu0 0
  %651 = vmatpush2.bf16.msra.mxu0 0
  %652 = vmatprep.subr.bf16.mxu0 0
  %653 = vmatpush2.bf16.msra.mxu0 0
  %654 = vmatprep.subr.bf16.mxu0 0
  %655 = vmatpush2.bf16.msra.mxu0 0
  %656 = vmatprep.subr.bf16.mxu0 0
  %657 = vmatpush2.bf16.msra.mxu0 0
  %658 = vmatprep.mubr.bf16.mxu0 0
  %659 = vmatmul.mubr.bf16.gmra.mxu0 %v620
  %v660 = vpop.f32.mrf.mxu0
  %v661 = vadd.f32 %v602, %v660
  %v662 = vpop.f32.mrf.mxu0
  %v663 = vpop.f32.mrf.mxu0
  %v664 = vpop.f32.mrf.mxu0
  %665 = vdwg.mxu0
  %v666 = vmax.f32 %v661, 0.0
  %v667 = vld [vmem:[%s5] sm:$0xf]
  %v668 = vld [vmem:[%s5 + $0x4] sm:$0xf]
  %v669 = vld [vmem:[%s5 + $0x8] sm:$0xf]
  %v670 = vld [vmem:[%s5 + $0xc] sm:$0xf]
  %v671 = vld [vmem:[%s5 + $0x10] sm:$0xf]
  %v672 = vld [vmem:[%s5 + $0x14] sm:$0xf]
  %v673 = vld [vmem:[%s5 + $0x18] sm:$0xf]
  %v674 = vld [vmem:[%s5 + $0x1c] sm:$0xf]
  %v675 = vld [vmem:[%s5 + $0x20] sm:$0xf]
  %v676 = vld [vmem:[%s5 + $0x24] sm:$0xf]
  %v677 = vld [vmem:[%s5 + $0x28] sm:$0xf]
  %v678 = vld [vmem:[%s5 + $0x2c] sm:$0xf]
  %v679 = vld [vmem:[%s5 + $0x30] sm:$0xf]
  %v680 = vld [vmem:[%s5 + $0x34] sm:$0xf]
  %v681 = vld [vmem:[%s5 + $0x38] sm:$0xf]
  %v682 = vld [vmem:[%s5 + $0x3c] sm:$0xf]
  %v683 = vld [vmem:[%s5 + $0x40] sm:$0xf]
  %v684 = vld [vmem:[%s5 + $0x44] sm:$0xf]
  %v685 = vld [vmem:[%s5 + $0x48] sm:$0xf]
  %v686 = vld [vmem:[%s5 + $0x4c] sm:$0xf]
  %v687 = vld [vmem:[%s5 + $0x50] sm:$0xf]
  %v688 = vld [vmem:[%s5 + $0x54] sm:$0xf]
  %v689 = vld [vmem:[%s5 + $0x58] sm:$0xf]
  %v690 = vld [vmem:[%s5 + $0x5c] sm:$0xf]
  %v691 = vld [vmem:[%s5 + $0x60] sm:$0xf]
  %v692 = vld [vmem:[%s5 + $0x64] sm:$0xf]
  %v693 = vld [vmem:[%s5 + $0x68] sm:$0xf]
  %v694 = vld [vmem:[%s5 + $0x6c] sm:$0xf]
  %v695 = vld [vmem:[%s5 + $0x70] sm:$0xf]
  %v696 = vld [vmem:[%s5 + $0x74] sm:$0xf]
  %v697 = vld [vmem:[%s5 + $0x78] sm:$0xf]
  %v698 = vld [vmem:[%s5 + $0x7c] sm:$0xf]
  %v699 = vpack.c.bf16 %v594, %v594
  %v700 = vpack.c.bf16 %v666, %v666
  %v701 = vld [vmem:[%s13 + $0x2] ss:$0 sm:$0xff]
  %v734 = vunpack.c.l.b16 %v667
  %v735 = vunpack.c.l.b16 %v668
  %v736 = vunpack.c.l.b16 %v669
  %v737 = vunpack.c.l.b16 %v670
  %v738 = vunpack.c.l.b16 %v671
  %v739 = vunpack.c.l.b16 %v672
  %v740 = vunpack.c.l.b16 %v673
  %v741 = vunpack.c.l.b16 %v674
  %v742 = vunpack.c.l.b16 %v675
  %v743 = vunpack.c.l.b16 %v676
  %v744 = vunpack.c.l.b16 %v677
  %v745 = vunpack.c.l.b16 %v678
  %v746 = vunpack.c.l.b16 %v679
  %v747 = vunpack.c.l.b16 %v680
  %v748 = vunpack.c.l.b16 %v681
  %v749 = vunpack.c.l.b16 %v682
  %v750 = vunpack.c.l.b16 %v683
  %v751 = vunpack.c.l.b16 %v684
  %v752 = vunpack.c.l.b16 %v685
  %v753 = vunpack.c.l.b16 %v686
  %v754 = vunpack.c.l.b16 %v687
  %v755 = vunpack.c.l.b16 %v688
  %v756 = vunpack.c.l.b16 %v689
  %v757 = vunpack.c.l.b16 %v690
  %v758 = vunpack.c.l.b16 %v691
  %v759 = vunpack.c.l.b16 %v692
  %v760 = vunpack.c.l.b16 %v693
  %v761 = vunpack.c.l.b16 %v694
  %v762 = vunpack.c.l.b16 %v695
  %v763 = vunpack.c.l.b16 %v696
  %v764 = vunpack.c.l.b16 %v697
  %v765 = vunpack.c.l.b16 %v698
  %v766 = vpack.c.b16 %v735, %v734
  %v767 = vpack.c.b16 %v737, %v736
  %v768 = vpack.c.b16 %v739, %v738
  %v769 = vpack.c.b16 %v741, %v740
  %v770 = vpack.c.b16 %v743, %v742
  %v771 = vpack.c.b16 %v745, %v744
  %v772 = vpack.c.b16 %v747, %v746
  %v773 = vpack.c.b16 %v749, %v748
  %v774 = vpack.c.b16 %v751, %v750
  %v775 = vpack.c.b16 %v753, %v752
  %v776 = vpack.c.b16 %v755, %v754
  %v777 = vpack.c.b16 %v757, %v756
  %v778 = vpack.c.b16 %v759, %v758
  %v779 = vpack.c.b16 %v761, %v760
  %v780 = vpack.c.b16 %v763, %v762
  %v781 = vpack.c.b16 %v765, %v764
  %798 = vmatprep.subr.bf16.mxu0 0
  %799 = vmatpush1.bf16.msra.mxu0 %v773
  %800 = vmatprep.subr.bf16.mxu0 0
  %801 = vmatpush1.bf16.msra.mxu0 %v772
  %802 = vmatprep.subr.bf16.mxu0 0
  %803 = vmatpush1.bf16.msra.mxu0 %v771
  %804 = vmatprep.subr.bf16.mxu0 0
  %805 = vmatpush1.bf16.msra.mxu0 %v770
  %806 = vmatprep.subr.bf16.mxu0 0
  %807 = vmatpush1.bf16.msra.mxu0 %v769
  %808 = vmatprep.subr.bf16.mxu0 0
  %809 = vmatpush1.bf16.msra.mxu0 %v768
  %810 = vmatprep.subr.bf16.mxu0 0
  %811 = vmatpush1.bf16.msra.mxu0 %v767
  %812 = vmatprep.subr.bf16.mxu0 0
  %813 = vmatpush1.bf16.msra.mxu0 %v766
  %814 = vmatprep.subr.bf16.mxu0 0
  %815 = vmatpush2.bf16.msra.mxu0 %v781
  %816 = vmatprep.subr.bf16.mxu0 0
  %817 = vmatpush2.bf16.msra.mxu0 %v780
  %818 = vmatprep.subr.bf16.mxu0 0
  %819 = vmatpush2.bf16.msra.mxu0 %v779
  %820 = vmatprep.subr.bf16.mxu0 0
  %821 = vmatpush2.bf16.msra.mxu0 %v778
  %822 = vmatprep.subr.bf16.mxu0 0
  %823 = vmatpush2.bf16.msra.mxu0 %v777
  %824 = vmatprep.subr.bf16.mxu0 0
  %825 = vmatpush2.bf16.msra.mxu0 %v776
  %826 = vmatprep.subr.bf16.mxu0 0
  %827 = vmatpush2.bf16.msra.mxu0 %v775
  %828 = vmatprep.subr.bf16.mxu0 0
  %829 = vmatpush2.bf16.msra.mxu0 %v774
  %830 = vmatprep.mubr.bf16.mxu0 %v700
  %831 = vmatmul.mubr.bf16.gmra.mxu0 %v699
  %v832 = vpop.f32.mrf.mxu0
  %v833 = vadd.f32 %v701, %v832
  %v834 = vpop.f32.mrf.mxu0
  %v835 = vpop.f32.mrf.mxu0
  %v836 = vpop.f32.mrf.mxu0
  %837 = vdwg.mxu0
  %v838 = vtanh.pop %v833
  %v839 = vld [vmem:[%s2] sm:$0xff]
  %v840 = vld [vmem:[%s2 + $0x8] sm:$0x3f]
  %v841 = vld [vmem:[%s6] sm:$0xf]
  %v842 = vld [vmem:[%s6 + $0x4] sm:$0xf]
  %v843 = vld [vmem:[%s6 + $0x8] sm:$0xf]
  %v844 = vld [vmem:[%s6 + $0xc] sm:$0xf]
  %v845 = vld [vmem:[%s6 + $0x10] sm:$0xf]
  %v846 = vld [vmem:[%s6 + $0x14] sm:$0xf]
  %v847 = vld [vmem:[%s6 + $0x18] sm:$0xf]
  %v848 = vld [vmem:[%s6 + $0x1c] sm:$0xf]
  %v849 = vld [vmem:[%s6 + $0x20] sm:$0xf]
  %v850 = vld [vmem:[%s6 + $0x24] sm:$0xf]
  %v851 = vld [vmem:[%s6 + $0x28] sm:$0xf]
  %v852 = vld [vmem:[%s6 + $0x2c] sm:$0xf]
  %v853 = vld [vmem:[%s6 + $0x30] sm:$0xf]
  %v854 = vld [vmem:[%s6 + $0x34] sm:$0xf]
  %v855 = vld [vmem:[%s6 + $0x38] sm:$0xf]
  %v856 = vld [vmem:[%s6 + $0x3c] sm:$0xf]
  %v857 = vld [vmem:[%s6 + $0x40] sm:$0xf]
  %v858 = vld [vmem:[%s6 + $0x44] sm:$0xf]
  %v859 = vld [vmem:[%s6 + $0x48] sm:$0xf]
  %v860 = vld [vmem:[%s6 + $0x4c] sm:$0xf]
  %v861 = vld [vmem:[%s6 + $0x50] sm:$0xf]
  %v862 = vld [vmem:[%s6 + $0x54] sm:$0xf]
  %v863 = vld [vmem:[%s6 + $0x58] sm:$0xf]
  %v864 = vld [vmem:[%s6 + $0x5c] sm:$0xf]
  %v865 = vld [vmem:[%s6 + $0x60] sm:$0xf]
  %v866 = vld [vmem:[%s6 + $0x64] sm:$0xf]
  %v867 = vld [vmem:[%s6 + $0x68] sm:$0xf]
  %v868 = vld [vmem:[%s6 + $0x6c] sm:$0xf]
  %v869 = vld [vmem:[%s6 + $0x70] sm:$0xf]
  %v870 = vld [vmem:[%s6 + $0x74] sm:$0xf]
  %v871 = vld [vmem:[%s6 + $0x78] sm:$0xf]
  %v872 = vld [vmem:[%s6 + $0x7c] sm:$0xf]
  %v873 = vld [vmem:[%s6 + $0x80] sm:$0xf]
  %v874 = vld [vmem:[%s6 + $0x84] sm:$0xf]
  %v875 = vld [vmem:[%s6 + $0x88] sm:$0xf]
  %v876 = vld [vmem:[%s6 + $0x8c] sm:$0xf]
  %v877 = vld [vmem:[%s6 + $0x90] sm:$0xf]
  %v878 = vld [vmem:[%s6 + $0x94] sm:$0xf]
  %v879 = vld [vmem:[%s6 + $0x98] sm:$0xf]
  %v880 = vld [vmem:[%s6 + $0x9c] sm:$0xf]
  %v881 = vld [vmem:[%s6 + $0xa0] sm:$0xf]
  %v882 = vld [vmem:[%s6 + $0xa4] sm:$0xf]
  %v883 = vld [vmem:[%s6 + $0xa8] sm:$0xf]
  %v884 = vld [vmem:[%s6 + $0xac] sm:$0xf]
  %v885 = vld [vmem:[%s6 + $0xb0] sm:$0xf]
  %v886 = vld [vmem:[%s6 + $0xb4] sm:$0xf]
  %v887 = vld [vmem:[%s6 + $0xb8] sm:$0xf]
  %v888 = vld [vmem:[%s6 + $0xbc] sm:$0xf]
  %v889 = vld [vmem:[%s6 + $0xc0] sm:$0xf]
  %v890 = vld [vmem:[%s6 + $0xc4] sm:$0xf]
  %v891 = vld [vmem:[%s6 + $0xc8] sm:$0xf]
  %v892 = vld [vmem:[%s6 + $0xcc] sm:$0xf]
  %v893 = vld [vmem:[%s6 + $0xd0] sm:$0xf]
  %v894 = vld [vmem:[%s6 + $0xd4] sm:$0xf]
  %v895 = vld [vmem:[%s6 + $0xd8] sm:$0xf]
  %v896 = vld [vmem:[%s6 + $0xdc] sm:$0xf]
  %v897 = vld [vmem:[%s6 + $0xe0] sm:$0xf]
  %v898 = vld [vmem:[%s6 + $0xe4] sm:$0xf]
  %v899 = vld [vmem:[%s6 + $0xe8] sm:$0xf]
  %v900 = vld [vmem:[%s6 + $0xec] sm:$0xf]
  %v901 = vld [vmem:[%s6 + $0xf0] sm:$0xf]
  %v902 = vld [vmem:[%s6 + $0xf4] sm:$0xf]
  %v903 = vld [vmem:[%s6 + $0xf8] sm:$0xf]
  %v904 = vld [vmem:[%s6 + $0xfc] sm:$0xf]
  %v905 = vld [vmem:[%s6 + $0x100] sm:$0xf]
  %v906 = vld [vmem:[%s6 + $0x104] sm:$0xf]
  %v907 = vld [vmem:[%s6 + $0x108] sm:$0xf]
  %v908 = vld [vmem:[%s6 + $0x10c] sm:$0xf]
  %v909 = vld [vmem:[%s6 + $0x110] sm:$0xf]
  %v910 = vld [vmem:[%s6 + $0x114] sm:$0xf]
  %v911 = vld [vmem:[%s6 + $0x118] sm:$0xf]
  %v912 = vld [vmem:[%s6 + $0x11c] sm:$0xf]
  %v913 = vld [vmem:[%s6 + $0x120] sm:$0xf]
  %v914 = vld [vmem:[%s6 + $0x124] sm:$0xf]
  %v915 = vld [vmem:[%s6 + $0x128] sm:$0xf]
  %v916 = vld [vmem:[%s6 + $0x12c] sm:$0xf]
  %v917 = vld [vmem:[%s6 + $0x130] sm:$0xf]
  %v918 = vld [vmem:[%s6 + $0x134] sm:$0xf]
  %v919 = vld [vmem:[%s6 + $0x138] sm:$0xf]
  %v920 = vld [vmem:[%s6 + $0x13c] sm:$0xf]
  %v921 = vld [vmem:[%s6 + $0x140] sm:$0xf]
  %v922 = vld [vmem:[%s6 + $0x144] sm:$0xf]
  %v923 = vld [vmem:[%s6 + $0x148] sm:$0xf]
  %v924 = vld [vmem:[%s6 + $0x14c] sm:$0xf]
  %v925 = vld [vmem:[%s6 + $0x150] sm:$0xf]
  %v926 = vld [vmem:[%s6 + $0x154] sm:$0xf]
  %v927 = vld [vmem:[%s6 + $0x158] sm:$0xf]
  %v928 = vld [vmem:[%s6 + $0x15c] sm:$0xf]
  %v929 = vld [vmem:[%s6 + $0x160] sm:$0xf]
  %v930 = vld [vmem:[%s6 + $0x164] sm:$0xf]
  %v931 = vld [vmem:[%s6 + $0x168] sm:$0xf]
  %v932 = vld [vmem:[%s6 + $0x16c] sm:$0xf]
  %v933 = vld [vmem:[%s6 + $0x170] sm:$0xf]
  %v934 = vld [vmem:[%s6 + $0x174] sm:$0xf]
  %v935 = vld [vmem:[%s6 + $0x178] sm:$0xf]
  %v936 = vld [vmem:[%s6 + $0x17c] sm:$0xf]
  %v937 = vld [vmem:[%s6 + $0x180] sm:$0xf]
  %v940 = vcombine.high %v839, %v839
  %v942 = vunpack.c.l.s4 1983009808
  %v943 = vunpack.c.0.s8 %v942
  %v944 = vlaneseq
  %v945 = vshrl.u32 %v944, 7
  %v946 = vsub.s32 %v943, %v945
  %v947 = vrot.slane %v839, %v946
  %v949 = vunpack.c.l.s4 1983009808
  %v950 = vunpack.c.0.s8 %v949
  %v951 = vlaneseq
  %v952 = vshrl.u32 %v951, 7
  %v953 = vsub.s32 %v950, %v952
  %v954 = vrot.slane %v940, %v953
  %v955 = vcombine.high %v947, %v947
  %v956 = vcombine.high %v954, %v954
  %v957 = vcombine.high %v840, %v840
  %v959 = vunpack.c.l.s4 1983009808
  %v960 = vunpack.c.0.s8 %v959
  %v961 = vlaneseq
  %v962 = vshrl.u32 %v961, 7
  %v963 = vsub.s32 %v960, %v962
  %v964 = vrot.slane %v840, %v963
  %v966 = vunpack.c.l.s4 1983009808
  %v967 = vunpack.c.0.s8 %v966
  %v968 = vlaneseq
  %v969 = vshrl.u32 %v968, 7
  %v970 = vsub.s32 %v967, %v969
  %v971 = vrot.slane %v957, %v970
  %v972 = vcombine.high %v964, %v964
  %v980 = vpack.c.bf16 %v947, %v947
  %v981 = vpack.c.bf16 %v955, %v955
  %v982 = vpack.c.bf16 %v954, %v954
  %v983 = vpack.c.bf16 %v956, %v956
  %v984 = vpack.c.bf16 %v964, %v964
  %v985 = vpack.c.bf16 %v972, %v972
  %v986 = vpack.c.bf16 %v971, %v971
  %v987 = vld [vmem:[%s7] sm:$0xf]
  %v988 = vld [vmem:[%s7 + $0x4] sm:$0xf]
  %v989 = vld [vmem:[%s7 + $0x8] sm:$0xf]
  %v990 = vld [vmem:[%s7 + $0xc] sm:$0xf]
  %v991 = vld [vmem:[%s7 + $0x10] sm:$0xf]
  %v992 = vld [vmem:[%s7 + $0x14] sm:$0xf]
  %v993 = vld [vmem:[%s7 + $0x18] sm:$0xf]
  %v994 = vld [vmem:[%s7 + $0x1c] sm:$0xf]
  %v995 = vpack.c.bf16 %v838, %v838
  %v1004 = vunpack.c.l.b16 %v987
  %v1005 = vunpack.c.l.b16 %v988
  %v1006 = vunpack.c.l.b16 %v989
  %v1007 = vunpack.c.l.b16 %v990
  %v1008 = vunpack.c.l.b16 %v991
  %v1009 = vunpack.c.l.b16 %v992
  %v1010 = vunpack.c.l.b16 %v993
  %v1011 = vunpack.c.l.b16 %v994
  %v1012 = vpack.c.b16 %v1005, %v1004
  %v1013 = vpack.c.b16 %v1007, %v1006
  %v1014 = vpack.c.b16 %v1009, %v1008
  %v1015 = vpack.c.b16 %v1011, %v1010
  %vm1020 = vcmask 523264
  %v1022 = vsel %vm1020, %v995, 0
  %1024 = vmatprep.subr.bf16.mxu0 0
  %1025 = vmatpush1.bf16.msra.mxu0 0
  %1026 = vmatprep.subr.bf16.mxu0 0
  %1027 = vmatpush1.bf16.msra.mxu0 0
  %1028 = vmatprep.subr.bf16.mxu0 0
  %1029 = vmatpush1.bf16.msra.mxu0 0
  %1030 = vmatprep.subr.bf16.mxu0 0
  %1031 = vmatpush1.bf16.msra.mxu0 0
  %1032 = vmatprep.subr.bf16.mxu0 0
  %1033 = vmatpush1.bf16.msra.mxu0 %v1015
  %1034 = vmatprep.subr.bf16.mxu0 0
  %1035 = vmatpush1.bf16.msra.mxu0 %v1014
  %1036 = vmatprep.subr.bf16.mxu0 0
  %1037 = vmatpush1.bf16.msra.mxu0 %v1013
  %1038 = vmatprep.subr.bf16.mxu0 0
  %1039 = vmatpush1.bf16.msra.mxu0 %v1012
  %1040 = vmatprep.subr.bf16.mxu0 0
  %1041 = vmatpush2.bf16.msra.mxu0 0
  %1042 = vmatprep.subr.bf16.mxu0 0
  %1043 = vmatpush2.bf16.msra.mxu0 0
  %1044 = vmatprep.subr.bf16.mxu0 0
  %1045 = vmatpush2.bf16.msra.mxu0 0
  %1046 = vmatprep.subr.bf16.mxu0 0
  %1047 = vmatpush2.bf16.msra.mxu0 0
  %1048 = vmatprep.subr.bf16.mxu0 0
  %1049 = vmatpush2.bf16.msra.mxu0 0
  %1050 = vmatprep.subr.bf16.mxu0 0
  %1051 = vmatpush2.bf16.msra.mxu0 0
  %1052 = vmatprep.subr.bf16.mxu0 0
  %1053 = vmatpush2.bf16.msra.mxu0 0
  %1054 = vmatprep.subr.bf16.mxu0 0
  %1055 = vmatpush2.bf16.msra.mxu0 0
  %1056 = vmatprep.mubr.bf16.mxu0 0
  %1057 = vmatmul.mubr.bf16.gmra.mxu0 %v1022
  %v1058 = vpop.f32.mrf.mxu0
  %v1059 = vadd.f32 0.0, %v1058
  %v1060 = vpop.f32.mrf.mxu0
  %v1061 = vpop.f32.mrf.mxu0
  %v1062 = vpop.f32.mrf.mxu0
  %1063 = vdwg.mxu0
  %v1161 = vunpack.c.l.b16 %v841
  %v1162 = vunpack.c.l.b16 %v842
  %v1163 = vunpack.c.l.b16 %v843
  %v1164 = vunpack.c.l.b16 %v844
  %v1165 = vunpack.c.l.b16 %v845
  %v1166 = vunpack.c.l.b16 %v846
  %v1167 = vunpack.c.l.b16 %v847
  %v1168 = vunpack.c.l.b16 %v848
  %v1169 = vunpack.c.l.b16 %v849
  %v1170 = vunpack.c.l.b16 %v850
  %v1171 = vunpack.c.l.b16 %v851
  %v1172 = vunpack.c.l.b16 %v852
  %v1173 = vunpack.c.l.b16 %v853
  %v1174 = vunpack.c.l.b16 %v854
  %v1175 = vunpack.c.l.b16 %v855
  %v1176 = vunpack.c.l.b16 %v856
  %v1177 = vunpack.c.l.b16 %v857
  %v1178 = vunpack.c.l.b16 %v858
  %v1179 = vunpack.c.l.b16 %v859
  %v1180 = vunpack.c.l.b16 %v860
  %v1181 = vunpack.c.l.b16 %v861
  %v1182 = vunpack.c.l.b16 %v862
  %v1183 = vunpack.c.l.b16 %v863
  %v1184 = vunpack.c.l.b16 %v864
  %v1185 = vunpack.c.l.b16 %v865
  %v1186 = vunpack.c.l.b16 %v866
  %v1187 = vunpack.c.l.b16 %v867
  %v1188 = vunpack.c.l.b16 %v868
  %v1189 = vunpack.c.l.b16 %v869
  %v1190 = vunpack.c.l.b16 %v870
  %v1191 = vunpack.c.l.b16 %v871
  %v1192 = vunpack.c.l.b16 %v872
  %v1193 = vunpack.c.l.b16 %v873
  %v1194 = vunpack.c.l.b16 %v874
  %v1195 = vunpack.c.l.b16 %v875
  %v1196 = vunpack.c.l.b16 %v876
  %v1197 = vunpack.c.l.b16 %v877
  %v1198 = vunpack.c.l.b16 %v878
  %v1199 = vunpack.c.l.b16 %v879
  %v1200 = vunpack.c.l.b16 %v880
  %v1201 = vunpack.c.l.b16 %v881
  %v1202 = vunpack.c.l.b16 %v882
  %v1203 = vunpack.c.l.b16 %v883
  %v1204 = vunpack.c.l.b16 %v884
  %v1205 = vunpack.c.l.b16 %v885
  %v1206 = vunpack.c.l.b16 %v886
  %v1207 = vunpack.c.l.b16 %v887
  %v1208 = vunpack.c.l.b16 %v888
  %v1209 = vunpack.c.l.b16 %v889
  %v1210 = vunpack.c.l.b16 %v890
  %v1211 = vunpack.c.l.b16 %v891
  %v1212 = vunpack.c.l.b16 %v892
  %v1213 = vunpack.c.l.b16 %v893
  %v1214 = vunpack.c.l.b16 %v894
  %v1215 = vunpack.c.l.b16 %v895
  %v1216 = vunpack.c.l.b16 %v896
  %v1217 = vunpack.c.l.b16 %v897
  %v1218 = vunpack.c.l.b16 %v898
  %v1219 = vunpack.c.l.b16 %v899
  %v1220 = vunpack.c.l.b16 %v900
  %v1221 = vunpack.c.l.b16 %v901
  %v1222 = vunpack.c.l.b16 %v902
  %v1223 = vunpack.c.l.b16 %v903
  %v1224 = vunpack.c.l.b16 %v904
  %v1225 = vunpack.c.l.b16 %v905
  %v1226 = vunpack.c.l.b16 %v906
  %v1227 = vunpack.c.l.b16 %v907
  %v1228 = vunpack.c.l.b16 %v908
  %v1229 = vunpack.c.l.b16 %v909
  %v1230 = vunpack.c.l.b16 %v910
  %v1231 = vunpack.c.l.b16 %v911
  %v1232 = vunpack.c.l.b16 %v912
  %v1233 = vunpack.c.l.b16 %v913
  %v1234 = vunpack.c.l.b16 %v914
  %v1235 = vunpack.c.l.b16 %v915
  %v1236 = vunpack.c.l.b16 %v916
  %v1237 = vunpack.c.l.b16 %v917
  %v1238 = vunpack.c.l.b16 %v918
  %v1239 = vunpack.c.l.b16 %v919
  %v1240 = vunpack.c.l.b16 %v920
  %v1241 = vunpack.c.l.b16 %v921
  %v1242 = vunpack.c.l.b16 %v922
  %v1243 = vunpack.c.l.b16 %v923
  %v1244 = vunpack.c.l.b16 %v924
  %v1245 = vunpack.c.l.b16 %v925
  %v1246 = vunpack.c.l.b16 %v926
  %v1247 = vunpack.c.l.b16 %v927
  %v1248 = vunpack.c.l.b16 %v928
  %v1249 = vunpack.c.l.b16 %v929
  %v1250 = vunpack.c.l.b16 %v930
  %v1251 = vunpack.c.l.b16 %v931
  %v1252 = vunpack.c.l.b16 %v932
  %v1253 = vunpack.c.l.b16 %v933
  %v1254 = vunpack.c.l.b16 %v934
  %v1255 = vunpack.c.l.b16 %v935
  %v1256 = vunpack.c.l.b16 %v936
  %v1257 = vunpack.c.l.b16 %v937
  %v1258 = vpack.c.b16 %v1162, %v1161
  %v1259 = vpack.c.b16 %v1164, %v1163
  %v1260 = vpack.c.b16 %v1166, %v1165
  %v1261 = vpack.c.b16 %v1168, %v1167
  %v1262 = vpack.c.b16 %v1170, %v1169
  %v1263 = vpack.c.b16 %v1172, %v1171
  %v1264 = vpack.c.b16 %v1174, %v1173
  %v1265 = vpack.c.b16 %v1176, %v1175
  %v1266 = vpack.c.b16 %v1178, %v1177
  %v1267 = vpack.c.b16 %v1180, %v1179
  %v1268 = vpack.c.b16 %v1182, %v1181
  %v1269 = vpack.c.b16 %v1184, %v1183
  %v1270 = vpack.c.b16 %v1186, %v1185
  %v1271 = vpack.c.b16 %v1188, %v1187
  %v1272 = vpack.c.b16 %v1190, %v1189
  %v1273 = vpack.c.b16 %v1192, %v1191
  %v1274 = vpack.c.b16 %v1194, %v1193
  %v1275 = vpack.c.b16 %v1196, %v1195
  %v1276 = vpack.c.b16 %v1198, %v1197
  %v1277 = vpack.c.b16 %v1200, %v1199
  %v1278 = vpack.c.b16 %v1202, %v1201
  %v1279 = vpack.c.b16 %v1204, %v1203
  %v1280 = vpack.c.b16 %v1206, %v1205
  %v1281 = vpack.c.b16 %v1208, %v1207
  %v1282 = vpack.c.b16 %v1210, %v1209
  %v1283 = vpack.c.b16 %v1212, %v1211
  %v1284 = vpack.c.b16 %v1214, %v1213
  %v1285 = vpack.c.b16 %v1216, %v1215
  %v1286 = vpack.c.b16 %v1218, %v1217
  %v1287 = vpack.c.b16 %v1220, %v1219
  %v1288 = vpack.c.b16 %v1222, %v1221
  %v1289 = vpack.c.b16 %v1224, %v1223
  %v1290 = vpack.c.b16 %v1226, %v1225
  %v1291 = vpack.c.b16 %v1228, %v1227
  %v1292 = vpack.c.b16 %v1230, %v1229
  %v1293 = vpack.c.b16 %v1232, %v1231
  %v1294 = vpack.c.b16 %v1234, %v1233
  %v1295 = vpack.c.b16 %v1236, %v1235
  %v1296 = vpack.c.b16 %v1238, %v1237
  %v1297 = vpack.c.b16 %v1240, %v1239
  %v1298 = vpack.c.b16 %v1242, %v1241
  %v1299 = vpack.c.b16 %v1244, %v1243
  %v1300 = vpack.c.b16 %v1246, %v1245
  %v1301 = vpack.c.b16 %v1248, %v1247
  %v1302 = vpack.c.b16 %v1250, %v1249
  %v1303 = vpack.c.b16 %v1252, %v1251
  %v1304 = vpack.c.b16 %v1254, %v1253
  %v1305 = vpack.c.b16 %v1256, %v1255
  %v1306 = vpack.c.b16 %v1257, %v1257
  %vm1355 = vcmask 64512
  %v1357 = vsel %vm1355, %v986, 0
  %v1360 = vsel %vm622, %v1306, 0
  %1362 = vmatprep.subr.bf16.mxu0 0
  %1363 = vmatpush1.bf16.msra.mxu0 %v1265
  %1364 = vmatprep.subr.bf16.mxu0 0
  %1365 = vmatpush1.bf16.msra.mxu0 %v1264
  %1366 = vmatprep.subr.bf16.mxu0 0
  %1367 = vmatpush1.bf16.msra.mxu0 %v1263
  %1368 = vmatprep.subr.bf16.mxu0 0
  %1369 = vmatpush1.bf16.msra.mxu0 %v1262
  %1370 = vmatprep.subr.bf16.mxu0 0
  %1371 = vmatpush1.bf16.msra.mxu0 %v1261
  %1372 = vmatprep.subr.bf16.mxu0 0
  %1373 = vmatpush1.bf16.msra.mxu0 %v1260
  %1374 = vmatprep.subr.bf16.mxu0 0
  %1375 = vmatpush1.bf16.msra.mxu0 %v1259
  %1376 = vmatprep.subr.bf16.mxu0 0
  %1377 = vmatpush1.bf16.msra.mxu0 %v1258
  %1378 = vmatprep.subr.bf16.mxu0 0
  %1379 = vmatpush2.bf16.msra.mxu0 %v1273
  %1380 = vmatprep.subr.bf16.mxu0 0
  %1381 = vmatpush2.bf16.msra.mxu0 %v1272
  %1382 = vmatprep.subr.bf16.mxu0 0
  %1383 = vmatpush2.bf16.msra.mxu0 %v1271
  %1384 = vmatprep.subr.bf16.mxu0 0
  %1385 = vmatpush2.bf16.msra.mxu0 %v1270
  %1386 = vmatprep.subr.bf16.mxu0 0
  %1387 = vmatpush2.bf16.msra.mxu0 %v1269
  %1388 = vmatprep.subr.bf16.mxu0 0
  %1389 = vmatpush2.bf16.msra.mxu0 %v1268
  %1390 = vmatprep.subr.bf16.mxu0 0
  %1391 = vmatpush2.bf16.msra.mxu0 %v1267
  %1392 = vmatprep.subr.bf16.mxu0 0
  %1393 = vmatpush2.bf16.msra.mxu0 %v1266
  %1394 = vmatprep.mubr.bf16.mxu0 %v981
  %1395 = vmatmul.mubr.bf16.gmra.mxu0 %v980
  %v1396 = vpop.f32.mrf.mxu0
  %v1397 = vadd.f32 %v1059, %v1396
  %v1398 = vpop.f32.mrf.mxu0
  %v1399 = vpop.f32.mrf.mxu0
  %v1400 = vpop.f32.mrf.mxu0
  %1401 = vdwg.mxu0
  %1402 = vmatprep.subr.bf16.mxu0 0
  %1403 = vmatpush1.bf16.msra.mxu0 %v1281
  %1404 = vmatprep.subr.bf16.mxu0 0
  %1405 = vmatpush1.bf16.msra.mxu0 %v1280
  %1406 = vmatprep.subr.bf16.mxu0 0
  %1407 = vmatpush1.bf16.msra.mxu0 %v1279
  %1408 = vmatprep.subr.bf16.mxu0 0
  %1409 = vmatpush1.bf16.msra.mxu0 %v1278
  %1410 = vmatprep.subr.bf16.mxu0 0
  %1411 = vmatpush1.bf16.msra.mxu0 %v1277
  %1412 = vmatprep.subr.bf16.mxu0 0
  %1413 = vmatpush1.bf16.msra.mxu0 %v1276
  %1414 = vmatprep.subr.bf16.mxu0 0
  %1415 = vmatpush1.bf16.msra.mxu0 %v1275
  %1416 = vmatprep.subr.bf16.mxu0 0
  %1417 = vmatpush1.bf16.msra.mxu0 %v1274
  %1418 = vmatprep.subr.bf16.mxu0 0
  %1419 = vmatpush2.bf16.msra.mxu0 %v1289
  %1420 = vmatprep.subr.bf16.mxu0 0
  %1421 = vmatpush2.bf16.msra.mxu0 %v1288
  %1422 = vmatprep.subr.bf16.mxu0 0
  %1423 = vmatpush2.bf16.msra.mxu0 %v1287
  %1424 = vmatprep.subr.bf16.mxu0 0
  %1425 = vmatpush2.bf16.msra.mxu0 %v1286
  %1426 = vmatprep.subr.bf16.mxu0 0
  %1427 = vmatpush2.bf16.msra.mxu0 %v1285
  %1428 = vmatprep.subr.bf16.mxu0 0
  %1429 = vmatpush2.bf16.msra.mxu0 %v1284
  %1430 = vmatprep.subr.bf16.mxu0 0
  %1431 = vmatpush2.bf16.msra.mxu0 %v1283
  %1432 = vmatprep.subr.bf16.mxu0 0
  %1433 = vmatpush2.bf16.msra.mxu0 %v1282
  %1434 = vmatprep.mubr.bf16.mxu0 %v983
  %1435 = vmatmul.mubr.bf16.gmra.mxu0 %v982
  %v1436 = vpop.f32.mrf.mxu0
  %v1437 = vadd.f32 %v1397, %v1436
  %v1438 = vpop.f32.mrf.mxu0
  %v1439 = vpop.f32.mrf.mxu0
  %v1440 = vpop.f32.mrf.mxu0
  %1441 = vdwg.mxu0
  %1442 = vmatprep.subr.bf16.mxu0 0
  %1443 = vmatpush1.bf16.msra.mxu0 %v1297
  %1444 = vmatprep.subr.bf16.mxu0 0
  %1445 = vmatpush1.bf16.msra.mxu0 %v1296
  %1446 = vmatprep.subr.bf16.mxu0 0
  %1447 = vmatpush1.bf16.msra.mxu0 %v1295
  %1448 = vmatprep.subr.bf16.mxu0 0
  %1449 = vmatpush1.bf16.msra.mxu0 %v1294
  %1450 = vmatprep.subr.bf16.mxu0 0
  %1451 = vmatpush1.bf16.msra.mxu0 %v1293
  %1452 = vmatprep.subr.bf16.mxu0 0
  %1453 = vmatpush1.bf16.msra.mxu0 %v1292
  %1454 = vmatprep.subr.bf16.mxu0 0
  %1455 = vmatpush1.bf16.msra.mxu0 %v1291
  %1456 = vmatprep.subr.bf16.mxu0 0
  %1457 = vmatpush1.bf16.msra.mxu0 %v1290
  %1458 = vmatprep.subr.bf16.mxu0 0
  %1459 = vmatpush2.bf16.msra.mxu0 %v1305
  %1460 = vmatprep.subr.bf16.mxu0 0
  %1461 = vmatpush2.bf16.msra.mxu0 %v1304
  %1462 = vmatprep.subr.bf16.mxu0 0
  %1463 = vmatpush2.bf16.msra.mxu0 %v1303
  %1464 = vmatprep.subr.bf16.mxu0 0
  %1465 = vmatpush2.bf16.msra.mxu0 %v1302
  %1466 = vmatprep.subr.bf16.mxu0 0
  %1467 = vmatpush2.bf16.msra.mxu0 %v1301
  %1468 = vmatprep.subr.bf16.mxu0 0
  %1469 = vmatpush2.bf16.msra.mxu0 %v1300
  %1470 = vmatprep.subr.bf16.mxu0 0
  %1471 = vmatpush2.bf16.msra.mxu0 %v1299
  %1472 = vmatprep.subr.bf16.mxu0 0
  %1473 = vmatpush2.bf16.msra.mxu0 %v1298
  %1474 = vmatprep.mubr.bf16.mxu0 %v985
  %1475 = vmatmul.mubr.bf16.gmra.mxu0 %v984
  %v1476 = vpop.f32.mrf.mxu0
  %v1477 = vadd.f32 %v1437, %v1476
  %v1478 = vpop.f32.mrf.mxu0
  %v1479 = vpop.f32.mrf.mxu0
  %v1480 = vpop.f32.mrf.mxu0
  %1481 = vdwg.mxu0
  %1482 = vmatprep.subr.bf16.mxu0 0
  %1483 = vmatpush1.bf16.msra.mxu0 0
  %1484 = vmatprep.subr.bf16.mxu0 0
  %1485 = vmatpush1.bf16.msra.mxu0 0
  %1486 = vmatprep.subr.bf16.mxu0 0
  %1487 = vmatpush1.bf16.msra.mxu0 0
  %1488 = vmatprep.subr.bf16.mxu0 0
  %1489 = vmatpush1.bf16.msra.mxu0 0
  %1490 = vmatprep.subr.bf16.mxu0 0
  %1491 = vmatpush1.bf16.msra.mxu0 0
  %1492 = vmatprep.subr.bf16.mxu0 0
  %1493 = vmatpush1.bf16.msra.mxu0 0
  %1494 = vmatprep.subr.bf16.mxu0 0
  %1495 = vmatpush1.bf16.msra.mxu0 0
  %1496 = vmatprep.subr.bf16.mxu0 0
  %1497 = vmatpush1.bf16.msra.mxu0 %v1360
  %1498 = vmatprep.subr.bf16.mxu0 0
  %1499 = vmatpush2.bf16.msra.mxu0 0
  %1500 = vmatprep.subr.bf16.mxu0 0
  %1501 = vmatpush2.bf16.msra.mxu0 0
  %1502 = vmatprep.subr.bf16.mxu0 0
  %1503 = vmatpush2.bf16.msra.mxu0 0
  %1504 = vmatprep.subr.bf16.mxu0 0
  %1505 = vmatpush2.bf16.msra.mxu0 0
  %1506 = vmatprep.subr.bf16.mxu0 0
  %1507 = vmatpush2.bf16.msra.mxu0 0
  %1508 = vmatprep.subr.bf16.mxu0 0
  %1509 = vmatpush2.bf16.msra.mxu0 0
  %1510 = vmatprep.subr.bf16.mxu0 0
  %1511 = vmatpush2.bf16.msra.mxu0 0
  %1512 = vmatprep.subr.bf16.mxu0 0
  %1513 = vmatpush2.bf16.msra.mxu0 0
  %1514 = vmatprep.mubr.bf16.mxu0 0
  %1515 = vmatmul.mubr.bf16.gmra.mxu0 %v1357
  %v1516 = vpop.f32.mrf.mxu0
  %v1517 = vadd.f32 %v1477, %v1516
  %v1518 = vpop.f32.mrf.mxu0
  %v1519 = vpop.f32.mrf.mxu0
  %v1520 = vpop.f32.mrf.mxu0
  %1521 = vdwg.mxu0
  %v1522 = vld [vmem:[%s13 + $0x3] ss:$0 sm:$0xff]
  %v1523 = vadd.f32 %v1517, %v1522
  %v1524 = vld [vmem:[%s13] sm:$0xf0]
  %v1525 = vld [vmem:[%s13 + $0x10] sm:$0xf]
  %v1528 = vunpack.c.l.s4 1966171168
  %v1529 = vunpack.c.0.s8 %v1528
  %v1530 = vlaneseq
  %v1531 = vshrl.u32 %v1530, 7
  %v1532 = vsub.s32 %v1529, %v1531
  %v1533 = vrot.slane %v1523, %v1532
  %v1534 = vcombine.high %v1533, %v1533
  %v1536 = vunpack.c.l.s4 1966171168
  %v1537 = vunpack.c.0.s8 %v1536
  %v1538 = vlaneseq
  %v1539 = vshrl.u32 %v1538, 7
  %v1540 = vsub.s32 %v1537, %v1539
  %v1541 = vrot.slane %v1533, %v1540
  %v1543 = vunpack.c.l.s4 1966171168
  %v1544 = vunpack.c.0.s8 %v1543
  %v1545 = vlaneseq
  %v1546 = vshrl.u32 %v1545, 7
  %v1547 = vsub.s32 %v1544, %v1546
  %v1548 = vrot.slane %v1534, %v1547
  %v1549 = vlaneseq
  %v1550 = vshrl.u32 %v1549, 7
  %v1551 = vsub.s32 0, %v1550
  %v1552 = vrot.slane %v1541, %v1551
  %v1553 = vlaneseq
  %v1554 = vshrl.u32 %v1553, 7
  %v1555 = vsub.s32 0, %v1554
  %v1556 = vrot.slane %v1548, %v1555
  %v1559 = vadd.f32 %v1524, %v1552
  %v1560 = vadd.f32 %v1525, %v1552
  %v1561 = vadd.f32 %v1524, %v1556
  %v1562 = vadd.f32 %v1525, %v1556
  %v1567 = vrot.slane %v1559, 4
  %v1568 = vrot.slane %v1560, 4
  %v1569 = vsel %vm622, %v1567, %v1568
  %v1570 = vrot.slane %v1561, 4
  %v1571 = vrot.slane %v1562, 4
  %v1572 = vsel %vm622, %v1570, %v1571
  %v1575 = vld [vmem:[%s13 + $0x14] ss:$0 sm:$0xff]
  %v1576 = vld [vmem:[%s13 + $0x15] ss:$0 sm:$0xff]
  %s1577 = scalar_lea.vmem %s13, 22
  %v1578 = vld [vmem:[%s1577] ss:$8 sm:$0x3]
  %v1579 = vld [vmem:[%s13 + $0x17] ss:$0 sm:$0xff]
  %v1580 = vld [vmem:[%s13 + $0x20] ss:$0 sm:$0xff]
  %v1581 = vld [vmem:[%s13 + $0x21] ss:$0 sm:$0xff]
  %v1582 = vld [vmem:[%s13 + $0x22] ss:$0 sm:$0xff]
  %v1583 = vld [vmem:[%s13 + $0x23] ss:$0 sm:$0xff]
  %v1584 = vsel %vm1020, %v1569, 0.0
  %1585 = vadd.xlane.f32.xlu0 %v1584
  %v1586 = vpop.xlane.xlu0 %1585
  %v1587 = vsel %vm1020, %v1572, 0.0
  %1588 = vadd.xlane.f32.xlu0 %v1587
  %v1589 = vpop.xlane.xlu0 %1588
  %v1590 = vrcp.pop 64.0
  %v1591 = vmul.f32 %v1586, %v1590
  %v1592 = vmul.f32 %v1589, %v1590
  %v1593 = vsub.f32 %v1569, %v1591
  %v1594 = vsub.f32 %v1572, %v1592
  %v1595 = vmul.f32 %v1593, %v1593
  %v1596 = vmul.f32 %v1594, %v1594
  %v1597 = vsel %vm1020, %v1595, 0.0
  %1598 = vadd.xlane.f32.xlu0 %v1597
  %v1599 = vpop.xlane.xlu0 %1598
  %v1600 = vsel %vm1020, %v1596, 0.0
  %1601 = vadd.xlane.f32.xlu0 %v1600
  %v1602 = vpop.xlane.xlu0 %1601
  %v1603 = vmul.f32 %v1599, %v1590
  %v1604 = vmul.f32 %v1602, %v1590
  %v1605 = vadd.f32 %v1603, 1e-05
  %v1606 = vadd.f32 %v1604, 1e-05
  %v1607 = vrsqrt.pop %v1605
  %v1608 = vrsqrt.pop %v1606
  %v1609 = vmul.f32 %v1593, %v1607
  %v1610 = vmul.f32 %v1594, %v1608
  %v1611 = vmul.f32 %v1609, %v1575
  %v1612 = vmul.f32 %v1610, %v1575
  %v1613 = vadd.f32 %v1611, %v1576
  %v1614 = vadd.f32 %v1612, %v1576
  %v1615 = vld [vmem:[%s8] sm:$0xff]
  %v1616 = vld [vmem:[%s8 + $0x8] sm:$0xff]
  %v1617 = vld [vmem:[%s8 + $0x10] sm:$0xff]
  %v1618 = vld [vmem:[%s8 + $0x18] sm:$0xff]
  %v1619 = vld [vmem:[%s8 + $0x20] sm:$0xff]
  %v1620 = vld [vmem:[%s8 + $0x28] sm:$0xff]
  %v1621 = vld [vmem:[%s8 + $0x30] sm:$0xff]
  %v1622 = vld [vmem:[%s8 + $0x38] sm:$0xff]
  %v1623 = vpack.c.bf16 %v1614, %v1613
  %v1625 = vlaneseq
  %v1626 = vshrl.u32 %v1625, 7
  %v1627 = vsub.s32 0, %v1626
  %v1628 = vrot.slane %v1578, %v1627
  %v1629 = vlaneseq
  %v1630 = vshrl.u32 %v1629, 7
  %v1631 = vsub.s32 1, %v1630
  %v1632 = vrot.slane %v1578, %v1631
  %v1643 = vunpack.c.l.b16 %v1615
  %v1644 = vunpack.c.h.b16 %v1615
  %v1645 = vunpack.c.l.b16 %v1616
  %v1646 = vunpack.c.h.b16 %v1616
  %v1647 = vunpack.c.l.b16 %v1617
  %v1648 = vunpack.c.h.b16 %v1617
  %v1649 = vunpack.c.l.b16 %v1618
  %v1650 = vunpack.c.h.b16 %v1618
  %v1651 = vunpack.c.l.b16 %v1619
  %v1652 = vunpack.c.h.b16 %v1619
  %v1653 = vunpack.c.l.b16 %v1620
  %v1654 = vunpack.c.h.b16 %v1620
  %v1655 = vunpack.c.l.b16 %v1621
  %v1656 = vunpack.c.h.b16 %v1621
  %v1657 = vunpack.c.l.b16 %v1622
  %v1658 = vunpack.c.h.b16 %v1622
  %v1659 = vpack.c.b16 %v1645, %v1643
  %v1660 = vpack.c.b16 %v1646, %v1644
  %v1661 = vpack.c.b16 %v1649, %v1647
  %v1662 = vpack.c.b16 %v1650, %v1648
  %v1663 = vpack.c.b16 %v1653, %v1651
  %v1664 = vpack.c.b16 %v1654, %v1652
  %v1665 = vpack.c.b16 %v1657, %v1655
  %v1666 = vpack.c.b16 %v1658, %v1656
  %v1676 = vsel %vm1020, %v1623, 0
  %1678 = vmatprep.subr.bf16.mxu0 0
  %1679 = vmatpush1.bf16.msra.mxu0 0
  %1680 = vmatprep.subr.bf16.mxu0 0
  %1681 = vmatpush1.bf16.msra.mxu0 0
  %1682 = vmatprep.subr.bf16.mxu0 0
  %1683 = vmatpush1.bf16.msra.mxu0 0
  %1684 = vmatprep.subr.bf16.mxu0 0
  %1685 = vmatpush1.bf16.msra.mxu0 0
  %1686 = vmatprep.subr.bf16.mxu0 %v1666
  %1687 = vmatpush1.bf16.msra.mxu0 %v1665
  %1688 = vmatprep.subr.bf16.mxu0 %v1664
  %1689 = vmatpush1.bf16.msra.mxu0 %v1663
  %1690 = vmatprep.subr.bf16.mxu0 %v1662
  %1691 = vmatpush1.bf16.msra.mxu0 %v1661
  %1692 = vmatprep.subr.bf16.mxu0 %v1660
  %1693 = vmatpush1.bf16.msra.mxu0 %v1659
  %1694 = vmatprep.subr.bf16.mxu0 0
  %1695 = vmatpush2.bf16.msra.mxu0 0
  %1696 = vmatprep.subr.bf16.mxu0 0
  %1697 = vmatpush2.bf16.msra.mxu0 0
  %1698 = vmatprep.subr.bf16.mxu0 0
  %1699 = vmatpush2.bf16.msra.mxu0 0
  %1700 = vmatprep.subr.bf16.mxu0 0
  %1701 = vmatpush2.bf16.msra.mxu0 0
  %1702 = vmatprep.subr.bf16.mxu0 0
  %1703 = vmatpush2.bf16.msra.mxu0 0
  %1704 = vmatprep.subr.bf16.mxu0 0
  %1705 = vmatpush2.bf16.msra.mxu0 0
  %1706 = vmatprep.subr.bf16.mxu0 0
  %1707 = vmatpush2.bf16.msra.mxu0 0
  %1708 = vmatprep.subr.bf16.mxu0 0
  %1709 = vmatpush2.bf16.msra.mxu0 0
  %1710 = vmatprep.mubr.bf16.mxu0 0
  %1711 = vmatmul.mubr.bf16.gmra.mxu0 %v1676
  %v1712 = vpop.f32.mrf.mxu0
  %v1713 = vadd.f32 %v1628, %v1712
  %v1714 = vpop.f32.mrf.mxu0
  %v1715 = vadd.f32 %v1632, %v1714
  %v1716 = vpop.f32.mrf.mxu0
  %v1717 = vadd.f32 %v1628, %v1716
  %v1718 = vpop.f32.mrf.mxu0
  %v1719 = vadd.f32 %v1632, %v1718
  %1720 = vdwg.mxu0
  %v1721 = vpack.c.bf16 %v1717, %v1713
  %v1722 = vpack.c.bf16 %v1719, %v1715
  %v1724 = vunpack.c.l.b16 %v1721
  %v1725 = vunpack.c.h.b16 %v1721
  %v1726 = vpack.c.b16 %v1724, %v1724
  %v1727 = vpack.c.b16 %v1725, %v1725
  %v1729 = vunpack.c.l.b16 %v1722
  %v1730 = vunpack.c.h.b16 %v1722
  %v1731 = vpack.c.b16 %v1729, %v1729
  %v1732 = vpack.c.b16 %v1730, %v1730
  %1733 = vrot.lane.b32.xlu0 %v1726, 64
  %v1734 = vpop.permute.xlu0 %1733
  %vm1735 = vcmask 130048
  %v1737 = vsel %vm1735, %v1726, 0
  %v1740 = vsel %vm1735, %v1734, 0
  %1742 = vmatprep.subr.bf16.mxu0 0
  %1743 = vmatpush1.bf16.xpose.msra.mxu0 0
  %1744 = vmatprep.subr.bf16.mxu0 0
  %1745 = vmatpush1.bf16.xpose.msra.mxu0 0
  %1746 = vmatprep.subr.bf16.mxu0 0
  %1747 = vmatpush1.bf16.xpose.msra.mxu0 0
  %1748 = vmatprep.subr.bf16.mxu0 0
  %1749 = vmatpush1.bf16.xpose.msra.mxu0 0
  %1750 = vmatprep.subr.bf16.mxu0 0
  %1751 = vmatpush1.bf16.xpose.msra.mxu0 0
  %1752 = vmatprep.subr.bf16.mxu0 0
  %1753 = vmatpush1.bf16.xpose.msra.mxu0 0
  %1754 = vmatprep.subr.bf16.mxu0 0
  %1755 = vmatpush1.bf16.xpose.msra.mxu0 0
  %1756 = vmatprep.subr.bf16.mxu0 0
  %1757 = vmatpush1.bf16.xpose.msra.mxu0 %v1740
  %1758 = vmatprep.subr.bf16.mxu0 0
  %1759 = vmatpush2.bf16.xpose.msra.mxu0 0
  %1760 = vmatprep.subr.bf16.mxu0 0
  %1761 = vmatpush2.bf16.xpose.msra.mxu0 0
  %1762 = vmatprep.subr.bf16.mxu0 0
  %1763 = vmatpush2.bf16.xpose.msra.mxu0 0
  %1764 = vmatprep.subr.bf16.mxu0 0
  %1765 = vmatpush2.bf16.xpose.msra.mxu0 0
  %1766 = vmatprep.subr.bf16.mxu0 0
  %1767 = vmatpush2.bf16.xpose.msra.mxu0 0
  %1768 = vmatprep.subr.bf16.mxu0 0
  %1769 = vmatpush2.bf16.xpose.msra.mxu0 0
  %1770 = vmatprep.subr.bf16.mxu0 0
  %1771 = vmatpush2.bf16.xpose.msra.mxu0 0
  %1772 = vmatprep.subr.bf16.mxu0 0
  %1773 = vmatpush2.bf16.xpose.msra.mxu0 0
  %1774 = vmatprep.mubr.bf16.mxu0 0
  %1775 = vmatmul.mubr.bf16.gmra.mxu0 %v1737
  %v1776 = vpop.f32.mrf.mxu0
  %v1777 = vadd.f32 0.0, %v1776
  %v1778 = vpop.f32.mrf.mxu0
  %v1779 = vpop.f32.mrf.mxu0
  %v1780 = vpop.f32.mrf.mxu0
  %1781 = vdwg.mxu0
  %1782 = vrot.lane.b32.xlu0 %v1727, 64
  %v1783 = vpop.permute.xlu0 %1782
  %v1785 = vsel %vm1735, %v1727, 0
  %v1788 = vsel %vm1735, %v1783, 0
  %1790 = vmatprep.subr.bf16.mxu0 0
  %1791 = vmatpush1.bf16.xpose.msra.mxu0 0
  %1792 = vmatprep.subr.bf16.mxu0 0
  %1793 = vmatpush1.bf16.xpose.msra.mxu0 0
  %1794 = vmatprep.subr.bf16.mxu0 0
  %1795 = vmatpush1.bf16.xpose.msra.mxu0 0
  %1796 = vmatprep.subr.bf16.mxu0 0
  %1797 = vmatpush1.bf16.xpose.msra.mxu0 0
  %1798 = vmatprep.subr.bf16.mxu0 0
  %1799 = vmatpush1.bf16.xpose.msra.mxu0 0
  %1800 = vmatprep.subr.bf16.mxu0 0
  %1801 = vmatpush1.bf16.xpose.msra.mxu0 0
  %1802 = vmatprep.subr.bf16.mxu0 0
  %1803 = vmatpush1.bf16.xpose.msra.mxu0 0
  %1804 = vmatprep.subr.bf16.mxu0 0
  %1805 = vmatpush1.bf16.xpose.msra.mxu0 %v1788
  %1806 = vmatprep.subr.bf16.mxu0 0
  %1807 = vmatpush2.bf16.xpose.msra.mxu0 0
  %1808 = vmatprep.subr.bf16.mxu0 0
  %1809 = vmatpush2.bf16.xpose.msra.mxu0 0
  %1810 = vmatprep.subr.bf16.mxu0 0
  %1811 = vmatpush2.bf16.xpose.msra.mxu0 0
  %1812 = vmatprep.subr.bf16.mxu0 0
  %1813 = vmatpush2.bf16.xpose.msra.mxu0 0
  %1814 = vmatprep.subr.bf16.mxu0 0
  %1815 = vmatpush2.bf16.xpose.msra.mxu0 0
  %1816 = vmatprep.subr.bf16.mxu0 0
  %1817 = vmatpush2.bf16.xpose.msra.mxu0 0
  %1818 = vmatprep.subr.bf16.mxu0 0
  %1819 = vmatpush2.bf16.xpose.msra.mxu0 0
  %1820 = vmatprep.subr.bf16.mxu0 0
  %1821 = vmatpush2.bf16.xpose.msra.mxu0 0
  %1822 = vmatprep.mubr.bf16.mxu0 0
  %1823 = vmatmul.mubr.bf16.gmra.mxu0 %v1785
  %v1824 = vpop.f32.mrf.mxu0
  %v1825 = vadd.f32 0.0, %v1824
  %v1826 = vpop.f32.mrf.mxu0
  %v1827 = vpop.f32.mrf.mxu0
  %v1828 = vpop.f32.mrf.mxu0
  %1829 = vdwg.mxu0
  %v1830 = vmul.f32 %v1777, 0.25
  %v1831 = vmul.f32 %v1825, 0.25
  %v1832 = vsel %vm1355, %v1830, -inf
  %1833 = vmax.xlane.f32.xlu0 %v1832
  %v1834 = vpop.xlane.xlu0 %1833
  %v1835 = vsel %vm1355, %v1831, -inf
  %1836 = vmax.xlane.f32.xlu0 %v1835
  %v1837 = vpop.xlane.xlu0 %1836
  %v1838 = vsub.f32 %v1830, %v1834
  %v1839 = vsub.f32 %v1831, %v1837
  %v1840 = vmul.f32 %v1838, 1.442695
  %v1841 = vpow.pop %v1840
  %v1842 = vmul.f32 %v1839, 1.442695
  %v1843 = vpow.pop %v1842
  %v1844 = vsel %vm1355, %v1841, 0.0
  %1845 = vadd.xlane.f32.xlu0 %v1844
  %v1846 = vpop.xlane.xlu0 %1845
  %v1847 = vsel %vm1355, %v1843, 0.0
  %1848 = vadd.xlane.f32.xlu0 %v1847
  %v1849 = vpop.xlane.xlu0 %1848
  %v1850 = vrcp.pop %v1846
  %v1851 = vrcp.pop %v1849
  %v1852 = vmul.f32 %v1841, %v1850
  %v1853 = vmul.f32 %v1843, %v1851
  %v1854 = vpack.c.bf16 %v1852, %v1852
  %v1855 = vpack.c.bf16 %v1853, %v1853
  %v1857 = vsel %vm1355, %v1854, 0
  %v1860 = vsel %vm622, %v1731, 0
  %1862 = vmatprep.subr.bf16.mxu0 0
  %1863 = vmatpush1.bf16.msra.mxu0 0
  %1864 = vmatprep.subr.bf16.mxu0 0
  %1865 = vmatpush1.bf16.msra.mxu0 0
  %1866 = vmatprep.subr.bf16.mxu0 0
  %1867 = vmatpush1.bf16.msra.mxu0 0
  %1868 = vmatprep.subr.bf16.mxu0 0
  %1869 = vmatpush1.bf16.msra.mxu0 0
  %1870 = vmatprep.subr.bf16.mxu0 0
  %1871 = vmatpush1.bf16.msra.mxu0 0
  %1872 = vmatprep.subr.bf16.mxu0 0
  %1873 = vmatpush1.bf16.msra.mxu0 0
  %1874 = vmatprep.subr.bf16.mxu0 0
  %1875 = vmatpush1.bf16.msra.mxu0 0
  %1876 = vmatprep.subr.bf16.mxu0 0
  %1877 = vmatpush1.bf16.msra.mxu0 %v1860
  %1878 = vmatprep.subr.bf16.mxu0 0
  %1879 = vmatpush2.bf16.msra.mxu0 0
  %1880 = vmatprep.subr.bf16.mxu0 0
  %1881 = vmatpush2.bf16.msra.mxu0 0
  %1882 = vmatprep.subr.bf16.mxu0 0
  %1883 = vmatpush2.bf16.msra.mxu0 0
  %1884 = vmatprep.subr.bf16.mxu0 0
  %1885 = vmatpush2.bf16.msra.mxu0 0
  %1886 = vmatprep.subr.bf16.mxu0 0
  %1887 = vmatpush2.bf16.msra.mxu0 0
  %1888 = vmatprep.subr.bf16.mxu0 0
  %1889 = vmatpush2.bf16.msra.mxu0 0
  %1890 = vmatprep.subr.bf16.mxu0 0
  %1891 = vmatpush2.bf16.msra.mxu0 0
  %1892 = vmatprep.subr.bf16.mxu0 0
  %1893 = vmatpush2.bf16.msra.mxu0 0
  %1894 = vmatprep.mubr.bf16.mxu0 0
  %1895 = vmatmul.mubr.bf16.gmra.mxu0 %v1857
  %v1896 = vpop.f32.mrf.mxu0
  %v1897 = vadd.f32 0.0, %v1896
  %v1898 = vpop.f32.mrf.mxu0
  %v1899 = vpop.f32.mrf.mxu0
  %v1900 = vpop.f32.mrf.mxu0
  %1901 = vdwg.mxu0
  %v1903 = vsel %vm1355, %v1855, 0
  %v1906 = vsel %vm622, %v1732, 0
  %1908 = vmatprep.subr.bf16.mxu0 0
  %1909 = vmatpush1.bf16.msra.mxu0 0
  %1910 = vmatprep.subr.bf16.mxu0 0
  %1911 = vmatpush1.bf16.msra.mxu0 0
  %1912 = vmatprep.subr.bf16.mxu0 0
  %1913 = vmatpush1.bf16.msra.mxu0 0
  %1914 = vmatprep.subr.bf16.mxu0 0
  %1915 = vmatpush1.bf16.msra.mxu0 0
  %1916 = vmatprep.subr.bf16.mxu0 0
  %1917 = vmatpush1.bf16.msra.mxu0 0
  %1918 = vmatprep.subr.bf16.mxu0 0
  %1919 = vmatpush1.bf16.msra.mxu0 0
  %1920 = vmatprep.subr.bf16.mxu0 0
  %1921 = vmatpush1.bf16.msra.mxu0 0
  %1922 = vmatprep.subr.bf16.mxu0 0
  %1923 = vmatpush1.bf16.msra.mxu0 %v1906
  %1924 = vmatprep.subr.bf16.mxu0 0
  %1925 = vmatpush2.bf16.msra.mxu0 0
  %1926 = vmatprep.subr.bf16.mxu0 0
  %1927 = vmatpush2.bf16.msra.mxu0 0
  %1928 = vmatprep.subr.bf16.mxu0 0
  %1929 = vmatpush2.bf16.msra.mxu0 0
  %1930 = vmatprep.subr.bf16.mxu0 0
  %1931 = vmatpush2.bf16.msra.mxu0 0
  %1932 = vmatprep.subr.bf16.mxu0 0
  %1933 = vmatpush2.bf16.msra.mxu0 0
  %1934 = vmatprep.subr.bf16.mxu0 0
  %1935 = vmatpush2.bf16.msra.mxu0 0
  %1936 = vmatprep.subr.bf16.mxu0 0
  %1937 = vmatpush2.bf16.msra.mxu0 0
  %1938 = vmatprep.subr.bf16.mxu0 0
  %1939 = vmatpush2.bf16.msra.mxu0 0
  %1940 = vmatprep.mubr.bf16.mxu0 0
  %1941 = vmatmul.mubr.bf16.gmra.mxu0 %v1903
  %v1942 = vpop.f32.mrf.mxu0
  %v1943 = vadd.f32 0.0, %v1942
  %v1944 = vpop.f32.mrf.mxu0
  %v1945 = vpop.f32.mrf.mxu0
  %v1946 = vpop.f32.mrf.mxu0
  %1947 = vdwg.mxu0
  %1948 = vrot.lane.b32.xlu0 %v1726, 112
  %v1949 = vpop.permute.xlu0 %1948
  %1950 = vrot.lane.b32.xlu0 %v1726, 48
  %v1951 = vpop.permute.xlu0 %1950
  %v1953 = vsel %vm1735, %v1949, 0
  %v1956 = vsel %vm1735, %v1951, 0
  %1958 = vmatprep.subr.bf16.mxu0 0
  %1959 = vmatpush1.bf16.xpose.msra.mxu0 0
  %1960 = vmatprep.subr.bf16.mxu0 0
  %1961 = vmatpush1.bf16.xpose.msra.mxu0 0
  %1962 = vmatprep.subr.bf16.mxu0 0
  %1963 = vmatpush1.bf16.xpose.msra.mxu0 0
  %1964 = vmatprep.subr.bf16.mxu0 0
  %1965 = vmatpush1.bf16.xpose.msra.mxu0 0
  %1966 = vmatprep.subr.bf16.mxu0 0
  %1967 = vmatpush1.bf16.xpose.msra.mxu0 0
  %1968 = vmatprep.subr.bf16.mxu0 0
  %1969 = vmatpush1.bf16.xpose.msra.mxu0 0
  %1970 = vmatprep.subr.bf16.mxu0 0
  %1971 = vmatpush1.bf16.xpose.msra.mxu0 0
  %1972 = vmatprep.subr.bf16.mxu0 0
  %1973 = vmatpush1.bf16.xpose.msra.mxu0 %v1956
  %1974 = vmatprep.subr.bf16.mxu0 0
  %1975 = vmatpush2.bf16.xpose.msra.mxu0 0
  %1976 = vmatprep.subr.bf16.mxu0 0
  %1977 = vmatpush2.bf16.xpose.msra.mxu0 0
  %1978 = vmatprep.subr.bf16.mxu0 0
  %1979 = vmatpush2.bf16.xpose.msra.mxu0 0
  %1980 = vmatprep.subr.bf16.mxu0 0
  %1981 = vmatpush2.bf16.xpose.msra.mxu0 0
  %1982 = vmatprep.subr.bf16.mxu0 0
  %1983 = vmatpush2.bf16.xpose.msra.mxu0 0
  %1984 = vmatprep.subr.bf16.mxu0 0
  %1985 = vmatpush2.bf16.xpose.msra.mxu0 0
  %1986 = vmatprep.subr.bf16.mxu0 0
  %1987 = vmatpush2.bf16.xpose.msra.mxu0 0
  %1988 = vmatprep.subr.bf16.mxu0 0
  %1989 = vmatpush2.bf16.xpose.msra.mxu0 0
  %1990 = vmatprep.mubr.bf16.mxu0 0
  %1991 = vmatmul.mubr.bf16.gmra.mxu0 %v1953
  %v1992 = vpop.f32.mrf.mxu0
  %v1993 = vadd.f32 0.0, %v1992
  %v1994 = vpop.f32.mrf.mxu0
  %v1995 = vpop.f32.mrf.mxu0
  %v1996 = vpop.f32.mrf.mxu0
  %1997 = vdwg.mxu0
  %1998 = vrot.lane.b32.xlu0 %v1727, 112
  %v1999 = vpop.permute.xlu0 %1998
  %2000 = vrot.lane.b32.xlu0 %v1727, 48
  %v2001 = vpop.permute.xlu0 %2000
  %v2003 = vsel %vm1735, %v1999, 0
  %v2006 = vsel %vm1735, %v2001, 0
  %2008 = vmatprep.subr.bf16.mxu0 0
  %2009 = vmatpush1.bf16.xpose.msra.mxu0 0
  %2010 = vmatprep.subr.bf16.mxu0 0
  %2011 = vmatpush1.bf16.xpose.msra.mxu0 0
  %2012 = vmatprep.subr.bf16.mxu0 0
  %2013 = vmatpush1.bf16.xpose.msra.mxu0 0
  %2014 = vmatprep.subr.bf16.mxu0 0
  %2015 = vmatpush1.bf16.xpose.msra.mxu0 0
  %2016 = vmatprep.subr.bf16.mxu0 0
  %2017 = vmatpush1.bf16.xpose.msra.mxu0 0
  %2018 = vmatprep.subr.bf16.mxu0 0
  %2019 = vmatpush1.bf16.xpose.msra.mxu0 0
  %2020 = vmatprep.subr.bf16.mxu0 0
  %2021 = vmatpush1.bf16.xpose.msra.mxu0 0
  %2022 = vmatprep.subr.bf16.mxu0 0
  %2023 = vmatpush1.bf16.xpose.msra.mxu0 %v2006
  %2024 = vmatprep.subr.bf16.mxu0 0
  %2025 = vmatpush2.bf16.xpose.msra.mxu0 0
  %2026 = vmatprep.subr.bf16.mxu0 0
  %2027 = vmatpush2.bf16.xpose.msra.mxu0 0
  %2028 = vmatprep.subr.bf16.mxu0 0
  %2029 = vmatpush2.bf16.xpose.msra.mxu0 0
  %2030 = vmatprep.subr.bf16.mxu0 0
  %2031 = vmatpush2.bf16.xpose.msra.mxu0 0
  %2032 = vmatprep.subr.bf16.mxu0 0
  %2033 = vmatpush2.bf16.xpose.msra.mxu0 0
  %2034 = vmatprep.subr.bf16.mxu0 0
  %2035 = vmatpush2.bf16.xpose.msra.mxu0 0
  %2036 = vmatprep.subr.bf16.mxu0 0
  %2037 = vmatpush2.bf16.xpose.msra.mxu0 0
  %2038 = vmatprep.subr.bf16.mxu0 0
  %2039 = vmatpush2.bf16.xpose.msra.mxu0 0
  %2040 = vmatprep.mubr.bf16.mxu0 0
  %2041 = vmatmul.mubr.bf16.gmra.mxu0 %v2003
  %v2042 = vpop.f32.mrf.mxu0
  %v2043 = vadd.f32 0.0, %v2042
  %v2044 = vpop.f32.mrf.mxu0
  %v2045 = vpop.f32.mrf.mxu0
  %v2046 = vpop.f32.mrf.mxu0
  %2047 = vdwg.mxu0
  %v2048 = vmul.f32 %v1993, 0.25
  %v2049 = vmul.f32 %v2043, 0.25
  %v2050 = vsel %vm1355, %v2048, -inf
  %2051 = vmax.xlane.f32.xlu0 %v2050
  %v2052 = vpop.xlane.xlu0 %2051
  %v2053 = vsel %vm1355, %v2049, -inf
  %2054 = vmax.xlane.f32.xlu0 %v2053
  %v2055 = vpop.xlane.xlu0 %2054
  %v2056 = vsub.f32 %v2048, %v2052
  %v2057 = vsub.f32 %v2049, %v2055
  %v2058 = vmul.f32 %v2056, 1.442695
  %v2059 = vpow.pop %v2058
  %v2060 = vmul.f32 %v2057, 1.442695
  %v2061 = vpow.pop %v2060
  %v2062 = vsel %vm1355, %v2059, 0.0
  %2063 = vadd.xlane.f32.xlu0 %v2062
  %v2064 = vpop.xlane.xlu0 %2063
  %v2065 = vsel %vm1355, %v2061, 0.0
  %2066 = vadd.xlane.f32.xlu0 %v2065
  %v2067 = vpop.xlane.xlu0 %2066
  %v2068 = vrcp.pop %v2064
  %v2069 = vrcp.pop %v2067
  %v2070 = vmul.f32 %v2059, %v2068
  %v2071 = vmul.f32 %v2061, %v2069
  %v2072 = vpack.c.bf16 %v2070, %v2070
  %v2073 = vpack.c.bf16 %v2071, %v2071
  %2074 = vrot.lane.b32.xlu0 %v1731, 112
  %v2075 = vpop.permute.xlu0 %2074
  %v2077 = vsel %vm1355, %v2072, 0
  %v2080 = vsel %vm622, %v2075, 0
  %2082 = vmatprep.subr.bf16.mxu0 0
  %2083 = vmatpush1.bf16.msra.mxu0 0
  %2084 = vmatprep.subr.bf16.mxu0 0
  %2085 = vmatpush1.bf16.msra.mxu0 0
  %2086 = vmatprep.subr.bf16.mxu0 0
  %2087 = vmatpush1.bf16.msra.mxu0 0
  %2088 = vmatprep.subr.bf16.mxu0 0
  %2089 = vmatpush1.bf16.msra.mxu0 0
  %2090 = vmatprep.subr.bf16.mxu0 0
  %2091 = vmatpush1.bf16.msra.mxu0 0
  %2092 = vmatprep.subr.bf16.mxu0 0
  %2093 = vmatpush1.bf16.msra.mxu0 0
  %2094 = vmatprep.subr.bf16.mxu0 0
  %2095 = vmatpush1.bf16.msra.mxu0 0
  %2096 = vmatprep.subr.bf16.mxu0 0
  %2097 = vmatpush1.bf16.msra.mxu0 %v2080
  %2098 = vmatprep.subr.bf16.mxu0 0
  %2099 = vmatpush2.bf16.msra.mxu0 0
  %2100 = vmatprep.subr.bf16.mxu0 0
  %2101 = vmatpush2.bf16.msra.mxu0 0
  %2102 = vmatprep.subr.bf16.mxu0 0
  %2103 = vmatpush2.bf16.msra.mxu0 0
  %2104 = vmatprep.subr.bf16.mxu0 0
  %2105 = vmatpush2.bf16.msra.mxu0 0
  %2106 = vmatprep.subr.bf16.mxu0 0
  %2107 = vmatpush2.bf16.msra.mxu0 0
  %2108 = vmatprep.subr.bf16.mxu0 0
  %2109 = vmatpush2.bf16.msra.mxu0 0
  %2110 = vmatprep.subr.bf16.mxu0 0
  %2111 = vmatpush2.bf16.msra.mxu0 0
  %2112 = vmatprep.subr.bf16.mxu0 0
  %2113 = vmatpush2.bf16.msra.mxu0 0
  %2114 = vmatprep.mubr.bf16.mxu0 0
  %2115 = vmatmul.mubr.bf16.gmra.mxu0 %v2077
  %v2116 = vpop.f32.mrf.mxu0
  %v2117 = vadd.f32 0.0, %v2116
  %v2118 = vpop.f32.mrf.mxu0
  %v2119 = vpop.f32.mrf.mxu0
  %v2120 = vpop.f32.mrf.mxu0
  %2121 = vdwg.mxu0
  %2122 = vrot.lane.b32.xlu0 %v1732, 112
  %v2123 = vpop.permute.xlu0 %2122
  %v2125 = vsel %vm1355, %v2073, 0
  %v2128 = vsel %vm622, %v2123, 0
  %2130 = vmatprep.subr.bf16.mxu0 0
  %2131 = vmatpush1.bf16.msra.mxu0 0
  %2132 = vmatprep.subr.bf16.mxu0 0
  %2133 = vmatpush1.bf16.msra.mxu0 0
  %2134 = vmatprep.subr.bf16.mxu0 0
  %2135 = vmatpush1.bf16.msra.mxu0 0
  %2136 = vmatprep.subr.bf16.mxu0 0
  %2137 = vmatpush1.bf16.msra.mxu0 0
  %2138 = vmatprep.subr.bf16.mxu0 0
  %2139 = vmatpush1.bf16.msra.mxu0 0
  %2140 = vmatprep.subr.bf16.mxu0 0
  %2141 = vmatpush1.bf16.msra.mxu0 0
  %2142 = vmatprep.subr.bf16.mxu0 0
  %2143 = vmatpush1.bf16.msra.mxu0 0
  %2144 = vmatprep.subr.bf16.mxu0 0
  %2145 = vmatpush1.bf16.msra.mxu0 %v2128
  %2146 = vmatprep.subr.bf16.mxu0 0
  %2147 = vmatpush2.bf16.msra.mxu0 0
  %2148 = vmatprep.subr.bf16.mxu0 0
  %2149 = vmatpush2.bf16.msra.mxu0 0
  %2150 = vmatprep.subr.bf16.mxu0 0
  %2151 = vmatpush2.bf16.msra.mxu0 0
  %2152 = vmatprep.subr.bf16.mxu0 0
  %2153 = vmatpush2.bf16.msra.mxu0 0
  %2154 = vmatprep.subr.bf16.mxu0 0
  %2155 = vmatpush2.bf16.msra.mxu0 0
  %2156 = vmatprep.subr.bf16.mxu0 0
  %2157 = vmatpush2.bf16.msra.mxu0 0
  %2158 = vmatprep.subr.bf16.mxu0 0
  %2159 = vmatpush2.bf16.msra.mxu0 0
  %2160 = vmatprep.subr.bf16.mxu0 0
  %2161 = vmatpush2.bf16.msra.mxu0 0
  %2162 = vmatprep.mubr.bf16.mxu0 0
  %2163 = vmatmul.mubr.bf16.gmra.mxu0 %v2125
  %v2164 = vpop.f32.mrf.mxu0
  %v2165 = vadd.f32 0.0, %v2164
  %v2166 = vpop.f32.mrf.mxu0
  %v2167 = vpop.f32.mrf.mxu0
  %v2168 = vpop.f32.mrf.mxu0
  %2169 = vdwg.mxu0
  %2170 = vrot.lane.b32.xlu0 %v1726, 96
  %v2171 = vpop.permute.xlu0 %2170
  %2172 = vrot.lane.b32.xlu0 %v1726, 32
  %v2173 = vpop.permute.xlu0 %2172
  %v2175 = vsel %vm1735, %v2171, 0
  %v2178 = vsel %vm1735, %v2173, 0
  %2180 = vmatprep.subr.bf16.mxu0 0
  %2181 = vmatpush1.bf16.xpose.msra.mxu0 0
  %2182 = vmatprep.subr.bf16.mxu0 0
  %2183 = vmatpush1.bf16.xpose.msra.mxu0 0
  %2184 = vmatprep.subr.bf16.mxu0 0
  %2185 = vmatpush1.bf16.xpose.msra.mxu0 0
  %2186 = vmatprep.subr.bf16.mxu0 0
  %2187 = vmatpush1.bf16.xpose.msra.mxu0 0
  %2188 = vmatprep.subr.bf16.mxu0 0
  %2189 = vmatpush1.bf16.xpose.msra.mxu0 0
  %2190 = vmatprep.subr.bf16.mxu0 0
  %2191 = vmatpush1.bf16.xpose.msra.mxu0 0
  %2192 = vmatprep.subr.bf16.mxu0 0
  %2193 = vmatpush1.bf16.xpose.msra.mxu0 0
  %2194 = vmatprep.subr.bf16.mxu0 0
  %2195 = vmatpush1.bf16.xpose.msra.mxu0 %v2178
  %2196 = vmatprep.subr.bf16.mxu0 0
  %2197 = vmatpush2.bf16.xpose.msra.mxu0 0
  %2198 = vmatprep.subr.bf16.mxu0 0
  %2199 = vmatpush2.bf16.xpose.msra.mxu0 0
  %2200 = vmatprep.subr.bf16.mxu0 0
  %2201 = vmatpush2.bf16.xpose.msra.mxu0 0
  %2202 = vmatprep.subr.bf16.mxu0 0
  %2203 = vmatpush2.bf16.xpose.msra.mxu0 0
  %2204 = vmatprep.subr.bf16.mxu0 0
  %2205 = vmatpush2.bf16.xpose.msra.mxu0 0
  %2206 = vmatprep.subr.bf16.mxu0 0
  %2207 = vmatpush2.bf16.xpose.msra.mxu0 0
  %2208 = vmatprep.subr.bf16.mxu0 0
  %2209 = vmatpush2.bf16.xpose.msra.mxu0 0
  %2210 = vmatprep.subr.bf16.mxu0 0
  %2211 = vmatpush2.bf16.xpose.msra.mxu0 0
  %2212 = vmatprep.mubr.bf16.mxu0 0
  %2213 = vmatmul.mubr.bf16.gmra.mxu0 %v2175
  %v2214 = vpop.f32.mrf.mxu0
  %v2215 = vadd.f32 0.0, %v2214
  %v2216 = vpop.f32.mrf.mxu0
  %v2217 = vpop.f32.mrf.mxu0
  %v2218 = vpop.f32.mrf.mxu0
  %2219 = vdwg.mxu0
  %2220 = vrot.lane.b32.xlu0 %v1727, 96
  %v2221 = vpop.permute.xlu0 %2220
  %2222 = vrot.lane.b32.xlu0 %v1727, 32
  %v2223 = vpop.permute.xlu0 %2222
  %v2225 = vsel %vm1735, %v2221, 0
  %v2228 = vsel %vm1735, %v2223, 0
  %2230 = vmatprep.subr.bf16.mxu0 0
  %2231 = vmatpush1.bf16.xpose.msra.mxu0 0
  %2232 = vmatprep.subr.bf16.mxu0 0
  %2233 = vmatpush1.bf16.xpose.msra.mxu0 0
  %2234 = vmatprep.subr.bf16.mxu0 0
  %2235 = vmatpush1.bf16.xpose.msra.mxu0 0
  %2236 = vmatprep.subr.bf16.mxu0 0
  %2237 = vmatpush1.bf16.xpose.msra.mxu0 0
  %2238 = vmatprep.subr.bf16.mxu0 0
  %2239 = vmatpush1.bf16.xpose.msra.mxu0 0
  %2240 = vmatprep.subr.bf16.mxu0 0
  %2241 = vmatpush1.bf16.xpose.msra.mxu0 0
  %2242 = vmatprep.subr.bf16.mxu0 0
  %2243 = vmatpush1.bf16.xpose.msra.mxu0 0
  %2244 = vmatprep.subr.bf16.mxu0 0
  %2245 = vmatpush1.bf16.xpose.msra.mxu0 %v2228
  %2246 = vmatprep.subr.bf16.mxu0 0
  %2247 = vmatpush2.bf16.xpose.msra.mxu0 0
  %2248 = vmatprep.subr.bf16.mxu0 0
  %2249 = vmatpush2.bf16.xpose.msra.mxu0 0
  %2250 = vmatprep.subr.bf16.mxu0 0
  %2251 = vmatpush2.bf16.xpose.msra.mxu0 0
  %2252 = vmatprep.subr.bf16.mxu0 0
  %2253 = vmatpush2.bf16.xpose.msra.mxu0 0
  %2254 = vmatprep.subr.bf16.mxu0 0
  %2255 = vmatpush2.bf16.xpose.msra.mxu0 0
  %2256 = vmatprep.subr.bf16.mxu0 0
  %2257 = vmatpush2.bf16.xpose.msra.mxu0 0
  %2258 = vmatprep.subr.bf16.mxu0 0
  %2259 = vmatpush2.bf16.xpose.msra.mxu0 0
  %2260 = vmatprep.subr.bf16.mxu0 0
  %2261 = vmatpush2.bf16.xpose.msra.mxu0 0
  %2262 = vmatprep.mubr.bf16.mxu0 0
  %2263 = vmatmul.mubr.bf16.gmra.mxu0 %v2225
  %v2264 = vpop.f32.mrf.mxu0
  %v2265 = vadd.f32 0.0, %v2264
  %v2266 = vpop.f32.mrf.mxu0
  %v2267 = vpop.f32.mrf.mxu0
  %v2268 = vpop.f32.mrf.mxu0
  %2269 = vdwg.mxu0
  %v2270 = vmul.f32 %v2215, 0.25
  %v2271 = vmul.f32 %v2265, 0.25
  %v2272 = vsel %vm1355, %v2270, -inf
  %2273 = vmax.xlane.f32.xlu0 %v2272
  %v2274 = vpop.xlane.xlu0 %2273
  %v2275 = vsel %vm1355, %v2271, -inf
  %2276 = vmax.xlane.f32.xlu0 %v2275
  %v2277 = vpop.xlane.xlu0 %2276
  %v2278 = vsub.f32 %v2270, %v2274
  %v2279 = vsub.f32 %v2271, %v2277
  %v2280 = vmul.f32 %v2278, 1.442695
  %v2281 = vpow.pop %v2280
  %v2282 = vmul.f32 %v2279, 1.442695
  %v2283 = vpow.pop %v2282
  %v2284 = vsel %vm1355, %v2281, 0.0
  %2285 = vadd.xlane.f32.xlu0 %v2284
  %v2286 = vpop.xlane.xlu0 %2285
  %v2287 = vsel %vm1355, %v2283, 0.0
  %2288 = vadd.xlane.f32.xlu0 %v2287
  %v2289 = vpop.xlane.xlu0 %2288
  %v2290 = vrcp.pop %v2286
  %v2291 = vrcp.pop %v2289
  %v2292 = vmul.f32 %v2281, %v2290
  %v2293 = vmul.f32 %v2283, %v2291
  %v2294 = vpack.c.bf16 %v2292, %v2292
  %v2295 = vpack.c.bf16 %v2293, %v2293
  %2296 = vrot.lane.b32.xlu0 %v1731, 96
  %v2297 = vpop.permute.xlu0 %2296
  %v2299 = vsel %vm1355, %v2294, 0
  %v2302 = vsel %vm622, %v2297, 0
  %2304 = vmatprep.subr.bf16.mxu0 0
  %2305 = vmatpush1.bf16.msra.mxu0 0
  %2306 = vmatprep.subr.bf16.mxu0 0
  %2307 = vmatpush1.bf16.msra.mxu0 0
  %2308 = vmatprep.subr.bf16.mxu0 0
  %2309 = vmatpush1.bf16.msra.mxu0 0
  %2310 = vmatprep.subr.bf16.mxu0 0
  %2311 = vmatpush1.bf16.msra.mxu0 0
  %2312 = vmatprep.subr.bf16.mxu0 0
  %2313 = vmatpush1.bf16.msra.mxu0 0
  %2314 = vmatprep.subr.bf16.mxu0 0
  %2315 = vmatpush1.bf16.msra.mxu0 0
  %2316 = vmatprep.subr.bf16.mxu0 0
  %2317 = vmatpush1.bf16.msra.mxu0 0
  %2318 = vmatprep.subr.bf16.mxu0 0
  %2319 = vmatpush1.bf16.msra.mxu0 %v2302
  %2320 = vmatprep.subr.bf16.mxu0 0
  %2321 = vmatpush2.bf16.msra.mxu0 0
  %2322 = vmatprep.subr.bf16.mxu0 0
  %2323 = vmatpush2.bf16.msra.mxu0 0
  %2324 = vmatprep.subr.bf16.mxu0 0
  %2325 = vmatpush2.bf16.msra.mxu0 0
  %2326 = vmatprep.subr.bf16.mxu0 0
  %2327 = vmatpush2.bf16.msra.mxu0 0
  %2328 = vmatprep.subr.bf16.mxu0 0
  %2329 = vmatpush2.bf16.msra.mxu0 0
  %2330 = vmatprep.subr.bf16.mxu0 0
  %2331 = vmatpush2.bf16.msra.mxu0 0
  %2332 = vmatprep.subr.bf16.mxu0 0
  %2333 = vmatpush2.bf16.msra.mxu0 0
  %2334 = vmatprep.subr.bf16.mxu0 0
  %2335 = vmatpush2.bf16.msra.mxu0 0
  %2336 = vmatprep.mubr.bf16.mxu0 0
  %2337 = vmatmul.mubr.bf16.gmra.mxu0 %v2299
  %v2338 = vpop.f32.mrf.mxu0
  %v2339 = vadd.f32 0.0, %v2338
  %v2340 = vpop.f32.mrf.mxu0
  %v2341 = vpop.f32.mrf.mxu0
  %v2342 = vpop.f32.mrf.mxu0
  %2343 = vdwg.mxu0
  %2344 = vrot.lane.b32.xlu0 %v1732, 96
  %v2345 = vpop.permute.xlu0 %2344
  %v2347 = vsel %vm1355, %v2295, 0
  %v2350 = vsel %vm622, %v2345, 0
  %2352 = vmatprep.subr.bf16.mxu0 0
  %2353 = vmatpush1.bf16.msra.mxu0 0
  %2354 = vmatprep.subr.bf16.mxu0 0
  %2355 = vmatpush1.bf16.msra.mxu0 0
  %2356 = vmatprep.subr.bf16.mxu0 0
  %2357 = vmatpush1.bf16.msra.mxu0 0
  %2358 = vmatprep.subr.bf16.mxu0 0
  %2359 = vmatpush1.bf16.msra.mxu0 0
  %2360 = vmatprep.subr.bf16.mxu0 0
  %2361 = vmatpush1.bf16.msra.mxu0 0
  %2362 = vmatprep.subr.bf16.mxu0 0
  %2363 = vmatpush1.bf16.msra.mxu0 0
  %2364 = vmatprep.subr.bf16.mxu0 0
  %2365 = vmatpush1.bf16.msra.mxu0 0
  %2366 = vmatprep.subr.bf16.mxu0 0
  %2367 = vmatpush1.bf16.msra.mxu0 %v2350
  %2368 = vmatprep.subr.bf16.mxu0 0
  %2369 = vmatpush2.bf16.msra.mxu0 0
  %2370 = vmatprep.subr.bf16.mxu0 0
  %2371 = vmatpush2.bf16.msra.mxu0 0
  %2372 = vmatprep.subr.bf16.mxu0 0
  %2373 = vmatpush2.bf16.msra.mxu0 0
  %2374 = vmatprep.subr.bf16.mxu0 0
  %2375 = vmatpush2.bf16.msra.mxu0 0
  %2376 = vmatprep.subr.bf16.mxu0 0
  %2377 = vmatpush2.bf16.msra.mxu0 0
  %2378 = vmatprep.subr.bf16.mxu0 0
  %2379 = vmatpush2.bf16.msra.mxu0 0
  %2380 = vmatprep.subr.bf16.mxu0 0
  %2381 = vmatpush2.bf16.msra.mxu0 0
  %2382 = vmatprep.subr.bf16.mxu0 0
  %2383 = vmatpush2.bf16.msra.mxu0 0
  %2384 = vmatprep.mubr.bf16.mxu0 0
  %2385 = vmatmul.mubr.bf16.gmra.mxu0 %v2347
  %v2386 = vpop.f32.mrf.mxu0
  %v2387 = vadd.f32 0.0, %v2386
  %v2388 = vpop.f32.mrf.mxu0
  %v2389 = vpop.f32.mrf.mxu0
  %v2390 = vpop.f32.mrf.mxu0
  %2391 = vdwg.mxu0
  %2392 = vrot.lane.b32.xlu0 %v1726, 80
  %v2393 = vpop.permute.xlu0 %2392
  %2394 = vrot.lane.b32.xlu0 %v1726, 16
  %v2395 = vpop.permute.xlu0 %2394
  %v2397 = vsel %vm1735, %v2393, 0
  %v2400 = vsel %vm1735, %v2395, 0
  %2402 = vmatprep.subr.bf16.mxu0 0
  %2403 = vmatpush1.bf16.xpose.msra.mxu0 0
  %2404 = vmatprep.subr.bf16.mxu0 0
  %2405 = vmatpush1.bf16.xpose.msra.mxu0 0
  %2406 = vmatprep.subr.bf16.mxu0 0
  %2407 = vmatpush1.bf16.xpose.msra.mxu0 0
  %2408 = vmatprep.subr.bf16.mxu0 0
  %2409 = vmatpush1.bf16.xpose.msra.mxu0 0
  %2410 = vmatprep.subr.bf16.mxu0 0
  %2411 = vmatpush1.bf16.xpose.msra.mxu0 0
  %2412 = vmatprep.subr.bf16.mxu0 0
  %2413 = vmatpush1.bf16.xpose.msra.mxu0 0
  %2414 = vmatprep.subr.bf16.mxu0 0
  %2415 = vmatpush1.bf16.xpose.msra.mxu0 0
  %2416 = vmatprep.subr.bf16.mxu0 0
  %2417 = vmatpush1.bf16.xpose.msra.mxu0 %v2400
  %2418 = vmatprep.subr.bf16.mxu0 0
  %2419 = vmatpush2.bf16.xpose.msra.mxu0 0
  %2420 = vmatprep.subr.bf16.mxu0 0
  %2421 = vmatpush2.bf16.xpose.msra.mxu0 0
  %2422 = vmatprep.subr.bf16.mxu0 0
  %2423 = vmatpush2.bf16.xpose.msra.mxu0 0
  %2424 = vmatprep.subr.bf16.mxu0 0
  %2425 = vmatpush2.bf16.xpose.msra.mxu0 0
  %2426 = vmatprep.subr.bf16.mxu0 0
  %2427 = vmatpush2.bf16.xpose.msra.mxu0 0
  %2428 = vmatprep.subr.bf16.mxu0 0
  %2429 = vmatpush2.bf16.xpose.msra.mxu0 0
  %2430 = vmatprep.subr.bf16.mxu0 0
  %2431 = vmatpush2.bf16.xpose.msra.mxu0 0
  %2432 = vmatprep.subr.bf16.mxu0 0
  %2433 = vmatpush2.bf16.xpose.msra.mxu0 0
  %2434 = vmatprep.mubr.bf16.mxu0 0
  %2435 = vmatmul.mubr.bf16.gmra.mxu0 %v2397
  %v2436 = vpop.f32.mrf.mxu0
  %v2437 = vadd.f32 0.0, %v2436
  %v2438 = vpop.f32.mrf.mxu0
  %v2439 = vpop.f32.mrf.mxu0
  %v2440 = vpop.f32.mrf.mxu0
  %2441 = vdwg.mxu0
  %2442 = vrot.lane.b32.xlu0 %v1727, 80
  %v2443 = vpop.permute.xlu0 %2442
  %2444 = vrot.lane.b32.xlu0 %v1727, 16
  %v2445 = vpop.permute.xlu0 %2444
  %v2447 = vsel %vm1735, %v2443, 0
  %v2450 = vsel %vm1735, %v2445, 0
  %2452 = vmatprep.subr.bf16.mxu0 0
  %2453 = vmatpush1.bf16.xpose.msra.mxu0 0
  %2454 = vmatprep.subr.bf16.mxu0 0
  %2455 = vmatpush1.bf16.xpose.msra.mxu0 0
  %2456 = vmatprep.subr.bf16.mxu0 0
  %2457 = vmatpush1.bf16.xpose.msra.mxu0 0
  %2458 = vmatprep.subr.bf16.mxu0 0
  %2459 = vmatpush1.bf16.xpose.msra.mxu0 0
  %2460 = vmatprep.subr.bf16.mxu0 0
  %2461 = vmatpush1.bf16.xpose.msra.mxu0 0
  %2462 = vmatprep.subr.bf16.mxu0 0
  %2463 = vmatpush1.bf16.xpose.msra.mxu0 0
  %2464 = vmatprep.subr.bf16.mxu0 0
  %2465 = vmatpush1.bf16.xpose.msra.mxu0 0
  %2466 = vmatprep.subr.bf16.mxu0 0
  %2467 = vmatpush1.bf16.xpose.msra.mxu0 %v2450
  %2468 = vmatprep.subr.bf16.mxu0 0
  %2469 = vmatpush2.bf16.xpose.msra.mxu0 0
  %2470 = vmatprep.subr.bf16.mxu0 0
  %2471 = vmatpush2.bf16.xpose.msra.mxu0 0
  %2472 = vmatprep.subr.bf16.mxu0 0
  %2473 = vmatpush2.bf16.xpose.msra.mxu0 0
  %2474 = vmatprep.subr.bf16.mxu0 0
  %2475 = vmatpush2.bf16.xpose.msra.mxu0 0
  %2476 = vmatprep.subr.bf16.mxu0 0
  %2477 = vmatpush2.bf16.xpose.msra.mxu0 0
  %2478 = vmatprep.subr.bf16.mxu0 0
  %2479 = vmatpush2.bf16.xpose.msra.mxu0 0
  %2480 = vmatprep.subr.bf16.mxu0 0
  %2481 = vmatpush2.bf16.xpose.msra.mxu0 0
  %2482 = vmatprep.subr.bf16.mxu0 0
  %2483 = vmatpush2.bf16.xpose.msra.mxu0 0
  %2484 = vmatprep.mubr.bf16.mxu0 0
  %2485 = vmatmul.mubr.bf16.gmra.mxu0 %v2447
  %v2486 = vpop.f32.mrf.mxu0
  %v2487 = vadd.f32 0.0, %v2486
  %v2488 = vpop.f32.mrf.mxu0
  %v2489 = vpop.f32.mrf.mxu0
  %v2490 = vpop.f32.mrf.mxu0
  %2491 = vdwg.mxu0
  %v2492 = vmul.f32 %v2437, 0.25
  %v2493 = vmul.f32 %v2487, 0.25
  %v2494 = vsel %vm1355, %v2492, -inf
  %2495 = vmax.xlane.f32.xlu0 %v2494
  %v2496 = vpop.xlane.xlu0 %2495
  %v2497 = vsel %vm1355, %v2493, -inf
  %2498 = vmax.xlane.f32.xlu0 %v2497
  %v2499 = vpop.xlane.xlu0 %2498
  %v2500 = vsub.f32 %v2492, %v2496
  %v2501 = vsub.f32 %v2493, %v2499
  %v2502 = vmul.f32 %v2500, 1.442695
  %v2503 = vpow.pop %v2502
  %v2504 = vmul.f32 %v2501, 1.442695
  %v2505 = vpow.pop %v2504
  %v2506 = vsel %vm1355, %v2503, 0.0
  %2507 = vadd.xlane.f32.xlu0 %v2506
  %v2508 = vpop.xlane.xlu0 %2507
  %v2509 = vsel %vm1355, %v2505, 0.0
  %2510 = vadd.xlane.f32.xlu0 %v2509
  %v2511 = vpop.xlane.xlu0 %2510
  %v2512 = vrcp.pop %v2508
  %v2513 = vrcp.pop %v2511
  %v2514 = vmul.f32 %v2503, %v2512
  %v2515 = vmul.f32 %v2505, %v2513
  %v2516 = vpack.c.bf16 %v2514, %v2514
  %v2517 = vpack.c.bf16 %v2515, %v2515
  %2518 = vrot.lane.b32.xlu0 %v1731, 80
  %v2519 = vpop.permute.xlu0 %2518
  %v2521 = vsel %vm1355, %v2516, 0
  %v2524 = vsel %vm622, %v2519, 0
  %2526 = vmatprep.subr.bf16.mxu0 0
  %2527 = vmatpush1.bf16.msra.mxu0 0
  %2528 = vmatprep.subr.bf16.mxu0 0
  %2529 = vmatpush1.bf16.msra.mxu0 0
  %2530 = vmatprep.subr.bf16.mxu0 0
  %2531 = vmatpush1.bf16.msra.mxu0 0
  %2532 = vmatprep.subr.bf16.mxu0 0
  %2533 = vmatpush1.bf16.msra.mxu0 0
  %2534 = vmatprep.subr.bf16.mxu0 0
  %2535 = vmatpush1.bf16.msra.mxu0 0
  %2536 = vmatprep.subr.bf16.mxu0 0
  %2537 = vmatpush1.bf16.msra.mxu0 0
  %2538 = vmatprep.subr.bf16.mxu0 0
  %2539 = vmatpush1.bf16.msra.mxu0 0
  %2540 = vmatprep.subr.bf16.mxu0 0
  %2541 = vmatpush1.bf16.msra.mxu0 %v2524
  %2542 = vmatprep.subr.bf16.mxu0 0
  %2543 = vmatpush2.bf16.msra.mxu0 0
  %2544 = vmatprep.subr.bf16.mxu0 0
  %2545 = vmatpush2.bf16.msra.mxu0 0
  %2546 = vmatprep.subr.bf16.mxu0 0
  %2547 = vmatpush2.bf16.msra.mxu0 0
  %2548 = vmatprep.subr.bf16.mxu0 0
  %2549 = vmatpush2.bf16.msra.mxu0 0
  %2550 = vmatprep.subr.bf16.mxu0 0
  %2551 = vmatpush2.bf16.msra.mxu0 0
  %2552 = vmatprep.subr.bf16.mxu0 0
  %2553 = vmatpush2.bf16.msra.mxu0 0
  %2554 = vmatprep.subr.bf16.mxu0 0
  %2555 = vmatpush2.bf16.msra.mxu0 0
  %2556 = vmatprep.subr.bf16.mxu0 0
  %2557 = vmatpush2.bf16.msra.mxu0 0
  %2558 = vmatprep.mubr.bf16.mxu0 0
  %2559 = vmatmul.mubr.bf16.gmra.mxu0 %v2521
  %v2560 = vpop.f32.mrf.mxu0
  %v2561 = vadd.f32 0.0, %v2560
  %v2562 = vpop.f32.mrf.mxu0
  %v2563 = vpop.f32.mrf.mxu0
  %v2564 = vpop.f32.mrf.mxu0
  %2565 = vdwg.mxu0
  %2566 = vrot.lane.b32.xlu0 %v1732, 80
  %v2567 = vpop.permute.xlu0 %2566
  %v2569 = vsel %vm1355, %v2517, 0
  %v2572 = vsel %vm622, %v2567, 0
  %2574 = vmatprep.subr.bf16.mxu0 0
  %2575 = vmatpush1.bf16.msra.mxu0 0
  %2576 = vmatprep.subr.bf16.mxu0 0
  %2577 = vmatpush1.bf16.msra.mxu0 0
  %2578 = vmatprep.subr.bf16.mxu0 0
  %2579 = vmatpush1.bf16.msra.mxu0 0
  %2580 = vmatprep.subr.bf16.mxu0 0
  %2581 = vmatpush1.bf16.msra.mxu0 0
  %2582 = vmatprep.subr.bf16.mxu0 0
  %2583 = vmatpush1.bf16.msra.mxu0 0
  %2584 = vmatprep.subr.bf16.mxu0 0
  %2585 = vmatpush1.bf16.msra.mxu0 0
  %2586 = vmatprep.subr.bf16.mxu0 0
  %2587 = vmatpush1.bf16.msra.mxu0 0
  %2588 = vmatprep.subr.bf16.mxu0 0
  %2589 = vmatpush1.bf16.msra.mxu0 %v2572
  %2590 = vmatprep.subr.bf16.mxu0 0
  %2591 = vmatpush2.bf16.msra.mxu0 0
  %2592 = vmatprep.subr.bf16.mxu0 0
  %2593 = vmatpush2.bf16.msra.mxu0 0
  %2594 = vmatprep.subr.bf16.mxu0 0
  %2595 = vmatpush2.bf16.msra.mxu0 0
  %2596 = vmatprep.subr.bf16.mxu0 0
  %2597 = vmatpush2.bf16.msra.mxu0 0
  %2598 = vmatprep.subr.bf16.mxu0 0
  %2599 = vmatpush2.bf16.msra.mxu0 0
  %2600 = vmatprep.subr.bf16.mxu0 0
  %2601 = vmatpush2.bf16.msra.mxu0 0
  %2602 = vmatprep.subr.bf16.mxu0 0
  %2603 = vmatpush2.bf16.msra.mxu0 0
  %2604 = vmatprep.subr.bf16.mxu0 0
  %2605 = vmatpush2.bf16.msra.mxu0 0
  %2606 = vmatprep.mubr.bf16.mxu0 0
  %2607 = vmatmul.mubr.bf16.gmra.mxu0 %v2569
  %v2608 = vpop.f32.mrf.mxu0
  %v2609 = vadd.f32 0.0, %v2608
  %v2610 = vpop.f32.mrf.mxu0
  %v2611 = vpop.f32.mrf.mxu0
  %v2612 = vpop.f32.mrf.mxu0
  %2613 = vdwg.mxu0
  %2616 = vrot.lane.b32.xlu0 %v2117, 16
  %v2617 = vpop.permute.xlu0 %2616
  %2618 = vrot.lane.b32.xlu0 %v2165, 16
  %v2619 = vpop.permute.xlu0 %2618
  %2624 = vrot.lane.b32.xlu0 %v2339, 32
  %v2625 = vpop.permute.xlu0 %2624
  %2626 = vrot.lane.b32.xlu0 %v2387, 32
  %v2627 = vpop.permute.xlu0 %2626
  %2632 = vrot.lane.b32.xlu0 %v2561, 48
  %v2633 = vpop.permute.xlu0 %2632
  %2634 = vrot.lane.b32.xlu0 %v2609, 48
  %v2635 = vpop.permute.xlu0 %2634
  %v2638 = vsel %vm1735, %v1897, %v2617
  %v2639 = vsel %vm1735, %v1943, %v2619
  %vm2640 = vcmask 261120
  %v2641 = vsel %vm2640, %v2638, %v2625
  %v2642 = vsel %vm2640, %v2639, %v2627
  %vm2643 = vcmask 392192
  %v2644 = vsel %vm2643, %v2641, %v2633
  %v2645 = vsel %vm2643, %v2642, %v2635
  %v2646 = vld [vmem:[%s9] sm:$0xf]
  %v2647 = vld [vmem:[%s9 + $0x4] sm:$0xf]
  %v2648 = vld [vmem:[%s9 + $0x8] sm:$0xf]
  %v2649 = vld [vmem:[%s9 + $0xc] sm:$0xf]
  %v2650 = vld [vmem:[%s9 + $0x10] sm:$0xf]
  %v2651 = vld [vmem:[%s9 + $0x14] sm:$0xf]
  %v2652 = vld [vmem:[%s9 + $0x18] sm:$0xf]
  %v2653 = vld [vmem:[%s9 + $0x1c] sm:$0xf]
  %v2654 = vpack.c.bf16 %v2645, %v2644
  %v2663 = vunpack.c.l.b16 %v2646
  %v2664 = vunpack.c.l.b16 %v2647
  %v2665 = vunpack.c.l.b16 %v2648
  %v2666 = vunpack.c.l.b16 %v2649
  %v2667 = vunpack.c.l.b16 %v2650
  %v2668 = vunpack.c.l.b16 %v2651
  %v2669 = vunpack.c.l.b16 %v2652
  %v2670 = vunpack.c.l.b16 %v2653
  %v2671 = vpack.c.b16 %v2664, %v2663
  %v2672 = vpack.c.b16 %v2666, %v2665
  %v2673 = vpack.c.b16 %v2668, %v2667
  %v2674 = vpack.c.b16 %v2670, %v2669
  %v2680 = vsel %vm1020, %v2654, 0
  %2682 = vmatprep.subr.bf16.mxu0 0
  %2683 = vmatpush1.bf16.msra.mxu0 0
  %2684 = vmatprep.subr.bf16.mxu0 0
  %2685 = vmatpush1.bf16.msra.mxu0 0
  %2686 = vmatprep.subr.bf16.mxu0 0
  %2687 = vmatpush1.bf16.msra.mxu0 0
  %2688 = vmatprep.subr.bf16.mxu0 0
  %2689 = vmatpush1.bf16.msra.mxu0 0
  %2690 = vmatprep.subr.bf16.mxu0 0
  %2691 = vmatpush1.bf16.msra.mxu0 %v2674
  %2692 = vmatprep.subr.bf16.mxu0 0
  %2693 = vmatpush1.bf16.msra.mxu0 %v2673
  %2694 = vmatprep.subr.bf16.mxu0 0
  %2695 = vmatpush1.bf16.msra.mxu0 %v2672
  %2696 = vmatprep.subr.bf16.mxu0 0
  %2697 = vmatpush1.bf16.msra.mxu0 %v2671
  %2698 = vmatprep.subr.bf16.mxu0 0
  %2699 = vmatpush2.bf16.msra.mxu0 0
  %2700 = vmatprep.subr.bf16.mxu0 0
  %2701 = vmatpush2.bf16.msra.mxu0 0
  %2702 = vmatprep.subr.bf16.mxu0 0
  %2703 = vmatpush2.bf16.msra.mxu0 0
  %2704 = vmatprep.subr.bf16.mxu0 0
  %2705 = vmatpush2.bf16.msra.mxu0 0
  %2706 = vmatprep.subr.bf16.mxu0 0
  %2707 = vmatpush2.bf16.msra.mxu0 0
  %2708 = vmatprep.subr.bf16.mxu0 0
  %2709 = vmatpush2.bf16.msra.mxu0 0
  %2710 = vmatprep.subr.bf16.mxu0 0
  %2711 = vmatpush2.bf16.msra.mxu0 0
  %2712 = vmatprep.subr.bf16.mxu0 0
  %2713 = vmatpush2.bf16.msra.mxu0 0
  %2714 = vmatprep.mubr.bf16.mxu0 0
  %2715 = vmatmul.mubr.bf16.gmra.mxu0 %v2680
  %v2716 = vpop.f32.mrf.mxu0
  %v2717 = vadd.f32 0.0, %v2716
  %v2718 = vpop.f32.mrf.mxu0
  %v2719 = vpop.f32.mrf.mxu0
  %v2720 = vadd.f32 0.0, %v2719
  %v2721 = vpop.f32.mrf.mxu0
  %2722 = vdwg.mxu0
  %v2723 = vadd.f32 %v1569, %v2717
  %v2724 = vadd.f32 %v1572, %v2720
  %v2725 = vadd.f32 %v2723, %v1579
  %v2726 = vadd.f32 %v2724, %v1579
  %v2727 = vsel %vm1020, %v2725, 0.0
  %2728 = vadd.xlane.f32.xlu0 %v2727
  %v2729 = vpop.xlane.xlu0 %2728
  %v2730 = vsel %vm1020, %v2726, 0.0
  %2731 = vadd.xlane.f32.xlu0 %v2730
  %v2732 = vpop.xlane.xlu0 %2731
  %v2733 = vmul.f32 %v2729, %v1590
  %v2734 = vmul.f32 %v2732, %v1590
  %v2735 = vsub.f32 %v2725, %v2733
  %v2736 = vsub.f32 %v2726, %v2734
  %v2737 = vmul.f32 %v2735, %v2735
  %v2738 = vmul.f32 %v2736, %v2736
  %v2739 = vsel %vm1020, %v2737, 0.0
  %2740 = vadd.xlane.f32.xlu0 %v2739
  %v2741 = vpop.xlane.xlu0 %2740
  %v2742 = vsel %vm1020, %v2738, 0.0
  %2743 = vadd.xlane.f32.xlu0 %v2742
  %v2744 = vpop.xlane.xlu0 %2743
  %v2745 = vmul.f32 %v2741, %v1590
  %v2746 = vmul.f32 %v2744, %v1590
  %v2747 = vadd.f32 %v2745, 1e-05
  %v2748 = vadd.f32 %v2746, 1e-05
  %v2749 = vrsqrt.pop %v2747
  %v2750 = vrsqrt.pop %v2748
  %v2751 = vmul.f32 %v2735, %v2749
  %v2752 = vmul.f32 %v2736, %v2750
  %v2753 = vmul.f32 %v2751, %v1580
  %v2754 = vmul.f32 %v2752, %v1580
  %v2755 = vadd.f32 %v2753, %v1581
  %v2756 = vadd.f32 %v2754, %v1581
  %v2757 = vld [vmem:[%s10] sm:$0xf]
  %v2758 = vld [vmem:[%s10 + $0x4] sm:$0xf]
  %v2759 = vld [vmem:[%s10 + $0x8] sm:$0xf]
  %v2760 = vld [vmem:[%s10 + $0xc] sm:$0xf]
  %v2761 = vld [vmem:[%s10 + $0x10] sm:$0xf]
  %v2762 = vld [vmem:[%s10 + $0x14] sm:$0xf]
  %v2763 = vld [vmem:[%s10 + $0x18] sm:$0xf]
  %v2764 = vld [vmem:[%s10 + $0x1c] sm:$0xf]
  %v2765 = vpack.c.bf16 %v2756, %v2755
  %v2774 = vunpack.c.l.b16 %v2757
  %v2775 = vunpack.c.l.b16 %v2758
  %v2776 = vunpack.c.l.b16 %v2759
  %v2777 = vunpack.c.l.b16 %v2760
  %v2778 = vunpack.c.l.b16 %v2761
  %v2779 = vunpack.c.l.b16 %v2762
  %v2780 = vunpack.c.l.b16 %v2763
  %v2781 = vunpack.c.l.b16 %v2764
  %v2782 = vpack.c.b16 %v2775, %v2774
  %v2783 = vpack.c.b16 %v2777, %v2776
  %v2784 = vpack.c.b16 %v2779, %v2778
  %v2785 = vpack.c.b16 %v2781, %v2780
  %v2791 = vsel %vm1020, %v2765, 0
  %2793 = vmatprep.subr.bf16.mxu0 0
  %2794 = vmatpush1.bf16.msra.mxu0 0
  %2795 = vmatprep.subr.bf16.mxu0 0
  %2796 = vmatpush1.bf16.msra.mxu0 0
  %2797 = vmatprep.subr.bf16.mxu0 0
  %2798 = vmatpush1.bf16.msra.mxu0 0
  %2799 = vmatprep.subr.bf16.mxu0 0
  %2800 = vmatpush1.bf16.msra.mxu0 0
  %2801 = vmatprep.subr.bf16.mxu0 0
  %2802 = vmatpush1.bf16.msra.mxu0 %v2785
  %2803 = vmatprep.subr.bf16.mxu0 0
  %2804 = vmatpush1.bf16.msra.mxu0 %v2784
  %2805 = vmatprep.subr.bf16.mxu0 0
  %2806 = vmatpush1.bf16.msra.mxu0 %v2783
  %2807 = vmatprep.subr.bf16.mxu0 0
  %2808 = vmatpush1.bf16.msra.mxu0 %v2782
  %2809 = vmatprep.subr.bf16.mxu0 0
  %2810 = vmatpush2.bf16.msra.mxu0 0
  %2811 = vmatprep.subr.bf16.mxu0 0
  %2812 = vmatpush2.bf16.msra.mxu0 0
  %2813 = vmatprep.subr.bf16.mxu0 0
  %2814 = vmatpush2.bf16.msra.mxu0 0
  %2815 = vmatprep.subr.bf16.mxu0 0
  %2816 = vmatpush2.bf16.msra.mxu0 0
  %2817 = vmatprep.subr.bf16.mxu0 0
  %2818 = vmatpush2.bf16.msra.mxu0 0
  %2819 = vmatprep.subr.bf16.mxu0 0
  %2820 = vmatpush2.bf16.msra.mxu0 0
  %2821 = vmatprep.subr.bf16.mxu0 0
  %2822 = vmatpush2.bf16.msra.mxu0 0
  %2823 = vmatprep.subr.bf16.mxu0 0
  %2824 = vmatpush2.bf16.msra.mxu0 0
  %2825 = vmatprep.mubr.bf16.mxu0 0
  %2826 = vmatmul.mubr.bf16.gmra.mxu0 %v2791
  %v2827 = vpop.f32.mrf.mxu0
  %v2828 = vadd.f32 %v1582, %v2827
  %v2829 = vpop.f32.mrf.mxu0
  %v2830 = vpop.f32.mrf.mxu0
  %v2831 = vadd.f32 %v1582, %v2830
  %v2832 = vpop.f32.mrf.mxu0
  %2833 = vdwg.mxu0
  %v2834 = vmax.f32 %v2828, 0.0
  %v2835 = vmax.f32 %v2831, 0.0
  %v2836 = vld [vmem:[%s11] sm:$0xf]
  %v2837 = vld [vmem:[%s11 + $0x4] sm:$0xf]
  %v2838 = vld [vmem:[%s11 + $0x8] sm:$0xf]
  %v2839 = vld [vmem:[%s11 + $0xc] sm:$0xf]
  %v2840 = vld [vmem:[%s11 + $0x10] sm:$0xf]
  %v2841 = vld [vmem:[%s11 + $0x14] sm:$0xf]
  %v2842 = vld [vmem:[%s11 + $0x18] sm:$0xf]
  %v2843 = vld [vmem:[%s11 + $0x1c] sm:$0xf]
  %v2844 = vld [vmem:[%s11 + $0x20] sm:$0xf]
  %v2845 = vld [vmem:[%s11 + $0x24] sm:$0xf]
  %v2846 = vld [vmem:[%s11 + $0x28] sm:$0xf]
  %v2847 = vld [vmem:[%s11 + $0x2c] sm:$0xf]
  %v2848 = vld [vmem:[%s11 + $0x30] sm:$0xf]
  %v2849 = vld [vmem:[%s11 + $0x34] sm:$0xf]
  %v2850 = vld [vmem:[%s11 + $0x38] sm:$0xf]
  %v2851 = vld [vmem:[%s11 + $0x3c] sm:$0xf]
  %v2852 = vpack.c.bf16 %v2835, %v2834
  %v2869 = vunpack.c.l.b16 %v2836
  %v2870 = vunpack.c.l.b16 %v2837
  %v2871 = vunpack.c.l.b16 %v2838
  %v2872 = vunpack.c.l.b16 %v2839
  %v2873 = vunpack.c.l.b16 %v2840
  %v2874 = vunpack.c.l.b16 %v2841
  %v2875 = vunpack.c.l.b16 %v2842
  %v2876 = vunpack.c.l.b16 %v2843
  %v2877 = vunpack.c.l.b16 %v2844
  %v2878 = vunpack.c.l.b16 %v2845
  %v2879 = vunpack.c.l.b16 %v2846
  %v2880 = vunpack.c.l.b16 %v2847
  %v2881 = vunpack.c.l.b16 %v2848
  %v2882 = vunpack.c.l.b16 %v2849
  %v2883 = vunpack.c.l.b16 %v2850
  %v2884 = vunpack.c.l.b16 %v2851
  %v2885 = vpack.c.b16 %v2870, %v2869
  %v2886 = vpack.c.b16 %v2872, %v2871
  %v2887 = vpack.c.b16 %v2874, %v2873
  %v2888 = vpack.c.b16 %v2876, %v2875
  %v2889 = vpack.c.b16 %v2878, %v2877
  %v2890 = vpack.c.b16 %v2880, %v2879
  %v2891 = vpack.c.b16 %v2882, %v2881
  %v2892 = vpack.c.b16 %v2884, %v2883
  %2901 = vmatprep.subr.bf16.mxu0 0
  %2902 = vmatpush1.bf16.msra.mxu0 %v2892
  %2903 = vmatprep.subr.bf16.mxu0 0
  %2904 = vmatpush1.bf16.msra.mxu0 %v2891
  %2905 = vmatprep.subr.bf16.mxu0 0
  %2906 = vmatpush1.bf16.msra.mxu0 %v2890
  %2907 = vmatprep.subr.bf16.mxu0 0
  %2908 = vmatpush1.bf16.msra.mxu0 %v2889
  %2909 = vmatprep.subr.bf16.mxu0 0
  %2910 = vmatpush1.bf16.msra.mxu0 %v2888
  %2911 = vmatprep.subr.bf16.mxu0 0
  %2912 = vmatpush1.bf16.msra.mxu0 %v2887
  %2913 = vmatprep.subr.bf16.mxu0 0
  %2914 = vmatpush1.bf16.msra.mxu0 %v2886
  %2915 = vmatprep.subr.bf16.mxu0 0
  %2916 = vmatpush1.bf16.msra.mxu0 %v2885
  %2917 = vmatprep.subr.bf16.mxu0 0
  %2918 = vmatpush2.bf16.msra.mxu0 0
  %2919 = vmatprep.subr.bf16.mxu0 0
  %2920 = vmatpush2.bf16.msra.mxu0 0
  %2921 = vmatprep.subr.bf16.mxu0 0
  %2922 = vmatpush2.bf16.msra.mxu0 0
  %2923 = vmatprep.subr.bf16.mxu0 0
  %2924 = vmatpush2.bf16.msra.mxu0 0
  %2925 = vmatprep.subr.bf16.mxu0 0
  %2926 = vmatpush2.bf16.msra.mxu0 0
  %2927 = vmatprep.subr.bf16.mxu0 0
  %2928 = vmatpush2.bf16.msra.mxu0 0
  %2929 = vmatprep.subr.bf16.mxu0 0
  %2930 = vmatpush2.bf16.msra.mxu0 0
  %2931 = vmatprep.subr.bf16.mxu0 0
  %2932 = vmatpush2.bf16.msra.mxu0 0
  %2933 = vmatprep.mubr.bf16.mxu0 0
  %2934 = vmatmul.mubr.bf16.gmra.mxu0 %v2852
  %v2935 = vpop.f32.mrf.mxu0
  %v2936 = vadd.f32 0.0, %v2935
  %v2937 = vpop.f32.mrf.mxu0
  %v2938 = vpop.f32.mrf.mxu0
  %v2939 = vadd.f32 0.0, %v2938
  %v2940 = vpop.f32.mrf.mxu0
  %2941 = vdwg.mxu0
  %v2942 = vadd.f32 %v2725, %v2936
  %v2943 = vadd.f32 %v2726, %v2939
  %v2944 = vadd.f32 %v2942, %v1583
  %v2945 = vadd.f32 %v2943, %v1583
  %v2946 = vld [vmem:[%s13 + $0x24] ss:$0 sm:$0xff]
  %v2947 = vld [vmem:[%s13 + $0x25] ss:$0 sm:$0xff]
  %s2948 = scalar_lea.vmem %s13, 38
  %v2949 = vld [vmem:[%s2948] ss:$8 sm:$0x3]
  %v2950 = vld [vmem:[%s13 + $0x27] ss:$0 sm:$0xff]
  %v2951 = vld [vmem:[%s13 + $0x30] ss:$0 sm:$0xff]
  %v2952 = vld [vmem:[%s13 + $0x31] ss:$0 sm:$0xff]
  %v2953 = vld [vmem:[%s13 + $0x32] ss:$0 sm:$0xff]
  %v2954 = vld [vmem:[%s13 + $0x33] ss:$0 sm:$0xff]
  %v2955 = vsel %vm1020, %v2944, 0.0
  %2956 = vadd.xlane.f32.xlu0 %v2955
  %v2957 = vpop.xlane.xlu0 %2956
  %v2958 = vsel %vm1020, %v2945, 0.0
  %2959 = vadd.xlane.f32.xlu0 %v2958
  %v2960 = vpop.xlane.xlu0 %2959
  %v2961 = vmul.f32 %v2957, %v1590
  %v2962 = vmul.f32 %v2960, %v1590
  %v2963 = vsub.f32 %v2944, %v2961
  %v2964 = vsub.f32 %v2945, %v2962
  %v2965 = vmul.f32 %v2963, %v2963
  %v2966 = vmul.f32 %v2964, %v2964
  %v2967 = vsel %vm1020, %v2965, 0.0
  %2968 = vadd.xlane.f32.xlu0 %v2967
  %v2969 = vpop.xlane.xlu0 %2968
  %v2970 = vsel %vm1020, %v2966, 0.0
  %2971 = vadd.xlane.f32.xlu0 %v2970
  %v2972 = vpop.xlane.xlu0 %2971
  %v2973 = vmul.f32 %v2969, %v1590
  %v2974 = vmul.f32 %v2972, %v1590
  %v2975 = vadd.f32 %v2973, 1e-05
  %v2976 = vadd.f32 %v2974, 1e-05
  %v2977 = vrsqrt.pop %v2975
  %v2978 = vrsqrt.pop %v2976
  %v2979 = vmul.f32 %v2963, %v2977
  %v2980 = vmul.f32 %v2964, %v2978
  %v2981 = vmul.f32 %v2979, %v2946
  %v2982 = vmul.f32 %v2980, %v2946
  %v2983 = vadd.f32 %v2981, %v2947
  %v2984 = vadd.f32 %v2982, %v2947
  %s2985 = scalar_lea.vmem %s8, 64
  %v2986 = vld [vmem:[%s2985] sm:$0xff]
  %v2987 = vld [vmem:[%s2985 + $0x8] sm:$0xff]
  %v2988 = vld [vmem:[%s2985 + $0x10] sm:$0xff]
  %v2989 = vld [vmem:[%s2985 + $0x18] sm:$0xff]
  %v2990 = vld [vmem:[%s2985 + $0x20] sm:$0xff]
  %v2991 = vld [vmem:[%s2985 + $0x28] sm:$0xff]
  %v2992 = vld [vmem:[%s2985 + $0x30] sm:$0xff]
  %v2993 = vld [vmem:[%s2985 + $0x38] sm:$0xff]
  %v2994 = vpack.c.bf16 %v2984, %v2983
  %v2996 = vlaneseq
  %v2997 = vshrl.u32 %v2996, 7
  %v2998 = vsub.s32 0, %v2997
  %v2999 = vrot.slane %v2949, %v2998
  %v3000 = vlaneseq
  %v3001 = vshrl.u32 %v3000, 7
  %v3002 = vsub.s32 1, %v3001
  %v3003 = vrot.slane %v2949, %v3002
  %v3014 = vunpack.c.l.b16 %v2986
  %v3015 = vunpack.c.h.b16 %v2986
  %v3016 = vunpack.c.l.b16 %v2987
  %v3017 = vunpack.c.h.b16 %v2987
  %v3018 = vunpack.c.l.b16 %v2988
  %v3019 = vunpack.c.h.b16 %v2988
  %v3020 = vunpack.c.l.b16 %v2989
  %v3021 = vunpack.c.h.b16 %v2989
  %v3022 = vunpack.c.l.b16 %v2990
  %v3023 = vunpack.c.h.b16 %v2990
  %v3024 = vunpack.c.l.b16 %v2991
  %v3025 = vunpack.c.h.b16 %v2991
  %v3026 = vunpack.c.l.b16 %v2992
  %v3027 = vunpack.c.h.b16 %v2992
  %v3028 = vunpack.c.l.b16 %v2993
  %v3029 = vunpack.c.h.b16 %v2993
  %v3030 = vpack.c.b16 %v3016, %v3014
  %v3031 = vpack.c.b16 %v3017, %v3015
  %v3032 = vpack.c.b16 %v3020, %v3018
  %v3033 = vpack.c.b16 %v3021, %v3019
  %v3034 = vpack.c.b16 %v3024, %v3022
  %v3035 = vpack.c.b16 %v3025, %v3023
  %v3036 = vpack.c.b16 %v3028, %v3026
  %v3037 = vpack.c.b16 %v3029, %v3027
  %v3047 = vsel %vm1020, %v2994, 0
  %3049 = vmatprep.subr.bf16.mxu0 0
  %3050 = vmatpush1.bf16.msra.mxu0 0
  %3051 = vmatprep.subr.bf16.mxu0 0
  %3052 = vmatpush1.bf16.msra.mxu0 0
  %3053 = vmatprep.subr.bf16.mxu0 0
  %3054 = vmatpush1.bf16.msra.mxu0 0
  %3055 = vmatprep.subr.bf16.mxu0 0
  %3056 = vmatpush1.bf16.msra.mxu0 0
  %3057 = vmatprep.subr.bf16.mxu0 %v3037
  %3058 = vmatpush1.bf16.msra.mxu0 %v3036
  %3059 = vmatprep.subr.bf16.mxu0 %v3035
  %3060 = vmatpush1.bf16.msra.mxu0 %v3034
  %3061 = vmatprep.subr.bf16.mxu0 %v3033
  %3062 = vmatpush1.bf16.msra.mxu0 %v3032
  %3063 = vmatprep.subr.bf16.mxu0 %v3031
  %3064 = vmatpush1.bf16.msra.mxu0 %v3030
  %3065 = vmatprep.subr.bf16.mxu0 0
  %3066 = vmatpush2.bf16.msra.mxu0 0
  %3067 = vmatprep.subr.bf16.mxu0 0
  %3068 = vmatpush2.bf16.msra.mxu0 0
  %3069 = vmatprep.subr.bf16.mxu0 0
  %3070 = vmatpush2.bf16.msra.mxu0 0
  %3071 = vmatprep.subr.bf16.mxu0 0
  %3072 = vmatpush2.bf16.msra.mxu0 0
  %3073 = vmatprep.subr.bf16.mxu0 0
  %3074 = vmatpush2.bf16.msra.mxu0 0
  %3075 = vmatprep.subr.bf16.mxu0 0
  %3076 = vmatpush2.bf16.msra.mxu0 0
  %3077 = vmatprep.subr.bf16.mxu0 0
  %3078 = vmatpush2.bf16.msra.mxu0 0
  %3079 = vmatprep.subr.bf16.mxu0 0
  %3080 = vmatpush2.bf16.msra.mxu0 0
  %3081 = vmatprep.mubr.bf16.mxu0 0
  %3082 = vmatmul.mubr.bf16.gmra.mxu0 %v3047
  %v3083 = vpop.f32.mrf.mxu0
  %v3084 = vadd.f32 %v2999, %v3083
  %v3085 = vpop.f32.mrf.mxu0
  %v3086 = vadd.f32 %v3003, %v3085
  %v3087 = vpop.f32.mrf.mxu0
  %v3088 = vadd.f32 %v2999, %v3087
  %v3089 = vpop.f32.mrf.mxu0
  %v3090 = vadd.f32 %v3003, %v3089
  %3091 = vdwg.mxu0
  %v3092 = vpack.c.bf16 %v3088, %v3084
  %v3093 = vpack.c.bf16 %v3090, %v3086
  %v3095 = vunpack.c.l.b16 %v3092
  %v3096 = vunpack.c.h.b16 %v3092
  %v3097 = vpack.c.b16 %v3095, %v3095
  %v3098 = vpack.c.b16 %v3096, %v3096
  %v3100 = vunpack.c.l.b16 %v3093
  %v3101 = vunpack.c.h.b16 %v3093
  %v3102 = vpack.c.b16 %v3100, %v3100
  %v3103 = vpack.c.b16 %v3101, %v3101
  %3104 = vrot.lane.b32.xlu0 %v3097, 64
  %v3105 = vpop.permute.xlu0 %3104
  %v3107 = vsel %vm1735, %v3097, 0
  %v3110 = vsel %vm1735, %v3105, 0
  %3112 = vmatprep.subr.bf16.mxu0 0
  %3113 = vmatpush1.bf16.xpose.msra.mxu0 0
  %3114 = vmatprep.subr.bf16.mxu0 0
  %3115 = vmatpush1.bf16.xpose.msra.mxu0 0
  %3116 = vmatprep.subr.bf16.mxu0 0
  %3117 = vmatpush1.bf16.xpose.msra.mxu0 0
  %3118 = vmatprep.subr.bf16.mxu0 0
  %3119 = vmatpush1.bf16.xpose.msra.mxu0 0
  %3120 = vmatprep.subr.bf16.mxu0 0
  %3121 = vmatpush1.bf16.xpose.msra.mxu0 0
  %3122 = vmatprep.subr.bf16.mxu0 0
  %3123 = vmatpush1.bf16.xpose.msra.mxu0 0
  %3124 = vmatprep.subr.bf16.mxu0 0
  %3125 = vmatpush1.bf16.xpose.msra.mxu0 0
  %3126 = vmatprep.subr.bf16.mxu0 0
  %3127 = vmatpush1.bf16.xpose.msra.mxu0 %v3110
  %3128 = vmatprep.subr.bf16.mxu0 0
  %3129 = vmatpush2.bf16.xpose.msra.mxu0 0
  %3130 = vmatprep.subr.bf16.mxu0 0
  %3131 = vmatpush2.bf16.xpose.msra.mxu0 0
  %3132 = vmatprep.subr.bf16.mxu0 0
  %3133 = vmatpush2.bf16.xpose.msra.mxu0 0
  %3134 = vmatprep.subr.bf16.mxu0 0
  %3135 = vmatpush2.bf16.xpose.msra.mxu0 0
  %3136 = vmatprep.subr.bf16.mxu0 0
  %3137 = vmatpush2.bf16.xpose.msra.mxu0 0
  %3138 = vmatprep.subr.bf16.mxu0 0
  %3139 = vmatpush2.bf16.xpose.msra.mxu0 0
  %3140 = vmatprep.subr.bf16.mxu0 0
  %3141 = vmatpush2.bf16.xpose.msra.mxu0 0
  %3142 = vmatprep.subr.bf16.mxu0 0
  %3143 = vmatpush2.bf16.xpose.msra.mxu0 0
  %3144 = vmatprep.mubr.bf16.mxu0 0
  %3145 = vmatmul.mubr.bf16.gmra.mxu0 %v3107
  %v3146 = vpop.f32.mrf.mxu0
  %v3147 = vadd.f32 0.0, %v3146
  %v3148 = vpop.f32.mrf.mxu0
  %v3149 = vpop.f32.mrf.mxu0
  %v3150 = vpop.f32.mrf.mxu0
  %3151 = vdwg.mxu0
  %3152 = vrot.lane.b32.xlu0 %v3098, 64
  %v3153 = vpop.permute.xlu0 %3152
  %v3155 = vsel %vm1735, %v3098, 0
  %v3158 = vsel %vm1735, %v3153, 0
  %3160 = vmatprep.subr.bf16.mxu0 0
  %3161 = vmatpush1.bf16.xpose.msra.mxu0 0
  %3162 = vmatprep.subr.bf16.mxu0 0
  %3163 = vmatpush1.bf16.xpose.msra.mxu0 0
  %3164 = vmatprep.subr.bf16.mxu0 0
  %3165 = vmatpush1.bf16.xpose.msra.mxu0 0
  %3166 = vmatprep.subr.bf16.mxu0 0
  %3167 = vmatpush1.bf16.xpose.msra.mxu0 0
  %3168 = vmatprep.subr.bf16.mxu0 0
  %3169 = vmatpush1.bf16.xpose.msra.mxu0 0
  %3170 = vmatprep.subr.bf16.mxu0 0
  %3171 = vmatpush1.bf16.xpose.msra.mxu0 0
  %3172 = vmatprep.subr.bf16.mxu0 0
  %3173 = vmatpush1.bf16.xpose.msra.mxu0 0
  %3174 = vmatprep.subr.bf16.mxu0 0
  %3175 = vmatpush1.bf16.xpose.msra.mxu0 %v3158
  %3176 = vmatprep.subr.bf16.mxu0 0
  %3177 = vmatpush2.bf16.xpose.msra.mxu0 0
  %3178 = vmatprep.subr.bf16.mxu0 0
  %3179 = vmatpush2.bf16.xpose.msra.mxu0 0
  %3180 = vmatprep.subr.bf16.mxu0 0
  %3181 = vmatpush2.bf16.xpose.msra.mxu0 0
  %3182 = vmatprep.subr.bf16.mxu0 0
  %3183 = vmatpush2.bf16.xpose.msra.mxu0 0
  %3184 = vmatprep.subr.bf16.mxu0 0
  %3185 = vmatpush2.bf16.xpose.msra.mxu0 0
  %3186 = vmatprep.subr.bf16.mxu0 0
  %3187 = vmatpush2.bf16.xpose.msra.mxu0 0
  %3188 = vmatprep.subr.bf16.mxu0 0
  %3189 = vmatpush2.bf16.xpose.msra.mxu0 0
  %3190 = vmatprep.subr.bf16.mxu0 0
  %3191 = vmatpush2.bf16.xpose.msra.mxu0 0
  %3192 = vmatprep.mubr.bf16.mxu0 0
  %3193 = vmatmul.mubr.bf16.gmra.mxu0 %v3155
  %v3194 = vpop.f32.mrf.mxu0
  %v3195 = vadd.f32 0.0, %v3194
  %v3196 = vpop.f32.mrf.mxu0
  %v3197 = vpop.f32.mrf.mxu0
  %v3198 = vpop.f32.mrf.mxu0
  %3199 = vdwg.mxu0
  %v3200 = vmul.f32 %v3147, 0.25
  %v3201 = vmul.f32 %v3195, 0.25
  %v3202 = vsel %vm1355, %v3200, -inf
  %3203 = vmax.xlane.f32.xlu0 %v3202
  %v3204 = vpop.xlane.xlu0 %3203
  %v3205 = vsel %vm1355, %v3201, -inf
  %3206 = vmax.xlane.f32.xlu0 %v3205
  %v3207 = vpop.xlane.xlu0 %3206
  %v3208 = vsub.f32 %v3200, %v3204
  %v3209 = vsub.f32 %v3201, %v3207
  %v3210 = vmul.f32 %v3208, 1.442695
  %v3211 = vpow.pop %v3210
  %v3212 = vmul.f32 %v3209, 1.442695
  %v3213 = vpow.pop %v3212
  %v3214 = vsel %vm1355, %v3211, 0.0
  %3215 = vadd.xlane.f32.xlu0 %v3214
  %v3216 = vpop.xlane.xlu0 %3215
  %v3217 = vsel %vm1355, %v3213, 0.0
  %3218 = vadd.xlane.f32.xlu0 %v3217
  %v3219 = vpop.xlane.xlu0 %3218
  %v3220 = vrcp.pop %v3216
  %v3221 = vrcp.pop %v3219
  %v3222 = vmul.f32 %v3211, %v3220
  %v3223 = vmul.f32 %v3213, %v3221
  %v3224 = vpack.c.bf16 %v3222, %v3222
  %v3225 = vpack.c.bf16 %v3223, %v3223
  %v3227 = vsel %vm1355, %v3224, 0
  %v3230 = vsel %vm622, %v3102, 0
  %3232 = vmatprep.subr.bf16.mxu0 0
  %3233 = vmatpush1.bf16.msra.mxu0 0
  %3234 = vmatprep.subr.bf16.mxu0 0
  %3235 = vmatpush1.bf16.msra.mxu0 0
  %3236 = vmatprep.subr.bf16.mxu0 0
  %3237 = vmatpush1.bf16.msra.mxu0 0
  %3238 = vmatprep.subr.bf16.mxu0 0
  %3239 = vmatpush1.bf16.msra.mxu0 0
  %3240 = vmatprep.subr.bf16.mxu0 0
  %3241 = vmatpush1.bf16.msra.mxu0 0
  %3242 = vmatprep.subr.bf16.mxu0 0
  %3243 = vmatpush1.bf16.msra.mxu0 0
  %3244 = vmatprep.subr.bf16.mxu0 0
  %3245 = vmatpush1.bf16.msra.mxu0 0
  %3246 = vmatprep.subr.bf16.mxu0 0
  %3247 = vmatpush1.bf16.msra.mxu0 %v3230
  %3248 = vmatprep.subr.bf16.mxu0 0
  %3249 = vmatpush2.bf16.msra.mxu0 0
  %3250 = vmatprep.subr.bf16.mxu0 0
  %3251 = vmatpush2.bf16.msra.mxu0 0
  %3252 = vmatprep.subr.bf16.mxu0 0
  %3253 = vmatpush2.bf16.msra.mxu0 0
  %3254 = vmatprep.subr.bf16.mxu0 0
  %3255 = vmatpush2.bf16.msra.mxu0 0
  %3256 = vmatprep.subr.bf16.mxu0 0
  %3257 = vmatpush2.bf16.msra.mxu0 0
  %3258 = vmatprep.subr.bf16.mxu0 0
  %3259 = vmatpush2.bf16.msra.mxu0 0
  %3260 = vmatprep.subr.bf16.mxu0 0
  %3261 = vmatpush2.bf16.msra.mxu0 0
  %3262 = vmatprep.subr.bf16.mxu0 0
  %3263 = vmatpush2.bf16.msra.mxu0 0
  %3264 = vmatprep.mubr.bf16.mxu0 0
  %3265 = vmatmul.mubr.bf16.gmra.mxu0 %v3227
  %v3266 = vpop.f32.mrf.mxu0
  %v3267 = vadd.f32 0.0, %v3266
  %v3268 = vpop.f32.mrf.mxu0
  %v3269 = vpop.f32.mrf.mxu0
  %v3270 = vpop.f32.mrf.mxu0
  %3271 = vdwg.mxu0
  %v3273 = vsel %vm1355, %v3225, 0
  %v3276 = vsel %vm622, %v3103, 0
  %3278 = vmatprep.subr.bf16.mxu0 0
  %3279 = vmatpush1.bf16.msra.mxu0 0
  %3280 = vmatprep.subr.bf16.mxu0 0
  %3281 = vmatpush1.bf16.msra.mxu0 0
  %3282 = vmatprep.subr.bf16.mxu0 0
  %3283 = vmatpush1.bf16.msra.mxu0 0
  %3284 = vmatprep.subr.bf16.mxu0 0
  %3285 = vmatpush1.bf16.msra.mxu0 0
  %3286 = vmatprep.subr.bf16.mxu0 0
  %3287 = vmatpush1.bf16.msra.mxu0 0
  %3288 = vmatprep.subr.bf16.mxu0 0
  %3289 = vmatpush1.bf16.msra.mxu0 0
  %3290 = vmatprep.subr.bf16.mxu0 0
  %3291 = vmatpush1.bf16.msra.mxu0 0
  %3292 = vmatprep.subr.bf16.mxu0 0
  %3293 = vmatpush1.bf16.msra.mxu0 %v3276
  %3294 = vmatprep.subr.bf16.mxu0 0
  %3295 = vmatpush2.bf16.msra.mxu0 0
  %3296 = vmatprep.subr.bf16.mxu0 0
  %3297 = vmatpush2.bf16.msra.mxu0 0
  %3298 = vmatprep.subr.bf16.mxu0 0
  %3299 = vmatpush2.bf16.msra.mxu0 0
  %3300 = vmatprep.subr.bf16.mxu0 0
  %3301 = vmatpush2.bf16.msra.mxu0 0
  %3302 = vmatprep.subr.bf16.mxu0 0
  %3303 = vmatpush2.bf16.msra.mxu0 0
  %3304 = vmatprep.subr.bf16.mxu0 0
  %3305 = vmatpush2.bf16.msra.mxu0 0
  %3306 = vmatprep.subr.bf16.mxu0 0
  %3307 = vmatpush2.bf16.msra.mxu0 0
  %3308 = vmatprep.subr.bf16.mxu0 0
  %3309 = vmatpush2.bf16.msra.mxu0 0
  %3310 = vmatprep.mubr.bf16.mxu0 0
  %3311 = vmatmul.mubr.bf16.gmra.mxu0 %v3273
  %v3312 = vpop.f32.mrf.mxu0
  %v3313 = vadd.f32 0.0, %v3312
  %v3314 = vpop.f32.mrf.mxu0
  %v3315 = vpop.f32.mrf.mxu0
  %v3316 = vpop.f32.mrf.mxu0
  %3317 = vdwg.mxu0
  %3318 = vrot.lane.b32.xlu0 %v3097, 112
  %v3319 = vpop.permute.xlu0 %3318
  %3320 = vrot.lane.b32.xlu0 %v3097, 48
  %v3321 = vpop.permute.xlu0 %3320
  %v3323 = vsel %vm1735, %v3319, 0
  %v3326 = vsel %vm1735, %v3321, 0
  %3328 = vmatprep.subr.bf16.mxu0 0
  %3329 = vmatpush1.bf16.xpose.msra.mxu0 0
  %3330 = vmatprep.subr.bf16.mxu0 0
  %3331 = vmatpush1.bf16.xpose.msra.mxu0 0
  %3332 = vmatprep.subr.bf16.mxu0 0
  %3333 = vmatpush1.bf16.xpose.msra.mxu0 0
  %3334 = vmatprep.subr.bf16.mxu0 0
  %3335 = vmatpush1.bf16.xpose.msra.mxu0 0
  %3336 = vmatprep.subr.bf16.mxu0 0
  %3337 = vmatpush1.bf16.xpose.msra.mxu0 0
  %3338 = vmatprep.subr.bf16.mxu0 0
  %3339 = vmatpush1.bf16.xpose.msra.mxu0 0
  %3340 = vmatprep.subr.bf16.mxu0 0
  %3341 = vmatpush1.bf16.xpose.msra.mxu0 0
  %3342 = vmatprep.subr.bf16.mxu0 0
  %3343 = vmatpush1.bf16.xpose.msra.mxu0 %v3326
  %3344 = vmatprep.subr.bf16.mxu0 0
  %3345 = vmatpush2.bf16.xpose.msra.mxu0 0
  %3346 = vmatprep.subr.bf16.mxu0 0
  %3347 = vmatpush2.bf16.xpose.msra.mxu0 0
  %3348 = vmatprep.subr.bf16.mxu0 0
  %3349 = vmatpush2.bf16.xpose.msra.mxu0 0
  %3350 = vmatprep.subr.bf16.mxu0 0
  %3351 = vmatpush2.bf16.xpose.msra.mxu0 0
  %3352 = vmatprep.subr.bf16.mxu0 0
  %3353 = vmatpush2.bf16.xpose.msra.mxu0 0
  %3354 = vmatprep.subr.bf16.mxu0 0
  %3355 = vmatpush2.bf16.xpose.msra.mxu0 0
  %3356 = vmatprep.subr.bf16.mxu0 0
  %3357 = vmatpush2.bf16.xpose.msra.mxu0 0
  %3358 = vmatprep.subr.bf16.mxu0 0
  %3359 = vmatpush2.bf16.xpose.msra.mxu0 0
  %3360 = vmatprep.mubr.bf16.mxu0 0
  %3361 = vmatmul.mubr.bf16.gmra.mxu0 %v3323
  %v3362 = vpop.f32.mrf.mxu0
  %v3363 = vadd.f32 0.0, %v3362
  %v3364 = vpop.f32.mrf.mxu0
  %v3365 = vpop.f32.mrf.mxu0
  %v3366 = vpop.f32.mrf.mxu0
  %3367 = vdwg.mxu0
  %3368 = vrot.lane.b32.xlu0 %v3098, 112
  %v3369 = vpop.permute.xlu0 %3368
  %3370 = vrot.lane.b32.xlu0 %v3098, 48
  %v3371 = vpop.permute.xlu0 %3370
  %v3373 = vsel %vm1735, %v3369, 0
  %v3376 = vsel %vm1735, %v3371, 0
  %3378 = vmatprep.subr.bf16.mxu0 0
  %3379 = vmatpush1.bf16.xpose.msra.mxu0 0
  %3380 = vmatprep.subr.bf16.mxu0 0
  %3381 = vmatpush1.bf16.xpose.msra.mxu0 0
  %3382 = vmatprep.subr.bf16.mxu0 0
  %3383 = vmatpush1.bf16.xpose.msra.mxu0 0
  %3384 = vmatprep.subr.bf16.mxu0 0
  %3385 = vmatpush1.bf16.xpose.msra.mxu0 0
  %3386 = vmatprep.subr.bf16.mxu0 0
  %3387 = vmatpush1.bf16.xpose.msra.mxu0 0
  %3388 = vmatprep.subr.bf16.mxu0 0
  %3389 = vmatpush1.bf16.xpose.msra.mxu0 0
  %3390 = vmatprep.subr.bf16.mxu0 0
  %3391 = vmatpush1.bf16.xpose.msra.mxu0 0
  %3392 = vmatprep.subr.bf16.mxu0 0
  %3393 = vmatpush1.bf16.xpose.msra.mxu0 %v3376
  %3394 = vmatprep.subr.bf16.mxu0 0
  %3395 = vmatpush2.bf16.xpose.msra.mxu0 0
  %3396 = vmatprep.subr.bf16.mxu0 0
  %3397 = vmatpush2.bf16.xpose.msra.mxu0 0
  %3398 = vmatprep.subr.bf16.mxu0 0
  %3399 = vmatpush2.bf16.xpose.msra.mxu0 0
  %3400 = vmatprep.subr.bf16.mxu0 0
  %3401 = vmatpush2.bf16.xpose.msra.mxu0 0
  %3402 = vmatprep.subr.bf16.mxu0 0
  %3403 = vmatpush2.bf16.xpose.msra.mxu0 0
  %3404 = vmatprep.subr.bf16.mxu0 0
  %3405 = vmatpush2.bf16.xpose.msra.mxu0 0
  %3406 = vmatprep.subr.bf16.mxu0 0
  %3407 = vmatpush2.bf16.xpose.msra.mxu0 0
  %3408 = vmatprep.subr.bf16.mxu0 0
  %3409 = vmatpush2.bf16.xpose.msra.mxu0 0
  %3410 = vmatprep.mubr.bf16.mxu0 0
  %3411 = vmatmul.mubr.bf16.gmra.mxu0 %v3373
  %v3412 = vpop.f32.mrf.mxu0
  %v3413 = vadd.f32 0.0, %v3412
  %v3414 = vpop.f32.mrf.mxu0
  %v3415 = vpop.f32.mrf.mxu0
  %v3416 = vpop.f32.mrf.mxu0
  %3417 = vdwg.mxu0
  %v3418 = vmul.f32 %v3363, 0.25
  %v3419 = vmul.f32 %v3413, 0.25
  %v3420 = vsel %vm1355, %v3418, -inf
  %3421 = vmax.xlane.f32.xlu0 %v3420
  %v3422 = vpop.xlane.xlu0 %3421
  %v3423 = vsel %vm1355, %v3419, -inf
  %3424 = vmax.xlane.f32.xlu0 %v3423
  %v3425 = vpop.xlane.xlu0 %3424
  %v3426 = vsub.f32 %v3418, %v3422
  %v3427 = vsub.f32 %v3419, %v3425
  %v3428 = vmul.f32 %v3426, 1.442695
  %v3429 = vpow.pop %v3428
  %v3430 = vmul.f32 %v3427, 1.442695
  %v3431 = vpow.pop %v3430
  %v3432 = vsel %vm1355, %v3429, 0.0
  %3433 = vadd.xlane.f32.xlu0 %v3432
  %v3434 = vpop.xlane.xlu0 %3433
  %v3435 = vsel %vm1355, %v3431, 0.0
  %3436 = vadd.xlane.f32.xlu0 %v3435
  %v3437 = vpop.xlane.xlu0 %3436
  %v3438 = vrcp.pop %v3434
  %v3439 = vrcp.pop %v3437
  %v3440 = vmul.f32 %v3429, %v3438
  %v3441 = vmul.f32 %v3431, %v3439
  %v3442 = vpack.c.bf16 %v3440, %v3440
  %v3443 = vpack.c.bf16 %v3441, %v3441
  %3444 = vrot.lane.b32.xlu0 %v3102, 112
  %v3445 = vpop.permute.xlu0 %3444
  %v3447 = vsel %vm1355, %v3442, 0
  %v3450 = vsel %vm622, %v3445, 0
  %3452 = vmatprep.subr.bf16.mxu0 0
  %3453 = vmatpush1.bf16.msra.mxu0 0
  %3454 = vmatprep.subr.bf16.mxu0 0
  %3455 = vmatpush1.bf16.msra.mxu0 0
  %3456 = vmatprep.subr.bf16.mxu0 0
  %3457 = vmatpush1.bf16.msra.mxu0 0
  %3458 = vmatprep.subr.bf16.mxu0 0
  %3459 = vmatpush1.bf16.msra.mxu0 0
  %3460 = vmatprep.subr.bf16.mxu0 0
  %3461 = vmatpush1.bf16.msra.mxu0 0
  %3462 = vmatprep.subr.bf16.mxu0 0
  %3463 = vmatpush1.bf16.msra.mxu0 0
  %3464 = vmatprep.subr.bf16.mxu0 0
  %3465 = vmatpush1.bf16.msra.mxu0 0
  %3466 = vmatprep.subr.bf16.mxu0 0
  %3467 = vmatpush1.bf16.msra.mxu0 %v3450
  %3468 = vmatprep.subr.bf16.mxu0 0
  %3469 = vmatpush2.bf16.msra.mxu0 0
  %3470 = vmatprep.subr.bf16.mxu0 0
  %3471 = vmatpush2.bf16.msra.mxu0 0
  %3472 = vmatprep.subr.bf16.mxu0 0
  %3473 = vmatpush2.bf16.msra.mxu0 0
  %3474 = vmatprep.subr.bf16.mxu0 0
  %3475 = vmatpush2.bf16.msra.mxu0 0
  %3476 = vmatprep.subr.bf16.mxu0 0
  %3477 = vmatpush2.bf16.msra.mxu0 0
  %3478 = vmatprep.subr.bf16.mxu0 0
  %3479 = vmatpush2.bf16.msra.mxu0 0
  %3480 = vmatprep.subr.bf16.mxu0 0
  %3481 = vmatpush2.bf16.msra.mxu0 0
  %3482 = vmatprep.subr.bf16.mxu0 0
  %3483 = vmatpush2.bf16.msra.mxu0 0
  %3484 = vmatprep.mubr.bf16.mxu0 0
  %3485 = vmatmul.mubr.bf16.gmra.mxu0 %v3447
  %v3486 = vpop.f32.mrf.mxu0
  %v3487 = vadd.f32 0.0, %v3486
  %v3488 = vpop.f32.mrf.mxu0
  %v3489 = vpop.f32.mrf.mxu0
  %v3490 = vpop.f32.mrf.mxu0
  %3491 = vdwg.mxu0
  %3492 = vrot.lane.b32.xlu0 %v3103, 112
  %v3493 = vpop.permute.xlu0 %3492
  %v3495 = vsel %vm1355, %v3443, 0
  %v3498 = vsel %vm622, %v3493, 0
  %3500 = vmatprep.subr.bf16.mxu0 0
  %3501 = vmatpush1.bf16.msra.mxu0 0
  %3502 = vmatprep.subr.bf16.mxu0 0
  %3503 = vmatpush1.bf16.msra.mxu0 0
  %3504 = vmatprep.subr.bf16.mxu0 0
  %3505 = vmatpush1.bf16.msra.mxu0 0
  %3506 = vmatprep.subr.bf16.mxu0 0
  %3507 = vmatpush1.bf16.msra.mxu0 0
  %3508 = vmatprep.subr.bf16.mxu0 0
  %3509 = vmatpush1.bf16.msra.mxu0 0
  %3510 = vmatprep.subr.bf16.mxu0 0
  %3511 = vmatpush1.bf16.msra.mxu0 0
  %3512 = vmatprep.subr.bf16.mxu0 0
  %3513 = vmatpush1.bf16.msra.mxu0 0
  %3514 = vmatprep.subr.bf16.mxu0 0
  %3515 = vmatpush1.bf16.msra.mxu0 %v3498
  %3516 = vmatprep.subr.bf16.mxu0 0
  %3517 = vmatpush2.bf16.msra.mxu0 0
  %3518 = vmatprep.subr.bf16.mxu0 0
  %3519 = vmatpush2.bf16.msra.mxu0 0
  %3520 = vmatprep.subr.bf16.mxu0 0
  %3521 = vmatpush2.bf16.msra.mxu0 0
  %3522 = vmatprep.subr.bf16.mxu0 0
  %3523 = vmatpush2.bf16.msra.mxu0 0
  %3524 = vmatprep.subr.bf16.mxu0 0
  %3525 = vmatpush2.bf16.msra.mxu0 0
  %3526 = vmatprep.subr.bf16.mxu0 0
  %3527 = vmatpush2.bf16.msra.mxu0 0
  %3528 = vmatprep.subr.bf16.mxu0 0
  %3529 = vmatpush2.bf16.msra.mxu0 0
  %3530 = vmatprep.subr.bf16.mxu0 0
  %3531 = vmatpush2.bf16.msra.mxu0 0
  %3532 = vmatprep.mubr.bf16.mxu0 0
  %3533 = vmatmul.mubr.bf16.gmra.mxu0 %v3495
  %v3534 = vpop.f32.mrf.mxu0
  %v3535 = vadd.f32 0.0, %v3534
  %v3536 = vpop.f32.mrf.mxu0
  %v3537 = vpop.f32.mrf.mxu0
  %v3538 = vpop.f32.mrf.mxu0
  %3539 = vdwg.mxu0
  %3540 = vrot.lane.b32.xlu0 %v3097, 96
  %v3541 = vpop.permute.xlu0 %3540
  %3542 = vrot.lane.b32.xlu0 %v3097, 32
  %v3543 = vpop.permute.xlu0 %3542
  %v3545 = vsel %vm1735, %v3541, 0
  %v3548 = vsel %vm1735, %v3543, 0
  %3550 = vmatprep.subr.bf16.mxu0 0
  %3551 = vmatpush1.bf16.xpose.msra.mxu0 0
  %3552 = vmatprep.subr.bf16.mxu0 0
  %3553 = vmatpush1.bf16.xpose.msra.mxu0 0
  %3554 = vmatprep.subr.bf16.mxu0 0
  %3555 = vmatpush1.bf16.xpose.msra.mxu0 0
  %3556 = vmatprep.subr.bf16.mxu0 0
  %3557 = vmatpush1.bf16.xpose.msra.mxu0 0
  %3558 = vmatprep.subr.bf16.mxu0 0
  %3559 = vmatpush1.bf16.xpose.msra.mxu0 0
  %3560 = vmatprep.subr.bf16.mxu0 0
  %3561 = vmatpush1.bf16.xpose.msra.mxu0 0
  %3562 = vmatprep.subr.bf16.mxu0 0
  %3563 = vmatpush1.bf16.xpose.msra.mxu0 0
  %3564 = vmatprep.subr.bf16.mxu0 0
  %3565 = vmatpush1.bf16.xpose.msra.mxu0 %v3548
  %3566 = vmatprep.subr.bf16.mxu0 0
  %3567 = vmatpush2.bf16.xpose.msra.mxu0 0
  %3568 = vmatprep.subr.bf16.mxu0 0
  %3569 = vmatpush2.bf16.xpose.msra.mxu0 0
  %3570 = vmatprep.subr.bf16.mxu0 0
  %3571 = vmatpush2.bf16.xpose.msra.mxu0 0
  %3572 = vmatprep.subr.bf16.mxu0 0
  %3573 = vmatpush2.bf16.xpose.msra.mxu0 0
  %3574 = vmatprep.subr.bf16.mxu0 0
  %3575 = vmatpush2.bf16.xpose.msra.mxu0 0
  %3576 = vmatprep.subr.bf16.mxu0 0
  %3577 = vmatpush2.bf16.xpose.msra.mxu0 0
  %3578 = vmatprep.subr.bf16.mxu0 0
  %3579 = vmatpush2.bf16.xpose.msra.mxu0 0
  %3580 = vmatprep.subr.bf16.mxu0 0
  %3581 = vmatpush2.bf16.xpose.msra.mxu0 0
  %3582 = vmatprep.mubr.bf16.mxu0 0
  %3583 = vmatmul.mubr.bf16.gmra.mxu0 %v3545
  %v3584 = vpop.f32.mrf.mxu0
  %v3585 = vadd.f32 0.0, %v3584
  %v3586 = vpop.f32.mrf.mxu0
  %v3587 = vpop.f32.mrf.mxu0
  %v3588 = vpop.f32.mrf.mxu0
  %3589 = vdwg.mxu0
  %3590 = vrot.lane.b32.xlu0 %v3098, 96
  %v3591 = vpop.permute.xlu0 %3590
  %3592 = vrot.lane.b32.xlu0 %v3098, 32
  %v3593 = vpop.permute.xlu0 %3592
  %v3595 = vsel %vm1735, %v3591, 0
  %v3598 = vsel %vm1735, %v3593, 0
  %3600 = vmatprep.subr.bf16.mxu0 0
  %3601 = vmatpush1.bf16.xpose.msra.mxu0 0
  %3602 = vmatprep.subr.bf16.mxu0 0
  %3603 = vmatpush1.bf16.xpose.msra.mxu0 0
  %3604 = vmatprep.subr.bf16.mxu0 0
  %3605 = vmatpush1.bf16.xpose.msra.mxu0 0
  %3606 = vmatprep.subr.bf16.mxu0 0
  %3607 = vmatpush1.bf16.xpose.msra.mxu0 0
  %3608 = vmatprep.subr.bf16.mxu0 0
  %3609 = vmatpush1.bf16.xpose.msra.mxu0 0
  %3610 = vmatprep.subr.bf16.mxu0 0
  %3611 = vmatpush1.bf16.xpose.msra.mxu0 0
  %3612 = vmatprep.subr.bf16.mxu0 0
  %3613 = vmatpush1.bf16.xpose.msra.mxu0 0
  %3614 = vmatprep.subr.bf16.mxu0 0
  %3615 = vmatpush1.bf16.xpose.msra.mxu0 %v3598
  %3616 = vmatprep.subr.bf16.mxu0 0
  %3617 = vmatpush2.bf16.xpose.msra.mxu0 0
  %3618 = vmatprep.subr.bf16.mxu0 0
  %3619 = vmatpush2.bf16.xpose.msra.mxu0 0
  %3620 = vmatprep.subr.bf16.mxu0 0
  %3621 = vmatpush2.bf16.xpose.msra.mxu0 0
  %3622 = vmatprep.subr.bf16.mxu0 0
  %3623 = vmatpush2.bf16.xpose.msra.mxu0 0
  %3624 = vmatprep.subr.bf16.mxu0 0
  %3625 = vmatpush2.bf16.xpose.msra.mxu0 0
  %3626 = vmatprep.subr.bf16.mxu0 0
  %3627 = vmatpush2.bf16.xpose.msra.mxu0 0
  %3628 = vmatprep.subr.bf16.mxu0 0
  %3629 = vmatpush2.bf16.xpose.msra.mxu0 0
  %3630 = vmatprep.subr.bf16.mxu0 0
  %3631 = vmatpush2.bf16.xpose.msra.mxu0 0
  %3632 = vmatprep.mubr.bf16.mxu0 0
  %3633 = vmatmul.mubr.bf16.gmra.mxu0 %v3595
  %v3634 = vpop.f32.mrf.mxu0
  %v3635 = vadd.f32 0.0, %v3634
  %v3636 = vpop.f32.mrf.mxu0
  %v3637 = vpop.f32.mrf.mxu0
  %v3638 = vpop.f32.mrf.mxu0
  %3639 = vdwg.mxu0
  %v3640 = vmul.f32 %v3585, 0.25
  %v3641 = vmul.f32 %v3635, 0.25
  %v3642 = vsel %vm1355, %v3640, -inf
  %3643 = vmax.xlane.f32.xlu0 %v3642
  %v3644 = vpop.xlane.xlu0 %3643
  %v3645 = vsel %vm1355, %v3641, -inf
  %3646 = vmax.xlane.f32.xlu0 %v3645
  %v3647 = vpop.xlane.xlu0 %3646
  %v3648 = vsub.f32 %v3640, %v3644
  %v3649 = vsub.f32 %v3641, %v3647
  %v3650 = vmul.f32 %v3648, 1.442695
  %v3651 = vpow.pop %v3650
  %v3652 = vmul.f32 %v3649, 1.442695
  %v3653 = vpow.pop %v3652
  %v3654 = vsel %vm1355, %v3651, 0.0
  %3655 = vadd.xlane.f32.xlu0 %v3654
  %v3656 = vpop.xlane.xlu0 %3655
  %v3657 = vsel %vm1355, %v3653, 0.0
  %3658 = vadd.xlane.f32.xlu0 %v3657
  %v3659 = vpop.xlane.xlu0 %3658
  %v3660 = vrcp.pop %v3656
  %v3661 = vrcp.pop %v3659
  %v3662 = vmul.f32 %v3651, %v3660
  %v3663 = vmul.f32 %v3653, %v3661
  %v3664 = vpack.c.bf16 %v3662, %v3662
  %v3665 = vpack.c.bf16 %v3663, %v3663
  %3666 = vrot.lane.b32.xlu0 %v3102, 96
  %v3667 = vpop.permute.xlu0 %3666
  %v3669 = vsel %vm1355, %v3664, 0
  %v3672 = vsel %vm622, %v3667, 0
  %3674 = vmatprep.subr.bf16.mxu0 0
  %3675 = vmatpush1.bf16.msra.mxu0 0
  %3676 = vmatprep.subr.bf16.mxu0 0
  %3677 = vmatpush1.bf16.msra.mxu0 0
  %3678 = vmatprep.subr.bf16.mxu0 0
  %3679 = vmatpush1.bf16.msra.mxu0 0
  %3680 = vmatprep.subr.bf16.mxu0 0
  %3681 = vmatpush1.bf16.msra.mxu0 0
  %3682 = vmatprep.subr.bf16.mxu0 0
  %3683 = vmatpush1.bf16.msra.mxu0 0
  %3684 = vmatprep.subr.bf16.mxu0 0
  %3685 = vmatpush1.bf16.msra.mxu0 0
  %3686 = vmatprep.subr.bf16.mxu0 0
  %3687 = vmatpush1.bf16.msra.mxu0 0
  %3688 = vmatprep.subr.bf16.mxu0 0
  %3689 = vmatpush1.bf16.msra.mxu0 %v3672
  %3690 = vmatprep.subr.bf16.mxu0 0
  %3691 = vmatpush2.bf16.msra.mxu0 0
  %3692 = vmatprep.subr.bf16.mxu0 0
  %3693 = vmatpush2.bf16.msra.mxu0 0
  %3694 = vmatprep.subr.bf16.mxu0 0
  %3695 = vmatpush2.bf16.msra.mxu0 0
  %3696 = vmatprep.subr.bf16.mxu0 0
  %3697 = vmatpush2.bf16.msra.mxu0 0
  %3698 = vmatprep.subr.bf16.mxu0 0
  %3699 = vmatpush2.bf16.msra.mxu0 0
  %3700 = vmatprep.subr.bf16.mxu0 0
  %3701 = vmatpush2.bf16.msra.mxu0 0
  %3702 = vmatprep.subr.bf16.mxu0 0
  %3703 = vmatpush2.bf16.msra.mxu0 0
  %3704 = vmatprep.subr.bf16.mxu0 0
  %3705 = vmatpush2.bf16.msra.mxu0 0
  %3706 = vmatprep.mubr.bf16.mxu0 0
  %3707 = vmatmul.mubr.bf16.gmra.mxu0 %v3669
  %v3708 = vpop.f32.mrf.mxu0
  %v3709 = vadd.f32 0.0, %v3708
  %v3710 = vpop.f32.mrf.mxu0
  %v3711 = vpop.f32.mrf.mxu0
  %v3712 = vpop.f32.mrf.mxu0
  %3713 = vdwg.mxu0
  %3714 = vrot.lane.b32.xlu0 %v3103, 96
  %v3715 = vpop.permute.xlu0 %3714
  %v3717 = vsel %vm1355, %v3665, 0
  %v3720 = vsel %vm622, %v3715, 0
  %3722 = vmatprep.subr.bf16.mxu0 0
  %3723 = vmatpush1.bf16.msra.mxu0 0
  %3724 = vmatprep.subr.bf16.mxu0 0
  %3725 = vmatpush1.bf16.msra.mxu0 0
  %3726 = vmatprep.subr.bf16.mxu0 0
  %3727 = vmatpush1.bf16.msra.mxu0 0
  %3728 = vmatprep.subr.bf16.mxu0 0
  %3729 = vmatpush1.bf16.msra.mxu0 0
  %3730 = vmatprep.subr.bf16.mxu0 0
  %3731 = vmatpush1.bf16.msra.mxu0 0
  %3732 = vmatprep.subr.bf16.mxu0 0
  %3733 = vmatpush1.bf16.msra.mxu0 0
  %3734 = vmatprep.subr.bf16.mxu0 0
  %3735 = vmatpush1.bf16.msra.mxu0 0
  %3736 = vmatprep.subr.bf16.mxu0 0
  %3737 = vmatpush1.bf16.msra.mxu0 %v3720
  %3738 = vmatprep.subr.bf16.mxu0 0
  %3739 = vmatpush2.bf16.msra.mxu0 0
  %3740 = vmatprep.subr.bf16.mxu0 0
  %3741 = vmatpush2.bf16.msra.mxu0 0
  %3742 = vmatprep.subr.bf16.mxu0 0
  %3743 = vmatpush2.bf16.msra.mxu0 0
  %3744 = vmatprep.subr.bf16.mxu0 0
  %3745 = vmatpush2.bf16.msra.mxu0 0
  %3746 = vmatprep.subr.bf16.mxu0 0
  %3747 = vmatpush2.bf16.msra.mxu0 0
  %3748 = vmatprep.subr.bf16.mxu0 0
  %3749 = vmatpush2.bf16.msra.mxu0 0
  %3750 = vmatprep.subr.bf16.mxu0 0
  %3751 = vmatpush2.bf16.msra.mxu0 0
  %3752 = vmatprep.subr.bf16.mxu0 0
  %3753 = vmatpush2.bf16.msra.mxu0 0
  %3754 = vmatprep.mubr.bf16.mxu0 0
  %3755 = vmatmul.mubr.bf16.gmra.mxu0 %v3717
  %v3756 = vpop.f32.mrf.mxu0
  %v3757 = vadd.f32 0.0, %v3756
  %v3758 = vpop.f32.mrf.mxu0
  %v3759 = vpop.f32.mrf.mxu0
  %v3760 = vpop.f32.mrf.mxu0
  %3761 = vdwg.mxu0
  %3762 = vrot.lane.b32.xlu0 %v3097, 80
  %v3763 = vpop.permute.xlu0 %3762
  %3764 = vrot.lane.b32.xlu0 %v3097, 16
  %v3765 = vpop.permute.xlu0 %3764
  %v3767 = vsel %vm1735, %v3763, 0
  %v3770 = vsel %vm1735, %v3765, 0
  %3772 = vmatprep.subr.bf16.mxu0 0
  %3773 = vmatpush1.bf16.xpose.msra.mxu0 0
  %3774 = vmatprep.subr.bf16.mxu0 0
  %3775 = vmatpush1.bf16.xpose.msra.mxu0 0
  %3776 = vmatprep.subr.bf16.mxu0 0
  %3777 = vmatpush1.bf16.xpose.msra.mxu0 0
  %3778 = vmatprep.subr.bf16.mxu0 0
  %3779 = vmatpush1.bf16.xpose.msra.mxu0 0
  %3780 = vmatprep.subr.bf16.mxu0 0
  %3781 = vmatpush1.bf16.xpose.msra.mxu0 0
  %3782 = vmatprep.subr.bf16.mxu0 0
  %3783 = vmatpush1.bf16.xpose.msra.mxu0 0
  %3784 = vmatprep.subr.bf16.mxu0 0
  %3785 = vmatpush1.bf16.xpose.msra.mxu0 0
  %3786 = vmatprep.subr.bf16.mxu0 0
  %3787 = vmatpush1.bf16.xpose.msra.mxu0 %v3770
  %3788 = vmatprep.subr.bf16.mxu0 0
  %3789 = vmatpush2.bf16.xpose.msra.mxu0 0
  %3790 = vmatprep.subr.bf16.mxu0 0
  %3791 = vmatpush2.bf16.xpose.msra.mxu0 0
  %3792 = vmatprep.subr.bf16.mxu0 0
  %3793 = vmatpush2.bf16.xpose.msra.mxu0 0
  %3794 = vmatprep.subr.bf16.mxu0 0
  %3795 = vmatpush2.bf16.xpose.msra.mxu0 0
  %3796 = vmatprep.subr.bf16.mxu0 0
  %3797 = vmatpush2.bf16.xpose.msra.mxu0 0
  %3798 = vmatprep.subr.bf16.mxu0 0
  %3799 = vmatpush2.bf16.xpose.msra.mxu0 0
  %3800 = vmatprep.subr.bf16.mxu0 0
  %3801 = vmatpush2.bf16.xpose.msra.mxu0 0
  %3802 = vmatprep.subr.bf16.mxu0 0
  %3803 = vmatpush2.bf16.xpose.msra.mxu0 0
  %3804 = vmatprep.mubr.bf16.mxu0 0
  %3805 = vmatmul.mubr.bf16.gmra.mxu0 %v3767
  %v3806 = vpop.f32.mrf.mxu0
  %v3807 = vadd.f32 0.0, %v3806
  %v3808 = vpop.f32.mrf.mxu0
  %v3809 = vpop.f32.mrf.mxu0
  %v3810 = vpop.f32.mrf.mxu0
  %3811 = vdwg.mxu0
  %3812 = vrot.lane.b32.xlu0 %v3098, 80
  %v3813 = vpop.permute.xlu0 %3812
  %3814 = vrot.lane.b32.xlu0 %v3098, 16
  %v3815 = vpop.permute.xlu0 %3814
  %v3817 = vsel %vm1735, %v3813, 0
  %v3820 = vsel %vm1735, %v3815, 0
  %3822 = vmatprep.subr.bf16.mxu0 0
  %3823 = vmatpush1.bf16.xpose.msra.mxu0 0
  %3824 = vmatprep.subr.bf16.mxu0 0
  %3825 = vmatpush1.bf16.xpose.msra.mxu0 0
  %3826 = vmatprep.subr.bf16.mxu0 0
  %3827 = vmatpush1.bf16.xpose.msra.mxu0 0
  %3828 = vmatprep.subr.bf16.mxu0 0
  %3829 = vmatpush1.bf16.xpose.msra.mxu0 0
  %3830 = vmatprep.subr.bf16.mxu0 0
  %3831 = vmatpush1.bf16.xpose.msra.mxu0 0
  %3832 = vmatprep.subr.bf16.mxu0 0
  %3833 = vmatpush1.bf16.xpose.msra.mxu0 0
  %3834 = vmatprep.subr.bf16.mxu0 0
  %3835 = vmatpush1.bf16.xpose.msra.mxu0 0
  %3836 = vmatprep.subr.bf16.mxu0 0
  %3837 = vmatpush1.bf16.xpose.msra.mxu0 %v3820
  %3838 = vmatprep.subr.bf16.mxu0 0
  %3839 = vmatpush2.bf16.xpose.msra.mxu0 0
  %3840 = vmatprep.subr.bf16.mxu0 0
  %3841 = vmatpush2.bf16.xpose.msra.mxu0 0
  %3842 = vmatprep.subr.bf16.mxu0 0
  %3843 = vmatpush2.bf16.xpose.msra.mxu0 0
  %3844 = vmatprep.subr.bf16.mxu0 0
  %3845 = vmatpush2.bf16.xpose.msra.mxu0 0
  %3846 = vmatprep.subr.bf16.mxu0 0
  %3847 = vmatpush2.bf16.xpose.msra.mxu0 0
  %3848 = vmatprep.subr.bf16.mxu0 0
  %3849 = vmatpush2.bf16.xpose.msra.mxu0 0
  %3850 = vmatprep.subr.bf16.mxu0 0
  %3851 = vmatpush2.bf16.xpose.msra.mxu0 0
  %3852 = vmatprep.subr.bf16.mxu0 0
  %3853 = vmatpush2.bf16.xpose.msra.mxu0 0
  %3854 = vmatprep.mubr.bf16.mxu0 0
  %3855 = vmatmul.mubr.bf16.gmra.mxu0 %v3817
  %v3856 = vpop.f32.mrf.mxu0
  %v3857 = vadd.f32 0.0, %v3856
  %v3858 = vpop.f32.mrf.mxu0
  %v3859 = vpop.f32.mrf.mxu0
  %v3860 = vpop.f32.mrf.mxu0
  %3861 = vdwg.mxu0
  %v3862 = vmul.f32 %v3807, 0.25
  %v3863 = vmul.f32 %v3857, 0.25
  %v3864 = vsel %vm1355, %v3862, -inf
  %3865 = vmax.xlane.f32.xlu0 %v3864
  %v3866 = vpop.xlane.xlu0 %3865
  %v3867 = vsel %vm1355, %v3863, -inf
  %3868 = vmax.xlane.f32.xlu0 %v3867
  %v3869 = vpop.xlane.xlu0 %3868
  %v3870 = vsub.f32 %v3862, %v3866
  %v3871 = vsub.f32 %v3863, %v3869
  %v3872 = vmul.f32 %v3870, 1.442695
  %v3873 = vpow.pop %v3872
  %v3874 = vmul.f32 %v3871, 1.442695
  %v3875 = vpow.pop %v3874
  %v3876 = vsel %vm1355, %v3873, 0.0
  %3877 = vadd.xlane.f32.xlu0 %v3876
  %v3878 = vpop.xlane.xlu0 %3877
  %v3879 = vsel %vm1355, %v3875, 0.0
  %3880 = vadd.xlane.f32.xlu0 %v3879
  %v3881 = vpop.xlane.xlu0 %3880
  %v3882 = vrcp.pop %v3878
  %v3883 = vrcp.pop %v3881
  %v3884 = vmul.f32 %v3873, %v3882
  %v3885 = vmul.f32 %v3875, %v3883
  %v3886 = vpack.c.bf16 %v3884, %v3884
  %v3887 = vpack.c.bf16 %v3885, %v3885
  %3888 = vrot.lane.b32.xlu0 %v3102, 80
  %v3889 = vpop.permute.xlu0 %3888
  %v3891 = vsel %vm1355, %v3886, 0
  %v3894 = vsel %vm622, %v3889, 0
  %3896 = vmatprep.subr.bf16.mxu0 0
  %3897 = vmatpush1.bf16.msra.mxu0 0
  %3898 = vmatprep.subr.bf16.mxu0 0
  %3899 = vmatpush1.bf16.msra.mxu0 0
  %3900 = vmatprep.subr.bf16.mxu0 0
  %3901 = vmatpush1.bf16.msra.mxu0 0
  %3902 = vmatprep.subr.bf16.mxu0 0
  %3903 = vmatpush1.bf16.msra.mxu0 0
  %3904 = vmatprep.subr.bf16.mxu0 0
  %3905 = vmatpush1.bf16.msra.mxu0 0
  %3906 = vmatprep.subr.bf16.mxu0 0
  %3907 = vmatpush1.bf16.msra.mxu0 0
  %3908 = vmatprep.subr.bf16.mxu0 0
  %3909 = vmatpush1.bf16.msra.mxu0 0
  %3910 = vmatprep.subr.bf16.mxu0 0
  %3911 = vmatpush1.bf16.msra.mxu0 %v3894
  %3912 = vmatprep.subr.bf16.mxu0 0
  %3913 = vmatpush2.bf16.msra.mxu0 0
  %3914 = vmatprep.subr.bf16.mxu0 0
  %3915 = vmatpush2.bf16.msra.mxu0 0
  %3916 = vmatprep.subr.bf16.mxu0 0
  %3917 = vmatpush2.bf16.msra.mxu0 0
  %3918 = vmatprep.subr.bf16.mxu0 0
  %3919 = vmatpush2.bf16.msra.mxu0 0
  %3920 = vmatprep.subr.bf16.mxu0 0
  %3921 = vmatpush2.bf16.msra.mxu0 0
  %3922 = vmatprep.subr.bf16.mxu0 0
  %3923 = vmatpush2.bf16.msra.mxu0 0
  %3924 = vmatprep.subr.bf16.mxu0 0
  %3925 = vmatpush2.bf16.msra.mxu0 0
  %3926 = vmatprep.subr.bf16.mxu0 0
  %3927 = vmatpush2.bf16.msra.mxu0 0
  %3928 = vmatprep.mubr.bf16.mxu0 0
  %3929 = vmatmul.mubr.bf16.gmra.mxu0 %v3891
  %v3930 = vpop.f32.mrf.mxu0
  %v3931 = vadd.f32 0.0, %v3930
  %v3932 = vpop.f32.mrf.mxu0
  %v3933 = vpop.f32.mrf.mxu0
  %v3934 = vpop.f32.mrf.mxu0
  %3935 = vdwg.mxu0
  %3936 = vrot.lane.b32.xlu0 %v3103, 80
  %v3937 = vpop.permute.xlu0 %3936
  %v3939 = vsel %vm1355, %v3887, 0
  %v3942 = vsel %vm622, %v3937, 0
  %3944 = vmatprep.subr.bf16.mxu0 0
  %3945 = vmatpush1.bf16.msra.mxu0 0
  %3946 = vmatprep.subr.bf16.mxu0 0
  %3947 = vmatpush1.bf16.msra.mxu0 0
  %3948 = vmatprep.subr.bf16.mxu0 0
  %3949 = vmatpush1.bf16.msra.mxu0 0
  %3950 = vmatprep.subr.bf16.mxu0 0
  %3951 = vmatpush1.bf16.msra.mxu0 0
  %3952 = vmatprep.subr.bf16.mxu0 0
  %3953 = vmatpush1.bf16.msra.mxu0 0
  %3954 = vmatprep.subr.bf16.mxu0 0
  %3955 = vmatpush1.bf16.msra.mxu0 0
  %3956 = vmatprep.subr.bf16.mxu0 0
  %3957 = vmatpush1.bf16.msra.mxu0 0
  %3958 = vmatprep.subr.bf16.mxu0 0
  %3959 = vmatpush1.bf16.msra.mxu0 %v3942
  %3960 = vmatprep.subr.bf16.mxu0 0
  %3961 = vmatpush2.bf16.msra.mxu0 0
  %3962 = vmatprep.subr.bf16.mxu0 0
  %3963 = vmatpush2.bf16.msra.mxu0 0
  %3964 = vmatprep.subr.bf16.mxu0 0
  %3965 = vmatpush2.bf16.msra.mxu0 0
  %3966 = vmatprep.subr.bf16.mxu0 0
  %3967 = vmatpush2.bf16.msra.mxu0 0
  %3968 = vmatprep.subr.bf16.mxu0 0
  %3969 = vmatpush2.bf16.msra.mxu0 0
  %3970 = vmatprep.subr.bf16.mxu0 0
  %3971 = vmatpush2.bf16.msra.mxu0 0
  %3972 = vmatprep.subr.bf16.mxu0 0
  %3973 = vmatpush2.bf16.msra.mxu0 0
  %3974 = vmatprep.subr.bf16.mxu0 0
  %3975 = vmatpush2.bf16.msra.mxu0 0
  %3976 = vmatprep.mubr.bf16.mxu0 0
  %3977 = vmatmul.mubr.bf16.gmra.mxu0 %v3939
  %v3978 = vpop.f32.mrf.mxu0
  %v3979 = vadd.f32 0.0, %v3978
  %v3980 = vpop.f32.mrf.mxu0
  %v3981 = vpop.f32.mrf.mxu0
  %v3982 = vpop.f32.mrf.mxu0
  %3983 = vdwg.mxu0
  %3986 = vrot.lane.b32.xlu0 %v3487, 16
  %v3987 = vpop.permute.xlu0 %3986
  %3988 = vrot.lane.b32.xlu0 %v3535, 16
  %v3989 = vpop.permute.xlu0 %3988
  %3994 = vrot.lane.b32.xlu0 %v3709, 32
  %v3995 = vpop.permute.xlu0 %3994
  %3996 = vrot.lane.b32.xlu0 %v3757, 32
  %v3997 = vpop.permute.xlu0 %3996
  %4002 = vrot.lane.b32.xlu0 %v3931, 48
  %v4003 = vpop.permute.xlu0 %4002
  %4004 = vrot.lane.b32.xlu0 %v3979, 48
  %v4005 = vpop.permute.xlu0 %4004
  %v4008 = vsel %vm1735, %v3267, %v3987
  %v4009 = vsel %vm1735, %v3313, %v3989
  %v4010 = vsel %vm2640, %v4008, %v3995
  %v4011 = vsel %vm2640, %v4009, %v3997
  %v4012 = vsel %vm2643, %v4010, %v4003
  %v4013 = vsel %vm2643, %v4011, %v4005
  %s4014 = scalar_lea.vmem %s9, 32
  %v4015 = vld [vmem:[%s4014] sm:$0xf]
  %v4016 = vld [vmem:[%s4014 + $0x4] sm:$0xf]
  %v4017 = vld [vmem:[%s4014 + $0x8] sm:$0xf]
  %v4018 = vld [vmem:[%s4014 + $0xc] sm:$0xf]
  %v4019 = vld [vmem:[%s4014 + $0x10] sm:$0xf]
  %v4020 = vld [vmem:[%s4014 + $0x14] sm:$0xf]
  %v4021 = vld [vmem:[%s4014 + $0x18] sm:$0xf]
  %v4022 = vld [vmem:[%s4014 + $0x1c] sm:$0xf]
  %v4023 = vpack.c.bf16 %v4013, %v4012
  %v4032 = vunpack.c.l.b16 %v4015
  %v4033 = vunpack.c.l.b16 %v4016
  %v4034 = vunpack.c.l.b16 %v4017
  %v4035 = vunpack.c.l.b16 %v4018
  %v4036 = vunpack.c.l.b16 %v4019
  %v4037 = vunpack.c.l.b16 %v4020
  %v4038 = vunpack.c.l.b16 %v4021
  %v4039 = vunpack.c.l.b16 %v4022
  %v4040 = vpack.c.b16 %v4033, %v4032
  %v4041 = vpack.c.b16 %v4035, %v4034
  %v4042 = vpack.c.b16 %v4037, %v4036
  %v4043 = vpack.c.b16 %v4039, %v4038
  %v4049 = vsel %vm1020, %v4023, 0
  %4051 = vmatprep.subr.bf16.mxu0 0
  %4052 = vmatpush1.bf16.msra.mxu0 0
  %4053 = vmatprep.subr.bf16.mxu0 0
  %4054 = vmatpush1.bf16.msra.mxu0 0
  %4055 = vmatprep.subr.bf16.mxu0 0
  %4056 = vmatpush1.bf16.msra.mxu0 0
  %4057 = vmatprep.subr.bf16.mxu0 0
  %4058 = vmatpush1.bf16.msra.mxu0 0
  %4059 = vmatprep.subr.bf16.mxu0 0
  %4060 = vmatpush1.bf16.msra.mxu0 %v4043
  %4061 = vmatprep.subr.bf16.mxu0 0
  %4062 = vmatpush1.bf16.msra.mxu0 %v4042
  %4063 = vmatprep.subr.bf16.mxu0 0
  %4064 = vmatpush1.bf16.msra.mxu0 %v4041
  %4065 = vmatprep.subr.bf16.mxu0 0
  %4066 = vmatpush1.bf16.msra.mxu0 %v4040
  %4067 = vmatprep.subr.bf16.mxu0 0
  %4068 = vmatpush2.bf16.msra.mxu0 0
  %4069 = vmatprep.subr.bf16.mxu0 0
  %4070 = vmatpush2.bf16.msra.mxu0 0
  %4071 = vmatprep.subr.bf16.mxu0 0
  %4072 = vmatpush2.bf16.msra.mxu0 0
  %4073 = vmatprep.subr.bf16.mxu0 0
  %4074 = vmatpush2.bf16.msra.mxu0 0
  %4075 = vmatprep.subr.bf16.mxu0 0
  %4076 = vmatpush2.bf16.msra.mxu0 0
  %4077 = vmatprep.subr.bf16.mxu0 0
  %4078 = vmatpush2.bf16.msra.mxu0 0
  %4079 = vmatprep.subr.bf16.mxu0 0
  %4080 = vmatpush2.bf16.msra.mxu0 0
  %4081 = vmatprep.subr.bf16.mxu0 0
  %4082 = vmatpush2.bf16.msra.mxu0 0
  %4083 = vmatprep.mubr.bf16.mxu0 0
  %4084 = vmatmul.mubr.bf16.gmra.mxu0 %v4049
  %v4085 = vpop.f32.mrf.mxu0
  %v4086 = vadd.f32 0.0, %v4085
  %v4087 = vpop.f32.mrf.mxu0
  %v4088 = vpop.f32.mrf.mxu0
  %v4089 = vadd.f32 0.0, %v4088
  %v4090 = vpop.f32.mrf.mxu0
  %4091 = vdwg.mxu0
  %v4092 = vadd.f32 %v2944, %v4086
  %v4093 = vadd.f32 %v2945, %v4089
  %v4094 = vadd.f32 %v4092, %v2950
  %v4095 = vadd.f32 %v4093, %v2950
  %v4096 = vsel %vm1020, %v4094, 0.0
  %4097 = vadd.xlane.f32.xlu0 %v4096
  %v4098 = vpop.xlane.xlu0 %4097
  %v4099 = vsel %vm1020, %v4095, 0.0
  %4100 = vadd.xlane.f32.xlu0 %v4099
  %v4101 = vpop.xlane.xlu0 %4100
  %v4102 = vmul.f32 %v4098, %v1590
  %v4103 = vmul.f32 %v4101, %v1590
  %v4104 = vsub.f32 %v4094, %v4102
  %v4105 = vsub.f32 %v4095, %v4103
  %v4106 = vmul.f32 %v4104, %v4104
  %v4107 = vmul.f32 %v4105, %v4105
  %v4108 = vsel %vm1020, %v4106, 0.0
  %4109 = vadd.xlane.f32.xlu0 %v4108
  %v4110 = vpop.xlane.xlu0 %4109
  %v4111 = vsel %vm1020, %v4107, 0.0
  %4112 = vadd.xlane.f32.xlu0 %v4111
  %v4113 = vpop.xlane.xlu0 %4112
  %v4114 = vmul.f32 %v4110, %v1590
  %v4115 = vmul.f32 %v4113, %v1590
  %v4116 = vadd.f32 %v4114, 1e-05
  %v4117 = vadd.f32 %v4115, 1e-05
  %v4118 = vrsqrt.pop %v4116
  %v4119 = vrsqrt.pop %v4117
  %v4120 = vmul.f32 %v4104, %v4118
  %v4121 = vmul.f32 %v4105, %v4119
  %v4122 = vmul.f32 %v4120, %v2951
  %v4123 = vmul.f32 %v4121, %v2951
  %v4124 = vadd.f32 %v4122, %v2952
  %v4125 = vadd.f32 %v4123, %v2952
  %s4126 = scalar_lea.vmem %s10, 32
  %v4127 = vld [vmem:[%s4126] sm:$0xf]
  %v4128 = vld [vmem:[%s4126 + $0x4] sm:$0xf]
  %v4129 = vld [vmem:[%s4126 + $0x8] sm:$0xf]
  %v4130 = vld [vmem:[%s4126 + $0xc] sm:$0xf]
  %v4131 = vld [vmem:[%s4126 + $0x10] sm:$0xf]
  %v4132 = vld [vmem:[%s4126 + $0x14] sm:$0xf]
  %v4133 = vld [vmem:[%s4126 + $0x18] sm:$0xf]
  %v4134 = vld [vmem:[%s4126 + $0x1c] sm:$0xf]
  %v4135 = vpack.c.bf16 %v4125, %v4124
  %v4144 = vunpack.c.l.b16 %v4127
  %v4145 = vunpack.c.l.b16 %v4128
  %v4146 = vunpack.c.l.b16 %v4129
  %v4147 = vunpack.c.l.b16 %v4130
  %v4148 = vunpack.c.l.b16 %v4131
  %v4149 = vunpack.c.l.b16 %v4132
  %v4150 = vunpack.c.l.b16 %v4133
  %v4151 = vunpack.c.l.b16 %v4134
  %v4152 = vpack.c.b16 %v4145, %v4144
  %v4153 = vpack.c.b16 %v4147, %v4146
  %v4154 = vpack.c.b16 %v4149, %v4148
  %v4155 = vpack.c.b16 %v4151, %v4150
  %v4161 = vsel %vm1020, %v4135, 0
  %4163 = vmatprep.subr.bf16.mxu0 0
  %4164 = vmatpush1.bf16.msra.mxu0 0
  %4165 = vmatprep.subr.bf16.mxu0 0
  %4166 = vmatpush1.bf16.msra.mxu0 0
  %4167 = vmatprep.subr.bf16.mxu0 0
  %4168 = vmatpush1.bf16.msra.mxu0 0
  %4169 = vmatprep.subr.bf16.mxu0 0
  %4170 = vmatpush1.bf16.msra.mxu0 0
  %4171 = vmatprep.subr.bf16.mxu0 0
  %4172 = vmatpush1.bf16.msra.mxu0 %v4155
  %4173 = vmatprep.subr.bf16.mxu0 0
  %4174 = vmatpush1.bf16.msra.mxu0 %v4154
  %4175 = vmatprep.subr.bf16.mxu0 0
  %4176 = vmatpush1.bf16.msra.mxu0 %v4153
  %4177 = vmatprep.subr.bf16.mxu0 0
  %4178 = vmatpush1.bf16.msra.mxu0 %v4152
  %4179 = vmatprep.subr.bf16.mxu0 0
  %4180 = vmatpush2.bf16.msra.mxu0 0
  %4181 = vmatprep.subr.bf16.mxu0 0
  %4182 = vmatpush2.bf16.msra.mxu0 0
  %4183 = vmatprep.subr.bf16.mxu0 0
  %4184 = vmatpush2.bf16.msra.mxu0 0
  %4185 = vmatprep.subr.bf16.mxu0 0
  %4186 = vmatpush2.bf16.msra.mxu0 0
  %4187 = vmatprep.subr.bf16.mxu0 0
  %4188 = vmatpush2.bf16.msra.mxu0 0
  %4189 = vmatprep.subr.bf16.mxu0 0
  %4190 = vmatpush2.bf16.msra.mxu0 0
  %4191 = vmatprep.subr.bf16.mxu0 0
  %4192 = vmatpush2.bf16.msra.mxu0 0
  %4193 = vmatprep.subr.bf16.mxu0 0
  %4194 = vmatpush2.bf16.msra.mxu0 0
  %4195 = vmatprep.mubr.bf16.mxu0 0
  %4196 = vmatmul.mubr.bf16.gmra.mxu0 %v4161
  %v4197 = vpop.f32.mrf.mxu0
  %v4198 = vadd.f32 %v2953, %v4197
  %v4199 = vpop.f32.mrf.mxu0
  %v4200 = vpop.f32.mrf.mxu0
  %v4201 = vadd.f32 %v2953, %v4200
  %v4202 = vpop.f32.mrf.mxu0
  %4203 = vdwg.mxu0
  %v4204 = vmax.f32 %v4198, 0.0
  %v4205 = vmax.f32 %v4201, 0.0
  %s4206 = scalar_lea.vmem %s11, 64
  %v4207 = vld [vmem:[%s4206] sm:$0xf]
  %v4208 = vld [vmem:[%s4206 + $0x4] sm:$0xf]
  %v4209 = vld [vmem:[%s4206 + $0x8] sm:$0xf]
  %v4210 = vld [vmem:[%s4206 + $0xc] sm:$0xf]
  %v4211 = vld [vmem:[%s4206 + $0x10] sm:$0xf]
  %v4212 = vld [vmem:[%s4206 + $0x14] sm:$0xf]
  %v4213 = vld [vmem:[%s4206 + $0x18] sm:$0xf]
  %v4214 = vld [vmem:[%s4206 + $0x1c] sm:$0xf]
  %v4215 = vld [vmem:[%s4206 + $0x20] sm:$0xf]
  %v4216 = vld [vmem:[%s4206 + $0x24] sm:$0xf]
  %v4217 = vld [vmem:[%s4206 + $0x28] sm:$0xf]
  %v4218 = vld [vmem:[%s4206 + $0x2c] sm:$0xf]
  %v4219 = vld [vmem:[%s4206 + $0x30] sm:$0xf]
  %v4220 = vld [vmem:[%s4206 + $0x34] sm:$0xf]
  %v4221 = vld [vmem:[%s4206 + $0x38] sm:$0xf]
  %v4222 = vld [vmem:[%s4206 + $0x3c] sm:$0xf]
  %v4223 = vpack.c.bf16 %v4205, %v4204
  %v4240 = vunpack.c.l.b16 %v4207
  %v4241 = vunpack.c.l.b16 %v4208
  %v4242 = vunpack.c.l.b16 %v4209
  %v4243 = vunpack.c.l.b16 %v4210
  %v4244 = vunpack.c.l.b16 %v4211
  %v4245 = vunpack.c.l.b16 %v4212
  %v4246 = vunpack.c.l.b16 %v4213
  %v4247 = vunpack.c.l.b16 %v4214
  %v4248 = vunpack.c.l.b16 %v4215
  %v4249 = vunpack.c.l.b16 %v4216
  %v4250 = vunpack.c.l.b16 %v4217
  %v4251 = vunpack.c.l.b16 %v4218
  %v4252 = vunpack.c.l.b16 %v4219
  %v4253 = vunpack.c.l.b16 %v4220
  %v4254 = vunpack.c.l.b16 %v4221
  %v4255 = vunpack.c.l.b16 %v4222
  %v4256 = vpack.c.b16 %v4241, %v4240
  %v4257 = vpack.c.b16 %v4243, %v4242
  %v4258 = vpack.c.b16 %v4245, %v4244
  %v4259 = vpack.c.b16 %v4247, %v4246
  %v4260 = vpack.c.b16 %v4249, %v4248
  %v4261 = vpack.c.b16 %v4251, %v4250
  %v4262 = vpack.c.b16 %v4253, %v4252
  %v4263 = vpack.c.b16 %v4255, %v4254
  %4272 = vmatprep.subr.bf16.mxu0 0
  %4273 = vmatpush1.bf16.msra.mxu0 %v4263
  %4274 = vmatprep.subr.bf16.mxu0 0
  %4275 = vmatpush1.bf16.msra.mxu0 %v4262
  %4276 = vmatprep.subr.bf16.mxu0 0
  %4277 = vmatpush1.bf16.msra.mxu0 %v4261
  %4278 = vmatprep.subr.bf16.mxu0 0
  %4279 = vmatpush1.bf16.msra.mxu0 %v4260
  %4280 = vmatprep.subr.bf16.mxu0 0
  %4281 = vmatpush1.bf16.msra.mxu0 %v4259
  %4282 = vmatprep.subr.bf16.mxu0 0
  %4283 = vmatpush1.bf16.msra.mxu0 %v4258
  %4284 = vmatprep.subr.bf16.mxu0 0
  %4285 = vmatpush1.bf16.msra.mxu0 %v4257
  %4286 = vmatprep.subr.bf16.mxu0 0
  %4287 = vmatpush1.bf16.msra.mxu0 %v4256
  %4288 = vmatprep.subr.bf16.mxu0 0
  %4289 = vmatpush2.bf16.msra.mxu0 0
  %4290 = vmatprep.subr.bf16.mxu0 0
  %4291 = vmatpush2.bf16.msra.mxu0 0
  %4292 = vmatprep.subr.bf16.mxu0 0
  %4293 = vmatpush2.bf16.msra.mxu0 0
  %4294 = vmatprep.subr.bf16.mxu0 0
  %4295 = vmatpush2.bf16.msra.mxu0 0
  %4296 = vmatprep.subr.bf16.mxu0 0
  %4297 = vmatpush2.bf16.msra.mxu0 0
  %4298 = vmatprep.subr.bf16.mxu0 0
  %4299 = vmatpush2.bf16.msra.mxu0 0
  %4300 = vmatprep.subr.bf16.mxu0 0
  %4301 = vmatpush2.bf16.msra.mxu0 0
  %4302 = vmatprep.subr.bf16.mxu0 0
  %4303 = vmatpush2.bf16.msra.mxu0 0
  %4304 = vmatprep.mubr.bf16.mxu0 0
  %4305 = vmatmul.mubr.bf16.gmra.mxu0 %v4223
  %v4306 = vpop.f32.mrf.mxu0
  %v4307 = vadd.f32 0.0, %v4306
  %v4308 = vpop.f32.mrf.mxu0
  %v4309 = vpop.f32.mrf.mxu0
  %v4310 = vadd.f32 0.0, %v4309
  %v4311 = vpop.f32.mrf.mxu0
  %4312 = vdwg.mxu0
  %v4313 = vadd.f32 %v4094, %v4307
  %v4314 = vadd.f32 %v4095, %v4310
  %v4315 = vadd.f32 %v4313, %v2954
  %v4316 = vadd.f32 %v4314, %v2954
  %v4317 = vld [vmem:[%s12] sm:$0xf]
  %v4318 = vld [vmem:[%s12 + $0x4] sm:$0xf]
  %v4319 = vld [vmem:[%s12 + $0x8] sm:$0xf]
  %v4320 = vld [vmem:[%s12 + $0xc] sm:$0xf]
  %v4321 = vld [vmem:[%s12 + $0x10] sm:$0xf]
  %v4322 = vld [vmem:[%s12 + $0x14] sm:$0xf]
  %v4323 = vld [vmem:[%s12 + $0x18] sm:$0xf]
  %v4324 = vld [vmem:[%s12 + $0x1c] sm:$0xf]
  %v4325 = vpack.c.bf16 %v4316, %v4315
  %v4326 = vld [vmem:[%s13 + $0x34] ss:$0 sm:$0xff]
  %v4335 = vunpack.c.l.b16 %v4317
  %v4336 = vunpack.c.l.b16 %v4318
  %v4337 = vunpack.c.l.b16 %v4319
  %v4338 = vunpack.c.l.b16 %v4320
  %v4339 = vunpack.c.l.b16 %v4321
  %v4340 = vunpack.c.l.b16 %v4322
  %v4341 = vunpack.c.l.b16 %v4323
  %v4342 = vunpack.c.l.b16 %v4324
  %v4343 = vpack.c.b16 %v4336, %v4335
  %v4344 = vpack.c.b16 %v4338, %v4337
  %v4345 = vpack.c.b16 %v4340, %v4339
  %v4346 = vpack.c.b16 %v4342, %v4341
  %v4352 = vsel %vm1020, %v4325, 0
  %4354 = vmatprep.subr.bf16.mxu0 0
  %4355 = vmatpush1.bf16.msra.mxu0 0
  %4356 = vmatprep.subr.bf16.mxu0 0
  %4357 = vmatpush1.bf16.msra.mxu0 0
  %4358 = vmatprep.subr.bf16.mxu0 0
  %4359 = vmatpush1.bf16.msra.mxu0 0
  %4360 = vmatprep.subr.bf16.mxu0 0
  %4361 = vmatpush1.bf16.msra.mxu0 0
  %4362 = vmatprep.subr.bf16.mxu0 0
  %4363 = vmatpush1.bf16.msra.mxu0 %v4346
  %4364 = vmatprep.subr.bf16.mxu0 0
  %4365 = vmatpush1.bf16.msra.mxu0 %v4345
  %4366 = vmatprep.subr.bf16.mxu0 0
  %4367 = vmatpush1.bf16.msra.mxu0 %v4344
  %4368 = vmatprep.subr.bf16.mxu0 0
  %4369 = vmatpush1.bf16.msra.mxu0 %v4343
  %4370 = vmatprep.subr.bf16.mxu0 0
  %4371 = vmatpush2.bf16.msra.mxu0 0
  %4372 = vmatprep.subr.bf16.mxu0 0
  %4373 = vmatpush2.bf16.msra.mxu0 0
  %4374 = vmatprep.subr.bf16.mxu0 0
  %4375 = vmatpush2.bf16.msra.mxu0 0
  %4376 = vmatprep.subr.bf16.mxu0 0
  %4377 = vmatpush2.bf16.msra.mxu0 0
  %4378 = vmatprep.subr.bf16.mxu0 0
  %4379 = vmatpush2.bf16.msra.mxu0 0
  %4380 = vmatprep.subr.bf16.mxu0 0
  %4381 = vmatpush2.bf16.msra.mxu0 0
  %4382 = vmatprep.subr.bf16.mxu0 0
  %4383 = vmatpush2.bf16.msra.mxu0 0
  %4384 = vmatprep.subr.bf16.mxu0 0
  %4385 = vmatpush2.bf16.msra.mxu0 0
  %4386 = vmatprep.mubr.bf16.mxu0 0
  %4387 = vmatmul.mubr.bf16.gmra.mxu0 %v4352
  %v4388 = vpop.f32.mrf.mxu0
  %v4389 = vadd.f32 %v4326, %v4388
  %v4390 = vpop.f32.mrf.mxu0
  %v4391 = vpop.f32.mrf.mxu0
  %v4392 = vadd.f32 %v4326, %v4391
  %v4393 = vpop.f32.mrf.mxu0
  %4394 = vdwg.mxu0
  %4395 = vst [vmem:[%s14] sm:$0xff] %v4389
  %4396 = vst [vmem:[%s14 + $0x8] sm:$0xff] %v4392
  // Predicated region
  $region58: #{helix_forward.1} parent=0 // pred_check
    _
  $region59: #{helix_forward.1} parent=0 // pred_check_branch
    %4398 = sbr.rel (0) target = $region61
  $region60: #{helix_forward.1} parent=0 // pred_region
    _
  $region61: #{helix_forward.1} parent=0 // pred_fallthru
    _
  // Predicated region
  $region62: #{helix_forward.1} parent=0 // pred_check
    _
  $region63: #{helix_forward.1} parent=0 // pred_check_branch
    %4400 = sbr.rel (0) target = $region65
  $region64: #{helix_forward.1} parent=0 // pred_region
    _
  $region65: #{helix_forward.1} parent=0 // pred_fallthru
    _

</llo_original>
